<compile_context>
chip_gen: v7x
topology: tpu7x:2x2x1
jax: 0.10.0
libtpu: 0.0.40
codegen_flags: <defaults>
</compile_context>

<pallas_src>
import functools
import math

import jax
import jax.numpy as jnp
from jax import lax
from jax.experimental import pallas as pl
from jax.experimental.pallas import tpu as pltpu

LN_EPS = 1e-5                   # torch.nn.LayerNorm default
COMPUTE_DTYPE = jnp.bfloat16    # MXU input dtype (accumulation stays f32)
ACT_DTYPE = jnp.bfloat16        # inter-layer activation dtype


# --------------------------- generation-aware config ---------------------------

_TPU_CFG = None


def _tpu_config():
    """Tile targets + VMEM budget per TPU generation (v5e / v6e / v7x-or-unknown)."""
    global _TPU_CFG
    if _TPU_CFG is None:
        kind = ""
        try:
            kind = jax.devices()[0].device_kind.lower()
        except Exception:
            kind = ""
        if "v6" in kind:
            # v6e: 128 MiB VMEM, 256x256 MXU -> big tiles, tk/tn >= 256.
            _TPU_CFG = {"row": 512, "lane": 1024, "vmem_cap": 128 << 20}
        elif "v5 lite" in kind or "v5e" in kind or "v5lite" in kind:
            # v5e: 128x128 MXU, 1 vst slot -> modest lane-dense tiles.
            _TPU_CFG = {"row": 256, "lane": 256, "vmem_cap": 128 << 20}
        else:
            # v7x (64 MiB VMEM, 256x256 MXU) or unknown: conservative 256-class tiles.
            _TPU_CFG = {"row": 256, "lane": 512, "vmem_cap": 64 << 20}
    return _TPU_CFG


def _mosaic_params(semantics, vmem_need):
    cfg = _tpu_config()
    limit = int(min(max(int(vmem_need), 32 << 20), cfg["vmem_cap"]))
    return pltpu.CompilerParams(dimension_semantics=semantics,
                                vmem_limit_bytes=limit)


# ------------------------------ tile helpers ---------------------------------

def _pick_row_tile(m, target):
    """Row (sublane) tile: <= target, divides m, multiple of 8; full m if small."""
    if m <= target:
        return m
    for t in (target, 512, 256, 128, 64, 32, 16, 8):
        if t <= target and m % t == 0:
            return t
    return m


def _pick_lane_tile(n, target):
    """Lane tile (K or N): multiple of 128 (or full dim), <= target."""
    if n <= 128:
        return n
    for t in (target, 1024, 512, 256, 128):
        if t <= target and n % t == 0:
            return t
    return n


def _linear_vmem_need(tm, tn, tk, has_bias, fuse_ln, out_bytes):
    """Estimated VMEM footprint (double-buffered blocks + f32 accumulator)."""
    need = 2 * (tm * tk * 2)            # x tile (bf16, double buffered)
    need += 2 * (tk * tn * 2)           # w tile
    need += 2 * (tm * tn * out_bytes)   # out tile
    need += tm * tn * 4                 # f32 accumulator scratch
    if has_bias:
        need += 2 * tn * 4
    if fuse_ln:
        need += 2 * (tm * tn * 2)       # residual tile (bf16)
        need += 4 * tn * 4              # gamma / beta
    return int(need * 1.3) + (1 << 20)


def _attn_vmem_need(sq, sk, d_model, dqkv, out_cols):
    need = 2 * (sq * d_model * 2 + sk * d_model * 2)   # activation blocks
    need += 2 * (d_model * dqkv * 2)                   # fused projection weight
    need += 2 * (sq * out_cols * 2)                    # output block
    need += (sq + sk) * dqkv * 4                       # projected q/kv (f32 temporaries)
    need += 2 * sq * sk * 4                            # scores + probs
    return int(need * 1.5) + (1 << 20)


# ------------------------- fused matmul (+epilogue) kernel --------------------

def _linear_kernel(*refs, activation, has_bias, fuse_ln):
    """acc += x @ w; on last K step: +bias, GELU, residual+LayerNorm, store."""
    x_ref, w_ref = refs[0], refs[1]
    pos = 2
    b_ref = None
    if has_bias:
        b_ref = refs[pos]
        pos += 1
    if fuse_ln:
        res_ref, g_ref, beta_ref = refs[pos], refs[pos + 1], refs[pos + 2]
        pos += 3
    o_ref, acc_ref = refs[pos], refs[pos + 1]

    @pl.when(pl.program_id(2) == 0)
    def _init():
        acc_ref[...] = jnp.zeros_like(acc_ref)

    # bf16 x bf16 -> f32 accumulate on the MXU.
    acc_ref[...] += jnp.dot(x_ref[...], w_ref[...],
                            preferred_element_type=jnp.float32)

    @pl.when(pl.program_id(2) == pl.num_programs(2) - 1)
    def _finalize():
        y = acc_ref[...]
        if has_bias:
            y = y + b_ref[...]                       # bias is f32 already
        if activation == "gelu":
            # NewGELU: 0.5*x*(1+tanh(sqrt(2/pi)*(x+0.044715*x^3)))  (f32 epilogue)
            c = math.sqrt(2.0 / math.pi)
            y = 0.5 * y * (1.0 + jnp.tanh(c * (y + 0.044715 * y * y * y)))
        if fuse_ln:
            y = y + res_ref[...].astype(jnp.float32)
            mu = jnp.mean(y, axis=-1, keepdims=True)
            var = jnp.mean((y - mu) * (y - mu), axis=-1, keepdims=True)
            y = (y - mu) * lax.rsqrt(var + LN_EPS)
            y = y * g_ref[...] + beta_ref[...]
        o_ref[...] = y.astype(o_ref.dtype)


def _residual_ln_kernel(x_ref, r_ref, g_ref, b_ref, o_ref):
    """Un-fused fallback: y = LayerNorm(x + residual) * g + b, row tiles."""
    y = x_ref[...].astype(jnp.float32) + r_ref[...].astype(jnp.float32)
    mu = jnp.mean(y, axis=-1, keepdims=True)
    var = jnp.mean((y - mu) * (y - mu), axis=-1, keepdims=True)
    y = (y - mu) * lax.rsqrt(var + LN_EPS)
    o_ref[...] = (y * g_ref[...] + b_ref[...]).astype(o_ref.dtype)


def residual_layernorm(x, residual, g, b, out_dtype=ACT_DTYPE):
    cfg = _tpu_config()
    lead = x.shape[:-1]
    d = x.shape[-1]
    m = math.prod(lead)
    x2 = x.reshape(m, d)
    r2 = residual.reshape(m, d)
    g2 = (g if g.dtype == jnp.float32 else g.astype(jnp.float32)).reshape(1, d)
    b2 = (b if b.dtype == jnp.float32 else b.astype(jnp.float32)).reshape(1, d)
    tm = _pick_row_tile(m, cfg["row"])
    out_bytes = jnp.dtype(out_dtype).itemsize
    need = int(1.3 * (2 * tm * d * 2 * 2 + 2 * tm * d * out_bytes + 4 * d * 4)) + (1 << 20)
    out = pl.pallas_call(
        _residual_ln_kernel,
        out_shape=jax.ShapeDtypeStruct((m, d), out_dtype),
        grid=(m // tm,),
        in_specs=[pl.BlockSpec((tm, d), lambda i: (i, 0)),
                  pl.BlockSpec((tm, d), lambda i: (i, 0)),
                  pl.BlockSpec((1, d), lambda i: (0, 0)),
                  pl.BlockSpec((1, d), lambda i: (0, 0))],
        out_specs=pl.BlockSpec((tm, d), lambda i: (i, 0)),
        compiler_params=_mosaic_params(("parallel",), need),
    )(x2, r2, g2, b2)
    return out.reshape(*lead, d)


def fused_linear(x, w, b=None, residual=None, ln=None, activation="none",
                 out_dtype=ACT_DTYPE):
    """y = epilogue(x @ w [+ b]); optional epilogue = GELU and/or LayerNorm(residual + y)."""
    cfg = _tpu_config()
    lead = x.shape[:-1]
    din = x.shape[-1]
    dout = w.shape[-1]
    m = math.prod(lead)

    x2 = x.reshape(m, din)
    if x2.dtype != COMPUTE_DTYPE:
        x2 = x2.astype(COMPUTE_DTYPE)
    w2 = w if w.dtype == COMPUTE_DTYPE else w.astype(COMPUTE_DTYPE)

    has_bias = b is not None
    want_ln = ln is not None
    out_bytes = jnp.dtype(out_dtype).itemsize

    tm = _pick_row_tile(m, cfg["row"])
    tk = _pick_lane_tile(din, cfg["lane"])

    if want_ln:
        # LayerNorm reduces over the full feature dim -> output tile spans it; keep the
        # footprint inside the VMEM budget by capping tm, else fall back to un-fused LN.
        tn = dout
        fits = lambda t: _linear_vmem_need(t, tn, tk, has_bias, True,
                                           out_bytes) <= 0.8 * cfg["vmem_cap"]
        if not fits(tm):
            smaller = [t for t in (128, 64, 32, 16, 8)
                       if t < tm and m % t == 0 and fits(t)]
            if smaller:
                tm = smaller[0]
            else:
                y = fused_linear(x, w, b, activation=activation, out_dtype=ACT_DTYPE)
                return residual_layernorm(y, residual, ln["g"], ln["b"],
                                          out_dtype=out_dtype)
        fuse_ln = True
    else:
        fuse_ln = False
        tn = _pick_lane_tile(dout, cfg["lane"])

    grid = (m // tm, dout // tn, din // tk)
    in_specs = [pl.BlockSpec((tm, tk), lambda i, j, k: (i, k)),
                pl.BlockSpec((tk, tn), lambda i, j, k: (k, j))]
    args = [x2, w2]
    if has_bias:
        bb = b if b.dtype == jnp.float32 else b.astype(jnp.float32)
        in_specs.append(pl.BlockSpec((1, tn), lambda i, j, k: (0, j)))
        args.append(bb.reshape(1, dout))
    if fuse_ln:
        in_specs.append(pl.BlockSpec((tm, tn), lambda i, j, k: (i, j)))
        args.append(residual.reshape(m, dout))
        for par in (ln["g"], ln["b"]):
            pp = par if par.dtype == jnp.float32 else par.astype(jnp.float32)
            in_specs.append(pl.BlockSpec((1, tn), lambda i, j, k: (0, j)))
            args.append(pp.reshape(1, dout))

    vmem_need = _linear_vmem_need(tm, tn, tk, has_bias, fuse_ln, out_bytes)
    out = pl.pallas_call(
        functools.partial(_linear_kernel, activation=activation,
                          has_bias=has_bias, fuse_ln=fuse_ln),
        out_shape=jax.ShapeDtypeStruct((m, dout), out_dtype),
        grid=grid,
        in_specs=in_specs,
        out_specs=pl.BlockSpec((tm, tn), lambda i, j, k: (i, j)),
        scratch_shapes=[pltpu.VMEM((tm, tn), jnp.float32)],
        compiler_params=_mosaic_params(("parallel", "parallel", "arbitrary"),
                                       vmem_need),
    )(*args)
    return out.reshape(*lead, dout)


# ------------------------------ attention kernels -----------------------------

def _softmax_attend(q, k, v, scale, causal):
    """softmax(q k^T * scale [+ causal mask]) @ v  for one head (f32 softmax)."""
    s = lax.dot_general(q, k, (((1,), (1,)), ((), ())),
                        preferred_element_type=jnp.float32) * scale
    if causal:
        sq, sk = s.shape
        row = lax.broadcasted_iota(jnp.int32, (sq, sk), 0)
        col = lax.broadcasted_iota(jnp.int32, (sq, sk), 1)
        s = jnp.where(col > row, -jnp.inf, s)
    mmax = jnp.max(s, axis=-1, keepdims=True)
    e = jnp.exp(s - mmax)
    p = e / jnp.sum(e, axis=-1, keepdims=True)   # exact division (parity-safe)
    return lax.dot_general(p.astype(COMPUTE_DTYPE), v, (((1,), (0,)), ((), ())),
                           preferred_element_type=jnp.float32)


def _self_attn_kernel(x_ref, w_ref, o_ref, *, h, dq, dk, dv, scale, causal):
    """Self-attention with the QKV projection fused in: the (S, h*(dq+dk+dv)) slab
    lives only in VMEM.  Each head's output is stored directly (no concatenate)."""
    qkv = jnp.dot(x_ref[0], w_ref[...],
                  preferred_element_type=jnp.float32).astype(COMPUTE_DTYPE)
    off_k = h * dq
    off_v = h * (dq + dk)
    for hh in range(h):                          # static unroll over heads
        q = qkv[:, hh * dq:(hh + 1) * dq]
        k = qkv[:, off_k + hh * dk:off_k + (hh + 1) * dk]
        v = qkv[:, off_v + hh * dv:off_v + (hh + 1) * dv]
        o = _softmax_attend(q, k, v, scale, causal)
        o_ref[0, :, hh * dv:(hh + 1) * dv] = o.astype(o_ref.dtype)


def _cross_attn_kernel(x_ref, y_ref, w_ref, o_ref, *, h, dq, dk, dv, scale):
    """Cross-attention with Q (from decoder x) and KV (from encoder y) projections fused."""
    q_all = jnp.dot(x_ref[0], w_ref[:, :h * dq],
                    preferred_element_type=jnp.float32).astype(COMPUTE_DTYPE)
    kv_all = jnp.dot(y_ref[0], w_ref[:, h * dq:],
                     preferred_element_type=jnp.float32).astype(COMPUTE_DTYPE)
    off_v = h * dk
    for hh in range(h):
        q = q_all[:, hh * dq:(hh + 1) * dq]
        k = kv_all[:, hh * dk:(hh + 1) * dk]
        v = kv_all[:, off_v + hh * dv:off_v + (hh + 1) * dv]
        o = _softmax_attend(q, k, v, scale, causal=False)
        o_ref[0, :, hh * dv:(hh + 1) * dv] = o.astype(o_ref.dtype)


def self_attention(x, w_qkv, *, h, dq, dk, dv, causal):
    B, S, D = x.shape
    dqkv = w_qkv.shape[1]
    scale = 1.0 / math.sqrt(dq)
    need = _attn_vmem_need(S, S, D, dqkv, h * dv)
    return pl.pallas_call(
        functools.partial(_self_attn_kernel, h=h, dq=dq, dk=dk, dv=dv,
                          scale=scale, causal=causal),
        out_shape=jax.ShapeDtypeStruct((B, S, h * dv), ACT_DTYPE),
        grid=(B,),
        in_specs=[pl.BlockSpec((1, S, D), lambda b: (b, 0, 0)),
                  pl.BlockSpec((D, dqkv), lambda b: (0, 0))],   # weight stays resident
        out_specs=pl.BlockSpec((1, S, h * dv), lambda b: (b, 0, 0)),
        compiler_params=_mosaic_params(("parallel",), need),
    )(x, w_qkv)


def cross_attention(x, y, w_qkv, *, h, dq, dk, dv):
    B, Sq, D = x.shape
    Sk = y.shape[1]
    dqkv = w_qkv.shape[1]
    scale = 1.0 / math.sqrt(dq)
    need = _attn_vmem_need(Sq, Sk, D, dqkv, h * dv)
    return pl.pallas_call(
        functools.partial(_cross_attn_kernel, h=h, dq=dq, dk=dk, dv=dv, scale=scale),
        out_shape=jax.ShapeDtypeStruct((B, Sq, h * dv), ACT_DTYPE),
        grid=(B,),
        in_specs=[pl.BlockSpec((1, Sq, D), lambda b: (b, 0, 0)),
                  pl.BlockSpec((1, Sk, D), lambda b: (b, 0, 0)),
                  pl.BlockSpec((D, dqkv), lambda b: (0, 0))],
        out_specs=pl.BlockSpec((1, Sq, h * dv), lambda b: (b, 0, 0)),
        compiler_params=_mosaic_params(("parallel",), need),
    )(x, y, w_qkv)


# --------------------------- model building blocks ----------------------------

def encoder_block(x, p, *, h, dq, dk, dv):
    attn = self_attention(x, p["mh"]["w_qkv"], h=h, dq=dq, dk=dk, dv=dv, causal=False)
    # output projection + residual + LayerNorm fused into one kernel
    x = fused_linear(attn, p["mh"]["wo"], p["mh"]["bo"], residual=x, ln=p["ln1"])
    ff = fused_linear(x, p["ff"]["w1"], p["ff"]["b1"], activation="gelu")
    x = fused_linear(ff, p["ff"]["w2"], p["ff"]["b2"], residual=x, ln=p["ln2"])
    return x


def decoder_block(x, y, p, *, h, dq, dk, dv):
    attn = self_attention(x, p["mh_masked"]["w_qkv"], h=h, dq=dq, dk=dk, dv=dv,
                          causal=True)
    x = fused_linear(attn, p["mh_masked"]["wo"], p["mh_masked"]["bo"],
                     residual=x, ln=p["ln1"])
    attn = cross_attention(x, y, p["mh_enc"]["w_qkv"], h=h, dq=dq, dk=dk, dv=dv)
    x = fused_linear(attn, p["mh_enc"]["wo"], p["mh_enc"]["bo"],
                     residual=x, ln=p["ln2"])
    ff = fused_linear(x, p["ff"]["w1"], p["ff"]["b1"], activation="gelu")
    x = fused_linear(ff, p["ff"]["w2"], p["ff"]["b2"], residual=x, ln=p["ln3"])
    return x


def get_pe(seq_len, d_model):
    # TODO(synk): utils.get_pe source unavailable; using standard sinusoidal PE.
    pos = jnp.arange(seq_len, dtype=jnp.float32)[:, None]
    i = jnp.arange(0, d_model, 2, dtype=jnp.float32)
    div = jnp.exp(-jnp.log(10000.0) * i / d_model)
    pe = jnp.zeros((seq_len, d_model), jnp.float32)
    pe = pe.at[:, 0::2].set(jnp.sin(pos * div))
    pe = pe.at[:, 1::2].set(jnp.cos(pos * div))
    return pe


def transformer_forward(params, enc_src, dec_src, *, h, dq, dk, dv):
    emb = params["embedding"]                     # f32 (d_token, d_model), shared enc/dec
    d_model = emb.shape[1]
    emb_scale = math.sqrt(d_model)
    enc_in = jnp.take(emb, enc_src, axis=0) * emb_scale   # (B, Se, D)
    dec_in = jnp.take(emb, dec_src, axis=0) * emb_scale   # (B, Sd, D)

    # Encoder  (cast to bf16 once; all inter-layer activations stay bf16)
    x = (enc_in + get_pe(enc_in.shape[1], d_model)[None]).astype(ACT_DTYPE)
    for blk in params["encoder"]:
        x = encoder_block(x, blk, h=h, dq=dq, dk=dk, dv=dv)
    enc_out = x

    # Decoder
    x = (dec_in + get_pe(dec_in.shape[1], d_model)[None]).astype(ACT_DTYPE)
    for blk in params["decoder"]["blocks"]:
        x = decoder_block(x, enc_out, blk, h=h, dq=dq, dk=dk, dv=dv)
    return fused_linear(x, params["decoder"]["l1_w"], params["decoder"]["l1_b"],
                        out_dtype=jnp.float32)


# --------------------------------- param init ---------------------------------

class _KeyGen:
    def __init__(self, key):
        self.key = key

    def __call__(self):
        self.key, sub = jax.random.split(self.key)
        return sub


def _init_mha(kg, d_model, h, dq, dk, dv):
    std = 0.02
    wq = std * jax.random.normal(kg(), (h, d_model, dq), jnp.float32)
    wk = std * jax.random.normal(kg(), (h, d_model, dk), jnp.float32)
    wv = std * jax.random.normal(kg(), (h, d_model, dv), jnp.float32)
    # Fuse per-head projections into [Wq_all | Wk_all | Wv_all], head-major columns.
    w_q = jnp.transpose(wq, (1, 0, 2)).reshape(d_model, h * dq)
    w_k = jnp.transpose(wk, (1, 0, 2)).reshape(d_model, h * dk)
    w_v = jnp.transpose(wv, (1, 0, 2)).reshape(d_model, h * dv)
    return {
        # Weights stored in bf16 ONCE (no per-call casts); biases pre-shaped (1, D) f32.
        "w_qkv": jnp.concatenate([w_q, w_k, w_v], axis=1).astype(COMPUTE_DTYPE),
        "wo": (std * jax.random.normal(kg(), (h * dv, d_model), jnp.float32)
               ).astype(COMPUTE_DTYPE),
        "bo": jnp.zeros((1, d_model), jnp.float32),
    }


def _init_ff(kg, d_model, d_middle):
    std = 0.02
    return {
        "w1": (std * jax.random.normal(kg(), (d_model, d_middle), jnp.float32)
               ).astype(COMPUTE_DTYPE),
        "b1": jnp.zeros((1, d_middle), jnp.float32),
        "w2": (std * jax.random.normal(kg(), (d_middle, d_model), jnp.float32)
               ).astype(COMPUTE_DTYPE),
        "b2": jnp.zeros((1, d_model), jnp.float32),
    }


def _init_ln(d):
    return {"g": jnp.ones((1, d), jnp.float32), "b": jnp.zeros((1, d), jnp.float32)}


def init_params(key, num_blocks, d_model, d_middle, d_token, h, dq, dk, dv):
    kg = _KeyGen(key)
    std = 0.02
    enc_blocks = []
    for _ in range(num_blocks):
        enc_blocks.append({
            "mh": _init_mha(kg, d_model, h, dq, dk, dv),
            "ln1": _init_ln(d_model),
            "ff": _init_ff(kg, d_model, d_middle),
            "ln2": _init_ln(d_model),
        })
    dec_blocks = []
    for _ in range(num_blocks):
        dec_blocks.append({
            "mh_masked": _init_mha(kg, d_model, h, dq, dk, dv),
            "mh_enc": _init_mha(kg, d_model, h, dq, dk, dv),
            "ln1": _init_ln(d_model),
            "ln2": _init_ln(d_model),
            "ln3": _init_ln(d_model),
            "ff": _init_ff(kg, d_model, d_middle),
        })
    return {
        "embedding": std * jax.random.normal(kg(), (d_token, d_model), jnp.float32),
        "encoder": enc_blocks,
        "decoder": {
            "blocks": dec_blocks,
            "l1_w": (std * jax.random.normal(kg(), (d_model, d_token), jnp.float32)
                     ).astype(COMPUTE_DTYPE),
            "l1_b": jnp.zeros((1, d_token), jnp.float32),
        },
    }


# ------------------------------------ main -------------------------------------

if __name__ == "__main__":
    # Small, forward-consistent shapes.
    num_blocks = 2
    d_model = 32
    d_middle = 64
    d_token = 16
    h = 2
    d_Q = d_K = d_V = 16
    B, S = 2, 8

    root = jax.random.PRNGKey(0)
    pk, ek, dkey = jax.random.split(root, 3)
    params = init_params(pk, num_blocks, d_model, d_middle, d_token, h, d_Q, d_K, d_V)

    enc_src = jax.random.randint(ek, (B, S), 0, d_token, dtype=jnp.int32)
    dec_src = jax.random.randint(dkey, (B, S), 0, d_token, dtype=jnp.int32)

    fwd = jax.jit(functools.partial(transformer_forward, h=h, dq=d_Q, dk=d_K, dv=d_V))
    out = jax.block_until_ready(fwd(params, enc_src, dec_src))

    assert out.shape == (B, S, d_token), out.shape
    assert bool(jnp.all(jnp.isfinite(out)))
    print("KERNEL_OK")
</pallas_src>

<mosaic_0001>
module attributes {stable_mosaic.version = 11 : i64} {
  func.func @_linear_kernel(%arg0: i32, %arg1: i32, %arg2: i32, %arg3: memref<16x32xbf16, #tpu.memory_space<vmem>>, %arg4: memref<32x32xbf16, #tpu.memory_space<vmem>>, %arg5: memref<1x32xf32, #tpu.memory_space<vmem>>, %arg6: memref<16x32xbf16, #tpu.memory_space<vmem>>, %arg7: memref<1x32xf32, #tpu.memory_space<vmem>>, %arg8: memref<1x32xf32, #tpu.memory_space<vmem>>, %arg9: memref<16x32xbf16, #tpu.memory_space<vmem>>, %arg10: memref<16x32xf32, #tpu.memory_space<vmem>>) attributes {dimension_semantics = [#tpu.dimension_semantics<parallel>, #tpu.dimension_semantics<parallel>, #tpu.dimension_semantics<arbitrary>], iteration_bounds = array<i64: 1, 1, 1>, scalar_prefetch = 0 : i64, scratch_operands = 1 : i64, tpu.core_type = #tpu.core_type<tc>, window_params = [{transform_indices = @transform_0, window_bounds = array<i64: 16, 32>}, {transform_indices = @transform_1, window_bounds = array<i64: 32, 32>}, {transform_indices = @transform_2, window_bounds = array<i64: 1, 32>}, {transform_indices = @transform_3, window_bounds = array<i64: 16, 32>}, {transform_indices = @transform_4, window_bounds = array<i64: 1, 32>}, {transform_indices = @transform_5, window_bounds = array<i64: 1, 32>}, {transform_indices = @transform_6, window_bounds = array<i64: 16, 32>}]} {
    %c0_i32 = arith.constant 0 : i32
    %0 = arith.cmpi eq, %arg2, %c0_i32 : i32
    %1 = arith.extui %0 : i1 to i32
    %c0_i32_0 = arith.constant 0 : i32
    %2 = arith.cmpi ne, %1, %c0_i32_0 : i32
    scf.if %2 {
      %cst_10 = arith.constant 0.000000e+00 : f32
      %12 = vector.broadcast %cst_10 : f32 to vector<16x32xf32>
      %c0_11 = arith.constant 0 : index
      %c0_12 = arith.constant 0 : index
      %13 = vector.load %arg10[%c0_11, %c0_12] : memref<16x32xf32, #tpu.memory_space<vmem>>, vector<16x32xf32>
      tpu.vector_store %arg10[%c0_11, %c0_12], %12 {strides = array<i32>} : memref<16x32xf32, #tpu.memory_space<vmem>>, vector<16x32xf32>,
    } else {
    }
    %c0 = arith.constant 0 : index
    %c0_1 = arith.constant 0 : index
    %3 = vector.load %arg10[%c0, %c0_1] : memref<16x32xf32, #tpu.memory_space<vmem>>, vector<16x32xf32>
    %c0_2 = arith.constant 0 : index
    %c0_3 = arith.constant 0 : index
    %4 = vector.load %arg3[%c0_2, %c0_3] : memref<16x32xbf16, #tpu.memory_space<vmem>>, vector<16x32xbf16>
    %c0_4 = arith.constant 0 : index
    %c0_5 = arith.constant 0 : index
    %5 = vector.load %arg4[%c0_4, %c0_5] : memref<32x32xbf16, #tpu.memory_space<vmem>>, vector<32x32xbf16>
    %cst = arith.constant dense<0.000000e+00> : vector<16x32xf32>
    %6 = tpu.matmul %4, %5, %cst {dimension_numbers = #tpu.dot_dimension_numbers<[1], [0], [0], [1], [0, 0, 1, 1], [], []>} : vector<16x32xbf16>, vector<32x32xbf16>, vector<16x32xf32> -> vector<16x32xf32>
    %7 = arith.addf %3, %6 : vector<16x32xf32>
    %c0_6 = arith.constant 0 : index
    %c0_7 = arith.constant 0 : index
    %8 = vector.load %arg10[%c0_6, %c0_7] : memref<16x32xf32, #tpu.memory_space<vmem>>, vector<16x32xf32>
    tpu.vector_store %arg10[%c0_6, %c0_7], %7 {strides = array<i32>} : memref<16x32xf32, #tpu.memory_space<vmem>>, vector<16x32xf32>,
    %c0_i32_8 = arith.constant 0 : i32
    %9 = arith.cmpi eq, %arg2, %c0_i32_8 : i32
    %10 = arith.extui %9 : i1 to i32
    %c0_i32_9 = arith.constant 0 : i32
    %11 = arith.cmpi ne, %10, %c0_i32_9 : i32
    scf.if %11 {
      %c0_10 = arith.constant 0 : index
      %c0_11 = arith.constant 0 : index
      %12 = vector.load %arg10[%c0_10, %c0_11] : memref<16x32xf32, #tpu.memory_space<vmem>>, vector<16x32xf32>
      %c0_12 = arith.constant 0 : index
      %c0_13 = arith.constant 0 : index
      %13 = vector.load %arg5[%c0_12, %c0_13] : memref<1x32xf32, #tpu.memory_space<vmem>>, vector<1x32xf32>
      %14 = vector.broadcast %13 : vector<1x32xf32> to vector<16x32xf32>
      %15 = arith.addf %12, %14 : vector<16x32xf32>
      %c0_14 = arith.constant 0 : index
      %c0_15 = arith.constant 0 : index
      %16 = vector.load %arg6[%c0_14, %c0_15] : memref<16x32xbf16, #tpu.memory_space<vmem>>, vector<16x32xbf16>
      %17 = arith.extf %16 : vector<16x32xbf16> to vector<16x32xf32>
      %18 = arith.addf %15, %17 : vector<16x32xf32>
      %cst_16 = arith.constant dense<0.000000e+00> : vector<16xf32>
      %19 = vector.multi_reduction <add>, %18, %cst_16 [1] : vector<16x32xf32> to vector<16xf32>
      %20 = vector.shape_cast %19 : vector<16xf32> to vector<16x1xf32>
      %cst_17 = arith.constant 3.200000e+01 : f32
      %21 = vector.broadcast %cst_17 : f32 to vector<16x1xf32>
      %22 = arith.divf %20, %21 : vector<16x1xf32>
      %23 = vector.broadcast %22 : vector<16x1xf32> to vector<16x32xf32>
      %24 = arith.subf %18, %23 : vector<16x32xf32>
      %25 = vector.broadcast %22 : vector<16x1xf32> to vector<16x32xf32>
      %26 = arith.subf %18, %25 : vector<16x32xf32>
      %27 = arith.mulf %24, %26 : vector<16x32xf32>
      %cst_18 = arith.constant dense<0.000000e+00> : vector<16xf32>
      %28 = vector.multi_reduction <add>, %27, %cst_18 [1] : vector<16x32xf32> to vector<16xf32>
      %29 = vector.shape_cast %28 : vector<16xf32> to vector<16x1xf32>
      %cst_19 = arith.constant 3.200000e+01 : f32
      %30 = vector.broadcast %cst_19 : f32 to vector<16x1xf32>
      %31 = arith.divf %29, %30 : vector<16x1xf32>
      %32 = vector.broadcast %22 : vector<16x1xf32> to vector<16x32xf32>
      %33 = arith.subf %18, %32 : vector<16x32xf32>
      %cst_20 = arith.constant 9.99999974E-6 : f32
      %34 = vector.broadcast %cst_20 : f32 to vector<16x1xf32>
      %35 = arith.addf %31, %34 : vector<16x1xf32>
      %36 = math.rsqrt %35 : vector<16x1xf32>
      %37 = vector.broadcast %36 : vector<16x1xf32> to vector<16x32xf32>
      %38 = arith.mulf %33, %37 : vector<16x32xf32>
      %c0_21 = arith.constant 0 : index
      %c0_22 = arith.constant 0 : index
      %39 = vector.load %arg7[%c0_21, %c0_22] : memref<1x32xf32, #tpu.memory_space<vmem>>, vector<1x32xf32>
      %40 = vector.broadcast %39 : vector<1x32xf32> to vector<16x32xf32>
      %41 = arith.mulf %38, %40 : vector<16x32xf32>
      %c0_23 = arith.constant 0 : index
      %c0_24 = arith.constant 0 : index
      %42 = vector.load %arg8[%c0_23, %c0_24] : memref<1x32xf32, #tpu.memory_space<vmem>>, vector<1x32xf32>
      %43 = vector.broadcast %42 : vector<1x32xf32> to vector<16x32xf32>
      %44 = arith.addf %41, %43 : vector<16x32xf32>
      %45 = arith.truncf %44 : vector<16x32xf32> to vector<16x32xbf16>
      %c0_25 = arith.constant 0 : index
      %c0_26 = arith.constant 0 : index
      %46 = vector.load %arg9[%c0_25, %c0_26] : memref<16x32xbf16, #tpu.memory_space<vmem>>, vector<16x32xbf16>
      tpu.vector_store %arg9[%c0_25, %c0_26], %45 {strides = array<i32>} : memref<16x32xbf16, #tpu.memory_space<vmem>>, vector<16x32xbf16>,
    } else {
    }
    return
  }
  func.func @transform_0(%arg0: i32, %arg1: i32, %arg2: i32) -> (i32, i32) {
    %c0_i32 = arith.constant 0 : i32
    return %arg0, %arg2 : i32, i32
  }
  func.func @transform_1(%arg0: i32, %arg1: i32, %arg2: i32) -> (i32, i32) {
    %c0_i32 = arith.constant 0 : i32
    return %arg2, %arg1 : i32, i32
  }
  func.func @transform_2(%arg0: i32, %arg1: i32, %arg2: i32) -> (i32, i32) {
    %c0_i32 = arith.constant 0 : i32
    %c0_i32_0 = arith.constant 0 : i32
    return %c0_i32, %arg1 : i32, i32
  }
  func.func @transform_3(%arg0: i32, %arg1: i32, %arg2: i32) -> (i32, i32) {
    %c0_i32 = arith.constant 0 : i32
    return %arg0, %arg1 : i32, i32
  }
  func.func @transform_4(%arg0: i32, %arg1: i32, %arg2: i32) -> (i32, i32) {
    %c0_i32 = arith.constant 0 : i32
    %c0_i32_0 = arith.constant 0 : i32
    return %c0_i32, %arg1 : i32, i32
  }
  func.func @transform_5(%arg0: i32, %arg1: i32, %arg2: i32) -> (i32, i32) {
    %c0_i32 = arith.constant 0 : i32
    %c0_i32_0 = arith.constant 0 : i32
    return %c0_i32, %arg1 : i32, i32
  }
  func.func @transform_6(%arg0: i32, %arg1: i32, %arg2: i32) -> (i32, i32) {
    %c0_i32 = arith.constant 0 : i32
    return %arg0, %arg1 : i32, i32
  }
}

module attributes {stable_mosaic.version = 11 : i64} {
  func.func @_linear_kernel(%arg0: i32, %arg1: i32, %arg2: i32, %arg3: memref<16x32xbf16, #tpu.memory_space<vmem>>, %arg4: memref<32x64xbf16, #tpu.memory_space<vmem>>, %arg5: memref<1x64xf32, #tpu.memory_space<vmem>>, %arg6: memref<16x64xbf16, #tpu.memory_space<vmem>>, %arg7: memref<16x64xf32, #tpu.memory_space<vmem>>) attributes {dimension_semantics = [#tpu.dimension_semantics<parallel>, #tpu.dimension_semantics<parallel>, #tpu.dimension_semantics<arbitrary>], iteration_bounds = array<i64: 1, 1, 1>, scalar_prefetch = 0 : i64, scratch_operands = 1 : i64, tpu.core_type = #tpu.core_type<tc>, window_params = [{transform_indices = @transform_0, window_bounds = array<i64: 16, 32>}, {transform_indices = @transform_1, window_bounds = array<i64: 32, 64>}, {transform_indices = @transform_2, window_bounds = array<i64: 1, 64>}, {transform_indices = @transform_3, window_bounds = array<i64: 16, 64>}]} {
    %c0_i32 = arith.constant 0 : i32
    %0 = arith.cmpi eq, %arg2, %c0_i32 : i32
    %1 = arith.extui %0 : i1 to i32
    %c0_i32_0 = arith.constant 0 : i32
    %2 = arith.cmpi ne, %1, %c0_i32_0 : i32
    scf.if %2 {
      %cst_10 = arith.constant 0.000000e+00 : f32
      %12 = vector.broadcast %cst_10 : f32 to vector<16x64xf32>
      %c0_11 = arith.constant 0 : index
      %c0_12 = arith.constant 0 : index
      %13 = vector.load %arg7[%c0_11, %c0_12] : memref<16x64xf32, #tpu.memory_space<vmem>>, vector<16x64xf32>
      tpu.vector_store %arg7[%c0_11, %c0_12], %12 {strides = array<i32>} : memref<16x64xf32, #tpu.memory_space<vmem>>, vector<16x64xf32>,
    } else {
    }
    %c0 = arith.constant 0 : index
    %c0_1 = arith.constant 0 : index
    %3 = vector.load %arg7[%c0, %c0_1] : memref<16x64xf32, #tpu.memory_space<vmem>>, vector<16x64xf32>
    %c0_2 = arith.constant 0 : index
    %c0_3 = arith.constant 0 : index
    %4 = vector.load %arg3[%c0_2, %c0_3] : memref<16x32xbf16, #tpu.memory_space<vmem>>, vector<16x32xbf16>
    %c0_4 = arith.constant 0 : index
    %c0_5 = arith.constant 0 : index
    %5 = vector.load %arg4[%c0_4, %c0_5] : memref<32x64xbf16, #tpu.memory_space<vmem>>, vector<32x64xbf16>
    %cst = arith.constant dense<0.000000e+00> : vector<16x64xf32>
    %6 = tpu.matmul %4, %5, %cst {dimension_numbers = #tpu.dot_dimension_numbers<[1], [0], [0], [1], [0, 0, 1, 1], [], []>} : vector<16x32xbf16>, vector<32x64xbf16>, vector<16x64xf32> -> vector<16x64xf32>
    %7 = arith.addf %3, %6 : vector<16x64xf32>
    %c0_6 = arith.constant 0 : index
    %c0_7 = arith.constant 0 : index
    %8 = vector.load %arg7[%c0_6, %c0_7] : memref<16x64xf32, #tpu.memory_space<vmem>>, vector<16x64xf32>
    tpu.vector_store %arg7[%c0_6, %c0_7], %7 {strides = array<i32>} : memref<16x64xf32, #tpu.memory_space<vmem>>, vector<16x64xf32>,
    %c0_i32_8 = arith.constant 0 : i32
    %9 = arith.cmpi eq, %arg2, %c0_i32_8 : i32
    %10 = arith.extui %9 : i1 to i32
    %c0_i32_9 = arith.constant 0 : i32
    %11 = arith.cmpi ne, %10, %c0_i32_9 : i32
    scf.if %11 {
      %c0_10 = arith.constant 0 : index
      %c0_11 = arith.constant 0 : index
      %12 = vector.load %arg7[%c0_10, %c0_11] : memref<16x64xf32, #tpu.memory_space<vmem>>, vector<16x64xf32>
      %c0_12 = arith.constant 0 : index
      %c0_13 = arith.constant 0 : index
      %13 = vector.load %arg5[%c0_12, %c0_13] : memref<1x64xf32, #tpu.memory_space<vmem>>, vector<1x64xf32>
      %14 = vector.broadcast %13 : vector<1x64xf32> to vector<16x64xf32>
      %15 = arith.addf %12, %14 : vector<16x64xf32>
      %cst_14 = arith.constant 5.000000e-01 : f32
      %16 = vector.broadcast %cst_14 : f32 to vector<16x64xf32>
      %17 = arith.mulf %16, %15 : vector<16x64xf32>
      %cst_15 = arith.constant 4.471500e-02 : f32
      %18 = vector.broadcast %cst_15 : f32 to vector<16x64xf32>
      %19 = arith.mulf %18, %15 : vector<16x64xf32>
      %20 = arith.mulf %19, %15 : vector<16x64xf32>
      %21 = arith.mulf %20, %15 : vector<16x64xf32>
      %22 = arith.addf %15, %21 : vector<16x64xf32>
      %cst_16 = arith.constant 0.797884583 : f32
      %23 = vector.broadcast %cst_16 : f32 to vector<16x64xf32>
      %24 = arith.mulf %23, %22 : vector<16x64xf32>
      %25 = math.tanh %24 : vector<16x64xf32>
      %cst_17 = arith.constant 1.000000e+00 : f32
      %26 = vector.broadcast %cst_17 : f32 to vector<16x64xf32>
      %27 = arith.addf %26, %25 : vector<16x64xf32>
      %28 = arith.mulf %17, %27 : vector<16x64xf32>
      %29 = arith.truncf %28 : vector<16x64xf32> to vector<16x64xbf16>
      %c0_18 = arith.constant 0 : index
      %c0_19 = arith.constant 0 : index
      %30 = vector.load %arg6[%c0_18, %c0_19] : memref<16x64xbf16, #tpu.memory_space<vmem>>, vector<16x64xbf16>
      tpu.vector_store %arg6[%c0_18, %c0_19], %29 {strides = array<i32>} : memref<16x64xbf16, #tpu.memory_space<vmem>>, vector<16x64xbf16>,
    } else {
    }
    return
  }
  func.func @transform_0(%arg0: i32, %arg1: i32, %arg2: i32) -> (i32, i32) {
    %c0_i32 = arith.constant 0 : i32
    return %arg0, %arg2 : i32, i32
  }
  func.func @transform_1(%arg0: i32, %arg1: i32, %arg2: i32) -> (i32, i32) {
    %c0_i32 = arith.constant 0 : i32
    return %arg2, %arg1 : i32, i32
  }
  func.func @transform_2(%arg0: i32, %arg1: i32, %arg2: i32) -> (i32, i32) {
    %c0_i32 = arith.constant 0 : i32
    %c0_i32_0 = arith.constant 0 : i32
    return %c0_i32, %arg1 : i32, i32
  }
  func.func @transform_3(%arg0: i32, %arg1: i32, %arg2: i32) -> (i32, i32) {
    %c0_i32 = arith.constant 0 : i32
    return %arg0, %arg1 : i32, i32
  }
}

module attributes {stable_mosaic.version = 11 : i64} {
  func.func @_self_attn_kernel(%arg0: i32, %arg1: memref<1x8x32xbf16, #tpu.memory_space<vmem>>, %arg2: memref<32x96xbf16, #tpu.memory_space<vmem>>, %arg3: memref<1x8x32xbf16, #tpu.memory_space<vmem>>) attributes {dimension_semantics = [#tpu.dimension_semantics<parallel>], iteration_bounds = array<i64: 2>, scalar_prefetch = 0 : i64, scratch_operands = 0 : i64, tpu.core_type = #tpu.core_type<tc>, window_params = [{transform_indices = @transform_0, window_bounds = array<i64: 1, 8, 32>}, {pipeline_mode = #tpu.pipeline_mode<synchronous>, transform_indices = @transform_1, window_bounds = array<i64: 32, 96>}, {transform_indices = @transform_2, window_bounds = array<i64: 1, 8, 32>}]} {
    %c0 = arith.constant 0 : index
    %c0_0 = arith.constant 0 : index
    %c0_1 = arith.constant 0 : index
    %0 = vector.load %arg1[%c0, %c0_0, %c0_1] : memref<1x8x32xbf16, #tpu.memory_space<vmem>>, vector<1x8x32xbf16>
    %1 = vector.shape_cast %0 : vector<1x8x32xbf16> to vector<8x32xbf16>
    %c0_2 = arith.constant 0 : index
    %c0_3 = arith.constant 0 : index
    %2 = vector.load %arg2[%c0_2, %c0_3] : memref<32x96xbf16, #tpu.memory_space<vmem>>, vector<32x96xbf16>
    %cst = arith.constant dense<0.000000e+00> : vector<8x96xf32>
    %3 = tpu.matmul %1, %2, %cst {dimension_numbers = #tpu.dot_dimension_numbers<[1], [0], [0], [1], [0, 0, 1, 1], [], []>} : vector<8x32xbf16>, vector<32x96xbf16>, vector<8x96xf32> -> vector<8x96xf32>
    %4 = arith.truncf %3 : vector<8x96xf32> to vector<8x96xbf16>
    %5 = vector.extract_strided_slice %4 {offsets = [0, 0], sizes = [8, 16], strides = [1, 1]} : vector<8x96xbf16> to vector<8x16xbf16>
    %6 = vector.extract_strided_slice %4 {offsets = [0, 32], sizes = [8, 16], strides = [1, 1]} : vector<8x96xbf16> to vector<8x16xbf16>
    %7 = vector.extract_strided_slice %4 {offsets = [0, 64], sizes = [8, 16], strides = [1, 1]} : vector<8x96xbf16> to vector<8x16xbf16>
    %cst_4 = arith.constant dense<0.000000e+00> : vector<8x8xf32>
    %8 = tpu.matmul %5, %6, %cst_4 {dimension_numbers = #tpu.dot_dimension_numbers<[1], [1], [0], [0], [0, 0, 1, 0], [], []>} : vector<8x16xbf16>, vector<8x16xbf16>, vector<8x8xf32> -> vector<8x8xf32>
    %cst_5 = arith.constant 2.500000e-01 : f32
    %9 = vector.broadcast %cst_5 : f32 to vector<8x8xf32>
    %10 = arith.mulf %8, %9 : vector<8x8xf32>
    %cst_6 = arith.constant dense<0xFF800000> : vector<8xf32>
    %11 = vector.multi_reduction <maximumf>, %10, %cst_6 [1] : vector<8x8xf32> to vector<8xf32>
    %12 = vector.shape_cast %11 : vector<8xf32> to vector<8x1xf32>
    %13 = vector.broadcast %12 : vector<8x1xf32> to vector<8x8xf32>
    %14 = arith.subf %10, %13 : vector<8x8xf32>
    %15 = math.exp %14 : vector<8x8xf32>
    %cst_7 = arith.constant dense<0.000000e+00> : vector<8xf32>
    %16 = vector.multi_reduction <add>, %15, %cst_7 [1] : vector<8x8xf32> to vector<8xf32>
    %17 = vector.shape_cast %16 : vector<8xf32> to vector<8x1xf32>
    %18 = vector.broadcast %17 : vector<8x1xf32> to vector<8x8xf32>
    %19 = arith.divf %15, %18 : vector<8x8xf32>
    %20 = arith.truncf %19 : vector<8x8xf32> to vector<8x8xbf16>
    %cst_8 = arith.constant dense<0.000000e+00> : vector<8x16xf32>
    %21 = tpu.matmul %20, %7, %cst_8 {dimension_numbers = #tpu.dot_dimension_numbers<[1], [0], [0], [1], [0, 0, 1, 1], [], []>} : vector<8x8xbf16>, vector<8x16xbf16>, vector<8x16xf32> -> vector<8x16xf32>
    %22 = arith.truncf %21 : vector<8x16xf32> to vector<8x16xbf16>
    %c0_9 = arith.constant 0 : index
    %c0_10 = arith.constant 0 : index
    %c0_11 = arith.constant 0 : index
    %23 = vector.load %arg3[%c0_9, %c0_10, %c0_11] : memref<1x8x32xbf16, #tpu.memory_space<vmem>>, vector<1x8x16xbf16>
    %24 = vector.shape_cast %23 : vector<1x8x16xbf16> to vector<8x16xbf16>
    %25 = vector.shape_cast %22 : vector<8x16xbf16> to vector<1x8x16xbf16>
    tpu.vector_store %arg3[%c0_9, %c0_10, %c0_11], %25 {strides = array<i32>} : memref<1x8x32xbf16, #tpu.memory_space<vmem>>, vector<1x8x16xbf16>,
    %26 = vector.extract_strided_slice %4 {offsets = [0, 16], sizes = [8, 16], strides = [1, 1]} : vector<8x96xbf16> to vector<8x16xbf16>
    %27 = vector.extract_strided_slice %4 {offsets = [0, 48], sizes = [8, 16], strides = [1, 1]} : vector<8x96xbf16> to vector<8x16xbf16>
    %28 = vector.extract_strided_slice %4 {offsets = [0, 80], sizes = [8, 16], strides = [1, 1]} : vector<8x96xbf16> to vector<8x16xbf16>
    %cst_12 = arith.constant dense<0.000000e+00> : vector<8x8xf32>
    %29 = tpu.matmul %26, %27, %cst_12 {dimension_numbers = #tpu.dot_dimension_numbers<[1], [1], [0], [0], [0, 0, 1, 0], [], []>} : vector<8x16xbf16>, vector<8x16xbf16>, vector<8x8xf32> -> vector<8x8xf32>
    %cst_13 = arith.constant 2.500000e-01 : f32
    %30 = vector.broadcast %cst_13 : f32 to vector<8x8xf32>
    %31 = arith.mulf %29, %30 : vector<8x8xf32>
    %cst_14 = arith.constant dense<0xFF800000> : vector<8xf32>
    %32 = vector.multi_reduction <maximumf>, %31, %cst_14 [1] : vector<8x8xf32> to vector<8xf32>
    %33 = vector.shape_cast %32 : vector<8xf32> to vector<8x1xf32>
    %34 = vector.broadcast %33 : vector<8x1xf32> to vector<8x8xf32>
    %35 = arith.subf %31, %34 : vector<8x8xf32>
    %36 = math.exp %35 : vector<8x8xf32>
    %cst_15 = arith.constant dense<0.000000e+00> : vector<8xf32>
    %37 = vector.multi_reduction <add>, %36, %cst_15 [1] : vector<8x8xf32> to vector<8xf32>
    %38 = vector.shape_cast %37 : vector<8xf32> to vector<8x1xf32>
    %39 = vector.broadcast %38 : vector<8x1xf32> to vector<8x8xf32>
    %40 = arith.divf %36, %39 : vector<8x8xf32>
    %41 = arith.truncf %40 : vector<8x8xf32> to vector<8x8xbf16>
    %cst_16 = arith.constant dense<0.000000e+00> : vector<8x16xf32>
    %42 = tpu.matmul %41, %28, %cst_16 {dimension_numbers = #tpu.dot_dimension_numbers<[1], [0], [0], [1], [0, 0, 1, 1], [], []>} : vector<8x8xbf16>, vector<8x16xbf16>, vector<8x16xf32> -> vector<8x16xf32>
    %43 = arith.truncf %42 : vector<8x16xf32> to vector<8x16xbf16>
    %c0_17 = arith.constant 0 : index
    %c0_18 = arith.constant 0 : index
    %c16 = arith.constant 16 : index
    %44 = vector.load %arg3[%c0_17, %c0_18, %c16] : memref<1x8x32xbf16, #tpu.memory_space<vmem>>, vector<1x8x16xbf16>
    %45 = vector.shape_cast %44 : vector<1x8x16xbf16> to vector<8x16xbf16>
    %46 = vector.shape_cast %43 : vector<8x16xbf16> to vector<1x8x16xbf16>
    tpu.vector_store %arg3[%c0_17, %c0_18, %c16], %46 {strides = array<i32>} : memref<1x8x32xbf16, #tpu.memory_space<vmem>>, vector<1x8x16xbf16>,
    return
  }
  func.func @transform_0(%arg0: i32) -> (i32, i32, i32) {
    %c0_i32 = arith.constant 0 : i32
    %c0_i32_0 = arith.constant 0 : i32
    %c0_i32_1 = arith.constant 0 : i32
    return %arg0, %c0_i32, %c0_i32_0 : i32, i32, i32
  }
  func.func @transform_1(%arg0: i32) -> (i32, i32) {
    %c0_i32 = arith.constant 0 : i32
    %c0_i32_0 = arith.constant 0 : i32
    %c0_i32_1 = arith.constant 0 : i32
    return %c0_i32, %c0_i32_0 : i32, i32
  }
  func.func @transform_2(%arg0: i32) -> (i32, i32, i32) {
    %c0_i32 = arith.constant 0 : i32
    %c0_i32_0 = arith.constant 0 : i32
    %c0_i32_1 = arith.constant 0 : i32
    return %arg0, %c0_i32, %c0_i32_0 : i32, i32, i32
  }
}

module attributes {stable_mosaic.version = 11 : i64} {
  func.func @_linear_kernel(%arg0: i32, %arg1: i32, %arg2: i32, %arg3: memref<16x64xbf16, #tpu.memory_space<vmem>>, %arg4: memref<64x32xbf16, #tpu.memory_space<vmem>>, %arg5: memref<1x32xf32, #tpu.memory_space<vmem>>, %arg6: memref<16x32xbf16, #tpu.memory_space<vmem>>, %arg7: memref<1x32xf32, #tpu.memory_space<vmem>>, %arg8: memref<1x32xf32, #tpu.memory_space<vmem>>, %arg9: memref<16x32xbf16, #tpu.memory_space<vmem>>, %arg10: memref<16x32xf32, #tpu.memory_space<vmem>>) attributes {dimension_semantics = [#tpu.dimension_semantics<parallel>, #tpu.dimension_semantics<parallel>, #tpu.dimension_semantics<arbitrary>], iteration_bounds = array<i64: 1, 1, 1>, scalar_prefetch = 0 : i64, scratch_operands = 1 : i64, tpu.core_type = #tpu.core_type<tc>, window_params = [{transform_indices = @transform_0, window_bounds = array<i64: 16, 64>}, {transform_indices = @transform_1, window_bounds = array<i64: 64, 32>}, {transform_indices = @transform_2, window_bounds = array<i64: 1, 32>}, {transform_indices = @transform_3, window_bounds = array<i64: 16, 32>}, {transform_indices = @transform_4, window_bounds = array<i64: 1, 32>}, {transform_indices = @transform_5, window_bounds = array<i64: 1, 32>}, {transform_indices = @transform_6, window_bounds = array<i64: 16, 32>}]} {
    %c0_i32 = arith.constant 0 : i32
    %0 = arith.cmpi eq, %arg2, %c0_i32 : i32
    %1 = arith.extui %0 : i1 to i32
    %c0_i32_0 = arith.constant 0 : i32
    %2 = arith.cmpi ne, %1, %c0_i32_0 : i32
    scf.if %2 {
      %cst_10 = arith.constant 0.000000e+00 : f32
      %12 = vector.broadcast %cst_10 : f32 to vector<16x32xf32>
      %c0_11 = arith.constant 0 : index
      %c0_12 = arith.constant 0 : index
      %13 = vector.load %arg10[%c0_11, %c0_12] : memref<16x32xf32, #tpu.memory_space<vmem>>, vector<16x32xf32>
      tpu.vector_store %arg10[%c0_11, %c0_12], %12 {strides = array<i32>} : memref<16x32xf32, #tpu.memory_space<vmem>>, vector<16x32xf32>,
    } else {
    }
    %c0 = arith.constant 0 : index
    %c0_1 = arith.constant 0 : index
    %3 = vector.load %arg10[%c0, %c0_1] : memref<16x32xf32, #tpu.memory_space<vmem>>, vector<16x32xf32>
    %c0_2 = arith.constant 0 : index
    %c0_3 = arith.constant 0 : index
    %4 = vector.load %arg3[%c0_2, %c0_3] : memref<16x64xbf16, #tpu.memory_space<vmem>>, vector<16x64xbf16>
    %c0_4 = arith.constant 0 : index
    %c0_5 = arith.constant 0 : index
    %5 = vector.load %arg4[%c0_4, %c0_5] : memref<64x32xbf16, #tpu.memory_space<vmem>>, vector<64x32xbf16>
    %cst = arith.constant dense<0.000000e+00> : vector<16x32xf32>
    %6 = tpu.matmul %4, %5, %cst {dimension_numbers = #tpu.dot_dimension_numbers<[1], [0], [0], [1], [0, 0, 1, 1], [], []>} : vector<16x64xbf16>, vector<64x32xbf16>, vector<16x32xf32> -> vector<16x32xf32>
    %7 = arith.addf %3, %6 : vector<16x32xf32>
    %c0_6 = arith.constant 0 : index
    %c0_7 = arith.constant 0 : index
    %8 = vector.load %arg10[%c0_6, %c0_7] : memref<16x32xf32, #tpu.memory_space<vmem>>, vector<16x32xf32>
    tpu.vector_store %arg10[%c0_6, %c0_7], %7 {strides = array<i32>} : memref<16x32xf32, #tpu.memory_space<vmem>>, vector<16x32xf32>,
    %c0_i32_8 = arith.constant 0 : i32
    %9 = arith.cmpi eq, %arg2, %c0_i32_8 : i32
    %10 = arith.extui %9 : i1 to i32
    %c0_i32_9 = arith.constant 0 : i32
    %11 = arith.cmpi ne, %10, %c0_i32_9 : i32
    scf.if %11 {
      %c0_10 = arith.constant 0 : index
      %c0_11 = arith.constant 0 : index
      %12 = vector.load %arg10[%c0_10, %c0_11] : memref<16x32xf32, #tpu.memory_space<vmem>>, vector<16x32xf32>
      %c0_12 = arith.constant 0 : index
      %c0_13 = arith.constant 0 : index
      %13 = vector.load %arg5[%c0_12, %c0_13] : memref<1x32xf32, #tpu.memory_space<vmem>>, vector<1x32xf32>
      %14 = vector.broadcast %13 : vector<1x32xf32> to vector<16x32xf32>
      %15 = arith.addf %12, %14 : vector<16x32xf32>
      %c0_14 = arith.constant 0 : index
      %c0_15 = arith.constant 0 : index
      %16 = vector.load %arg6[%c0_14, %c0_15] : memref<16x32xbf16, #tpu.memory_space<vmem>>, vector<16x32xbf16>
      %17 = arith.extf %16 : vector<16x32xbf16> to vector<16x32xf32>
      %18 = arith.addf %15, %17 : vector<16x32xf32>
      %cst_16 = arith.constant dense<0.000000e+00> : vector<16xf32>
      %19 = vector.multi_reduction <add>, %18, %cst_16 [1] : vector<16x32xf32> to vector<16xf32>
      %20 = vector.shape_cast %19 : vector<16xf32> to vector<16x1xf32>
      %cst_17 = arith.constant 3.200000e+01 : f32
      %21 = vector.broadcast %cst_17 : f32 to vector<16x1xf32>
      %22 = arith.divf %20, %21 : vector<16x1xf32>
      %23 = vector.broadcast %22 : vector<16x1xf32> to vector<16x32xf32>
      %24 = arith.subf %18, %23 : vector<16x32xf32>
      %25 = vector.broadcast %22 : vector<16x1xf32> to vector<16x32xf32>
      %26 = arith.subf %18, %25 : vector<16x32xf32>
      %27 = arith.mulf %24, %26 : vector<16x32xf32>
      %cst_18 = arith.constant dense<0.000000e+00> : vector<16xf32>
      %28 = vector.multi_reduction <add>, %27, %cst_18 [1] : vector<16x32xf32> to vector<16xf32>
      %29 = vector.shape_cast %28 : vector<16xf32> to vector<16x1xf32>
      %cst_19 = arith.constant 3.200000e+01 : f32
      %30 = vector.broadcast %cst_19 : f32 to vector<16x1xf32>
      %31 = arith.divf %29, %30 : vector<16x1xf32>
      %32 = vector.broadcast %22 : vector<16x1xf32> to vector<16x32xf32>
      %33 = arith.subf %18, %32 : vector<16x32xf32>
      %cst_20 = arith.constant 9.99999974E-6 : f32
      %34 = vector.broadcast %cst_20 : f32 to vector<16x1xf32>
      %35 = arith.addf %31, %34 : vector<16x1xf32>
      %36 = math.rsqrt %35 : vector<16x1xf32>
      %37 = vector.broadcast %36 : vector<16x1xf32> to vector<16x32xf32>
      %38 = arith.mulf %33, %37 : vector<16x32xf32>
      %c0_21 = arith.constant 0 : index
      %c0_22 = arith.constant 0 : index
      %39 = vector.load %arg7[%c0_21, %c0_22] : memref<1x32xf32, #tpu.memory_space<vmem>>, vector<1x32xf32>
      %40 = vector.broadcast %39 : vector<1x32xf32> to vector<16x32xf32>
      %41 = arith.mulf %38, %40 : vector<16x32xf32>
      %c0_23 = arith.constant 0 : index
      %c0_24 = arith.constant 0 : index
      %42 = vector.load %arg8[%c0_23, %c0_24] : memref<1x32xf32, #tpu.memory_space<vmem>>, vector<1x32xf32>
      %43 = vector.broadcast %42 : vector<1x32xf32> to vector<16x32xf32>
      %44 = arith.addf %41, %43 : vector<16x32xf32>
      %45 = arith.truncf %44 : vector<16x32xf32> to vector<16x32xbf16>
      %c0_25 = arith.constant 0 : index
      %c0_26 = arith.constant 0 : index
      %46 = vector.load %arg9[%c0_25, %c0_26] : memref<16x32xbf16, #tpu.memory_space<vmem>>, vector<16x32xbf16>
      tpu.vector_store %arg9[%c0_25, %c0_26], %45 {strides = array<i32>} : memref<16x32xbf16, #tpu.memory_space<vmem>>, vector<16x32xbf16>,
    } else {
    }
    return
  }
  func.func @transform_0(%arg0: i32, %arg1: i32, %arg2: i32) -> (i32, i32) {
    %c0_i32 = arith.constant 0 : i32
    return %arg0, %arg2 : i32, i32
  }
  func.func @transform_1(%arg0: i32, %arg1: i32, %arg2: i32) -> (i32, i32) {
    %c0_i32 = arith.constant 0 : i32
    return %arg2, %arg1 : i32, i32
  }
  func.func @transform_2(%arg0: i32, %arg1: i32, %arg2: i32) -> (i32, i32) {
    %c0_i32 = arith.constant 0 : i32
    %c0_i32_0 = arith.constant 0 : i32
    return %c0_i32, %arg1 : i32, i32
  }
  func.func @transform_3(%arg0: i32, %arg1: i32, %arg2: i32) -> (i32, i32) {
    %c0_i32 = arith.constant 0 : i32
    return %arg0, %arg1 : i32, i32
  }
  func.func @transform_4(%arg0: i32, %arg1: i32, %arg2: i32) -> (i32, i32) {
    %c0_i32 = arith.constant 0 : i32
    %c0_i32_0 = arith.constant 0 : i32
    return %c0_i32, %arg1 : i32, i32
  }
  func.func @transform_5(%arg0: i32, %arg1: i32, %arg2: i32) -> (i32, i32) {
    %c0_i32 = arith.constant 0 : i32
    %c0_i32_0 = arith.constant 0 : i32
    return %c0_i32, %arg1 : i32, i32
  }
  func.func @transform_6(%arg0: i32, %arg1: i32, %arg2: i32) -> (i32, i32) {
    %c0_i32 = arith.constant 0 : i32
    return %arg0, %arg1 : i32, i32
  }
}

module attributes {stable_mosaic.version = 11 : i64} {
  func.func @_self_attn_kernel(%arg0: i32, %arg1: memref<1x8x32xbf16, #tpu.memory_space<vmem>>, %arg2: memref<32x96xbf16, #tpu.memory_space<vmem>>, %arg3: memref<1x8x32xbf16, #tpu.memory_space<vmem>>) attributes {dimension_semantics = [#tpu.dimension_semantics<parallel>], iteration_bounds = array<i64: 2>, scalar_prefetch = 0 : i64, scratch_operands = 0 : i64, tpu.core_type = #tpu.core_type<tc>, window_params = [{transform_indices = @transform_0, window_bounds = array<i64: 1, 8, 32>}, {pipeline_mode = #tpu.pipeline_mode<synchronous>, transform_indices = @transform_1, window_bounds = array<i64: 32, 96>}, {transform_indices = @transform_2, window_bounds = array<i64: 1, 8, 32>}]} {
    %c0 = arith.constant 0 : index
    %c0_0 = arith.constant 0 : index
    %c0_1 = arith.constant 0 : index
    %0 = vector.load %arg1[%c0, %c0_0, %c0_1] : memref<1x8x32xbf16, #tpu.memory_space<vmem>>, vector<1x8x32xbf16>
    %1 = vector.shape_cast %0 : vector<1x8x32xbf16> to vector<8x32xbf16>
    %c0_2 = arith.constant 0 : index
    %c0_3 = arith.constant 0 : index
    %2 = vector.load %arg2[%c0_2, %c0_3] : memref<32x96xbf16, #tpu.memory_space<vmem>>, vector<32x96xbf16>
    %cst = arith.constant dense<0.000000e+00> : vector<8x96xf32>
    %3 = tpu.matmul %1, %2, %cst {dimension_numbers = #tpu.dot_dimension_numbers<[1], [0], [0], [1], [0, 0, 1, 1], [], []>} : vector<8x32xbf16>, vector<32x96xbf16>, vector<8x96xf32> -> vector<8x96xf32>
    %4 = arith.truncf %3 : vector<8x96xf32> to vector<8x96xbf16>
    %5 = vector.extract_strided_slice %4 {offsets = [0, 0], sizes = [8, 16], strides = [1, 1]} : vector<8x96xbf16> to vector<8x16xbf16>
    %6 = vector.extract_strided_slice %4 {offsets = [0, 32], sizes = [8, 16], strides = [1, 1]} : vector<8x96xbf16> to vector<8x16xbf16>
    %7 = vector.extract_strided_slice %4 {offsets = [0, 64], sizes = [8, 16], strides = [1, 1]} : vector<8x96xbf16> to vector<8x16xbf16>
    %cst_4 = arith.constant dense<0.000000e+00> : vector<8x8xf32>
    %8 = tpu.matmul %5, %6, %cst_4 {dimension_numbers = #tpu.dot_dimension_numbers<[1], [1], [0], [0], [0, 0, 1, 0], [], []>} : vector<8x16xbf16>, vector<8x16xbf16>, vector<8x8xf32> -> vector<8x8xf32>
    %cst_5 = arith.constant 2.500000e-01 : f32
    %9 = vector.broadcast %cst_5 : f32 to vector<8x8xf32>
    %10 = arith.mulf %8, %9 : vector<8x8xf32>
    %11 = tpu.iota {dimensions = array<i32: 0>} : vector<8x8xi32>
    %12 = tpu.iota {dimensions = array<i32: 1>} : vector<8x8xi32>
    %13 = arith.cmpi sgt, %12, %11 : vector<8x8xi32>
    %cst_6 = arith.constant 0xFF800000 : f32
    %14 = vector.broadcast %cst_6 : f32 to vector<8x8xf32>
    %15 = arith.select %13, %14, %10 : vector<8x8xi1>, vector<8x8xf32>
    %cst_7 = arith.constant dense<0xFF800000> : vector<8xf32>
    %16 = vector.multi_reduction <maximumf>, %15, %cst_7 [1] : vector<8x8xf32> to vector<8xf32>
    %17 = vector.shape_cast %16 : vector<8xf32> to vector<8x1xf32>
    %18 = vector.broadcast %17 : vector<8x1xf32> to vector<8x8xf32>
    %19 = arith.subf %15, %18 : vector<8x8xf32>
    %20 = math.exp %19 : vector<8x8xf32>
    %cst_8 = arith.constant dense<0.000000e+00> : vector<8xf32>
    %21 = vector.multi_reduction <add>, %20, %cst_8 [1] : vector<8x8xf32> to vector<8xf32>
    %22 = vector.shape_cast %21 : vector<8xf32> to vector<8x1xf32>
    %23 = vector.broadcast %22 : vector<8x1xf32> to vector<8x8xf32>
    %24 = arith.divf %20, %23 : vector<8x8xf32>
    %25 = arith.truncf %24 : vector<8x8xf32> to vector<8x8xbf16>
    %cst_9 = arith.constant dense<0.000000e+00> : vector<8x16xf32>
    %26 = tpu.matmul %25, %7, %cst_9 {dimension_numbers = #tpu.dot_dimension_numbers<[1], [0], [0], [1], [0, 0, 1, 1], [], []>} : vector<8x8xbf16>, vector<8x16xbf16>, vector<8x16xf32> -> vector<8x16xf32>
    %27 = arith.truncf %26 : vector<8x16xf32> to vector<8x16xbf16>
    %c0_10 = arith.constant 0 : index
    %c0_11 = arith.constant 0 : index
    %c0_12 = arith.constant 0 : index
    %28 = vector.load %arg3[%c0_10, %c0_11, %c0_12] : memref<1x8x32xbf16, #tpu.memory_space<vmem>>, vector<1x8x16xbf16>
    %29 = vector.shape_cast %28 : vector<1x8x16xbf16> to vector<8x16xbf16>
    %30 = vector.shape_cast %27 : vector<8x16xbf16> to vector<1x8x16xbf16>
    tpu.vector_store %arg3[%c0_10, %c0_11, %c0_12], %30 {strides = array<i32>} : memref<1x8x32xbf16, #tpu.memory_space<vmem>>, vector<1x8x16xbf16>,
    %31 = vector.extract_strided_slice %4 {offsets = [0, 16], sizes = [8, 16], strides = [1, 1]} : vector<8x96xbf16> to vector<8x16xbf16>
    %32 = vector.extract_strided_slice %4 {offsets = [0, 48], sizes = [8, 16], strides = [1, 1]} : vector<8x96xbf16> to vector<8x16xbf16>
    %33 = vector.extract_strided_slice %4 {offsets = [0, 80], sizes = [8, 16], strides = [1, 1]} : vector<8x96xbf16> to vector<8x16xbf16>
    %cst_13 = arith.constant dense<0.000000e+00> : vector<8x8xf32>
    %34 = tpu.matmul %31, %32, %cst_13 {dimension_numbers = #tpu.dot_dimension_numbers<[1], [1], [0], [0], [0, 0, 1, 0], [], []>} : vector<8x16xbf16>, vector<8x16xbf16>, vector<8x8xf32> -> vector<8x8xf32>
    %cst_14 = arith.constant 2.500000e-01 : f32
    %35 = vector.broadcast %cst_14 : f32 to vector<8x8xf32>
    %36 = arith.mulf %34, %35 : vector<8x8xf32>
    %37 = tpu.iota {dimensions = array<i32: 0>} : vector<8x8xi32>
    %38 = tpu.iota {dimensions = array<i32: 1>} : vector<8x8xi32>
    %39 = arith.cmpi sgt, %38, %37 : vector<8x8xi32>
    %cst_15 = arith.constant 0xFF800000 : f32
    %40 = vector.broadcast %cst_15 : f32 to vector<8x8xf32>
    %41 = arith.select %39, %40, %36 : vector<8x8xi1>, vector<8x8xf32>
    %cst_16 = arith.constant dense<0xFF800000> : vector<8xf32>
    %42 = vector.multi_reduction <maximumf>, %41, %cst_16 [1] : vector<8x8xf32> to vector<8xf32>
    %43 = vector.shape_cast %42 : vector<8xf32> to vector<8x1xf32>
    %44 = vector.broadcast %43 : vector<8x1xf32> to vector<8x8xf32>
    %45 = arith.subf %41, %44 : vector<8x8xf32>
    %46 = math.exp %45 : vector<8x8xf32>
    %cst_17 = arith.constant dense<0.000000e+00> : vector<8xf32>
    %47 = vector.multi_reduction <add>, %46, %cst_17 [1] : vector<8x8xf32> to vector<8xf32>
    %48 = vector.shape_cast %47 : vector<8xf32> to vector<8x1xf32>
    %49 = vector.broadcast %48 : vector<8x1xf32> to vector<8x8xf32>
    %50 = arith.divf %46, %49 : vector<8x8xf32>
    %51 = arith.truncf %50 : vector<8x8xf32> to vector<8x8xbf16>
    %cst_18 = arith.constant dense<0.000000e+00> : vector<8x16xf32>
    %52 = tpu.matmul %51, %33, %cst_18 {dimension_numbers = #tpu.dot_dimension_numbers<[1], [0], [0], [1], [0, 0, 1, 1], [], []>} : vector<8x8xbf16>, vector<8x16xbf16>, vector<8x16xf32> -> vector<8x16xf32>
    %53 = arith.truncf %52 : vector<8x16xf32> to vector<8x16xbf16>
    %c0_19 = arith.constant 0 : index
    %c0_20 = arith.constant 0 : index
    %c16 = arith.constant 16 : index
    %54 = vector.load %arg3[%c0_19, %c0_20, %c16] : memref<1x8x32xbf16, #tpu.memory_space<vmem>>, vector<1x8x16xbf16>
    %55 = vector.shape_cast %54 : vector<1x8x16xbf16> to vector<8x16xbf16>
    %56 = vector.shape_cast %53 : vector<8x16xbf16> to vector<1x8x16xbf16>
    tpu.vector_store %arg3[%c0_19, %c0_20, %c16], %56 {strides = array<i32>} : memref<1x8x32xbf16, #tpu.memory_space<vmem>>, vector<1x8x16xbf16>,
    return
  }
  func.func @transform_0(%arg0: i32) -> (i32, i32, i32) {
    %c0_i32 = arith.constant 0 : i32
    %c0_i32_0 = arith.constant 0 : i32
    %c0_i32_1 = arith.constant 0 : i32
    return %arg0, %c0_i32, %c0_i32_0 : i32, i32, i32
  }
  func.func @transform_1(%arg0: i32) -> (i32, i32) {
    %c0_i32 = arith.constant 0 : i32
    %c0_i32_0 = arith.constant 0 : i32
    %c0_i32_1 = arith.constant 0 : i32
    return %c0_i32, %c0_i32_0 : i32, i32
  }
  func.func @transform_2(%arg0: i32) -> (i32, i32, i32) {
    %c0_i32 = arith.constant 0 : i32
    %c0_i32_0 = arith.constant 0 : i32
    %c0_i32_1 = arith.constant 0 : i32
    return %arg0, %c0_i32, %c0_i32_0 : i32, i32, i32
  }
}

module attributes {stable_mosaic.version = 11 : i64} {
  func.func @_cross_attn_kernel(%arg0: i32, %arg1: memref<1x8x32xbf16, #tpu.memory_space<vmem>>, %arg2: memref<1x8x32xbf16, #tpu.memory_space<vmem>>, %arg3: memref<32x96xbf16, #tpu.memory_space<vmem>>, %arg4: memref<1x8x32xbf16, #tpu.memory_space<vmem>>) attributes {dimension_semantics = [#tpu.dimension_semantics<parallel>], iteration_bounds = array<i64: 2>, scalar_prefetch = 0 : i64, scratch_operands = 0 : i64, tpu.core_type = #tpu.core_type<tc>, window_params = [{transform_indices = @transform_0, window_bounds = array<i64: 1, 8, 32>}, {transform_indices = @transform_1, window_bounds = array<i64: 1, 8, 32>}, {pipeline_mode = #tpu.pipeline_mode<synchronous>, transform_indices = @transform_2, window_bounds = array<i64: 32, 96>}, {transform_indices = @transform_3, window_bounds = array<i64: 1, 8, 32>}]} {
    %c0 = arith.constant 0 : index
    %c0_0 = arith.constant 0 : index
    %c0_1 = arith.constant 0 : index
    %0 = vector.load %arg1[%c0, %c0_0, %c0_1] : memref<1x8x32xbf16, #tpu.memory_space<vmem>>, vector<1x8x32xbf16>
    %1 = vector.shape_cast %0 : vector<1x8x32xbf16> to vector<8x32xbf16>
    %c0_2 = arith.constant 0 : index
    %c0_3 = arith.constant 0 : index
    %2 = vector.load %arg3[%c0_2, %c0_3] : memref<32x96xbf16, #tpu.memory_space<vmem>>, vector<32x32xbf16>
    %cst = arith.constant dense<0.000000e+00> : vector<8x32xf32>
    %3 = tpu.matmul %1, %2, %cst {dimension_numbers = #tpu.dot_dimension_numbers<[1], [0], [0], [1], [0, 0, 1, 1], [], []>} : vector<8x32xbf16>, vector<32x32xbf16>, vector<8x32xf32> -> vector<8x32xf32>
    %4 = arith.truncf %3 : vector<8x32xf32> to vector<8x32xbf16>
    %c0_4 = arith.constant 0 : index
    %c0_5 = arith.constant 0 : index
    %c0_6 = arith.constant 0 : index
    %5 = vector.load %arg2[%c0_4, %c0_5, %c0_6] : memref<1x8x32xbf16, #tpu.memory_space<vmem>>, vector<1x8x32xbf16>
    %6 = vector.shape_cast %5 : vector<1x8x32xbf16> to vector<8x32xbf16>
    %c0_7 = arith.constant 0 : index
    %c32 = arith.constant 32 : index
    %7 = vector.load %arg3[%c0_7, %c32] : memref<32x96xbf16, #tpu.memory_space<vmem>>, vector<32x64xbf16>
    %cst_8 = arith.constant dense<0.000000e+00> : vector<8x64xf32>
    %8 = tpu.matmul %6, %7, %cst_8 {dimension_numbers = #tpu.dot_dimension_numbers<[1], [0], [0], [1], [0, 0, 1, 1], [], []>} : vector<8x32xbf16>, vector<32x64xbf16>, vector<8x64xf32> -> vector<8x64xf32>
    %9 = arith.truncf %8 : vector<8x64xf32> to vector<8x64xbf16>
    %10 = vector.extract_strided_slice %4 {offsets = [0, 0], sizes = [8, 16], strides = [1, 1]} : vector<8x32xbf16> to vector<8x16xbf16>
    %11 = vector.extract_strided_slice %9 {offsets = [0, 0], sizes = [8, 16], strides = [1, 1]} : vector<8x64xbf16> to vector<8x16xbf16>
    %12 = vector.extract_strided_slice %9 {offsets = [0, 32], sizes = [8, 16], strides = [1, 1]} : vector<8x64xbf16> to vector<8x16xbf16>
    %cst_9 = arith.constant dense<0.000000e+00> : vector<8x8xf32>
    %13 = tpu.matmul %10, %11, %cst_9 {dimension_numbers = #tpu.dot_dimension_numbers<[1], [1], [0], [0], [0, 0, 1, 0], [], []>} : vector<8x16xbf16>, vector<8x16xbf16>, vector<8x8xf32> -> vector<8x8xf32>
    %cst_10 = arith.constant 2.500000e-01 : f32
    %14 = vector.broadcast %cst_10 : f32 to vector<8x8xf32>
    %15 = arith.mulf %13, %14 : vector<8x8xf32>
    %cst_11 = arith.constant dense<0xFF800000> : vector<8xf32>
    %16 = vector.multi_reduction <maximumf>, %15, %cst_11 [1] : vector<8x8xf32> to vector<8xf32>
    %17 = vector.shape_cast %16 : vector<8xf32> to vector<8x1xf32>
    %18 = vector.broadcast %17 : vector<8x1xf32> to vector<8x8xf32>
    %19 = arith.subf %15, %18 : vector<8x8xf32>
    %20 = math.exp %19 : vector<8x8xf32>
    %cst_12 = arith.constant dense<0.000000e+00> : vector<8xf32>
    %21 = vector.multi_reduction <add>, %20, %cst_12 [1] : vector<8x8xf32> to vector<8xf32>
    %22 = vector.shape_cast %21 : vector<8xf32> to vector<8x1xf32>
    %23 = vector.broadcast %22 : vector<8x1xf32> to vector<8x8xf32>
    %24 = arith.divf %20, %23 : vector<8x8xf32>
    %25 = arith.truncf %24 : vector<8x8xf32> to vector<8x8xbf16>
    %cst_13 = arith.constant dense<0.000000e+00> : vector<8x16xf32>
    %26 = tpu.matmul %25, %12, %cst_13 {dimension_numbers = #tpu.dot_dimension_numbers<[1], [0], [0], [1], [0, 0, 1, 1], [], []>} : vector<8x8xbf16>, vector<8x16xbf16>, vector<8x16xf32> -> vector<8x16xf32>
    %27 = arith.truncf %26 : vector<8x16xf32> to vector<8x16xbf16>
    %c0_14 = arith.constant 0 : index
    %c0_15 = arith.constant 0 : index
    %c0_16 = arith.constant 0 : index
    %28 = vector.load %arg4[%c0_14, %c0_15, %c0_16] : memref<1x8x32xbf16, #tpu.memory_space<vmem>>, vector<1x8x16xbf16>
    %29 = vector.shape_cast %28 : vector<1x8x16xbf16> to vector<8x16xbf16>
    %30 = vector.shape_cast %27 : vector<8x16xbf16> to vector<1x8x16xbf16>
    tpu.vector_store %arg4[%c0_14, %c0_15, %c0_16], %30 {strides = array<i32>} : memref<1x8x32xbf16, #tpu.memory_space<vmem>>, vector<1x8x16xbf16>,
    %31 = vector.extract_strided_slice %4 {offsets = [0, 16], sizes = [8, 16], strides = [1, 1]} : vector<8x32xbf16> to vector<8x16xbf16>
    %32 = vector.extract_strided_slice %9 {offsets = [0, 16], sizes = [8, 16], strides = [1, 1]} : vector<8x64xbf16> to vector<8x16xbf16>
    %33 = vector.extract_strided_slice %9 {offsets = [0, 48], sizes = [8, 16], strides = [1, 1]} : vector<8x64xbf16> to vector<8x16xbf16>
    %cst_17 = arith.constant dense<0.000000e+00> : vector<8x8xf32>
    %34 = tpu.matmul %31, %32, %cst_17 {dimension_numbers = #tpu.dot_dimension_numbers<[1], [1], [0], [0], [0, 0, 1, 0], [], []>} : vector<8x16xbf16>, vector<8x16xbf16>, vector<8x8xf32> -> vector<8x8xf32>
    %cst_18 = arith.constant 2.500000e-01 : f32
    %35 = vector.broadcast %cst_18 : f32 to vector<8x8xf32>
    %36 = arith.mulf %34, %35 : vector<8x8xf32>
    %cst_19 = arith.constant dense<0xFF800000> : vector<8xf32>
    %37 = vector.multi_reduction <maximumf>, %36, %cst_19 [1] : vector<8x8xf32> to vector<8xf32>
    %38 = vector.shape_cast %37 : vector<8xf32> to vector<8x1xf32>
    %39 = vector.broadcast %38 : vector<8x1xf32> to vector<8x8xf32>
    %40 = arith.subf %36, %39 : vector<8x8xf32>
    %41 = math.exp %40 : vector<8x8xf32>
    %cst_20 = arith.constant dense<0.000000e+00> : vector<8xf32>
    %42 = vector.multi_reduction <add>, %41, %cst_20 [1] : vector<8x8xf32> to vector<8xf32>
    %43 = vector.shape_cast %42 : vector<8xf32> to vector<8x1xf32>
    %44 = vector.broadcast %43 : vector<8x1xf32> to vector<8x8xf32>
    %45 = arith.divf %41, %44 : vector<8x8xf32>
    %46 = arith.truncf %45 : vector<8x8xf32> to vector<8x8xbf16>
    %cst_21 = arith.constant dense<0.000000e+00> : vector<8x16xf32>
    %47 = tpu.matmul %46, %33, %cst_21 {dimension_numbers = #tpu.dot_dimension_numbers<[1], [0], [0], [1], [0, 0, 1, 1], [], []>} : vector<8x8xbf16>, vector<8x16xbf16>, vector<8x16xf32> -> vector<8x16xf32>
    %48 = arith.truncf %47 : vector<8x16xf32> to vector<8x16xbf16>
    %c0_22 = arith.constant 0 : index
    %c0_23 = arith.constant 0 : index
    %c16 = arith.constant 16 : index
    %49 = vector.load %arg4[%c0_22, %c0_23, %c16] : memref<1x8x32xbf16, #tpu.memory_space<vmem>>, vector<1x8x16xbf16>
    %50 = vector.shape_cast %49 : vector<1x8x16xbf16> to vector<8x16xbf16>
    %51 = vector.shape_cast %48 : vector<8x16xbf16> to vector<1x8x16xbf16>
    tpu.vector_store %arg4[%c0_22, %c0_23, %c16], %51 {strides = array<i32>} : memref<1x8x32xbf16, #tpu.memory_space<vmem>>, vector<1x8x16xbf16>,
    return
  }
  func.func @transform_0(%arg0: i32) -> (i32, i32, i32) {
    %c0_i32 = arith.constant 0 : i32
    %c0_i32_0 = arith.constant 0 : i32
    %c0_i32_1 = arith.constant 0 : i32
    return %arg0, %c0_i32, %c0_i32_0 : i32, i32, i32
  }
  func.func @transform_1(%arg0: i32) -> (i32, i32, i32) {
    %c0_i32 = arith.constant 0 : i32
    %c0_i32_0 = arith.constant 0 : i32
    %c0_i32_1 = arith.constant 0 : i32
    return %arg0, %c0_i32, %c0_i32_0 : i32, i32, i32
  }
  func.func @transform_2(%arg0: i32) -> (i32, i32) {
    %c0_i32 = arith.constant 0 : i32
    %c0_i32_0 = arith.constant 0 : i32
    %c0_i32_1 = arith.constant 0 : i32
    return %c0_i32, %c0_i32_0 : i32, i32
  }
  func.func @transform_3(%arg0: i32) -> (i32, i32, i32) {
    %c0_i32 = arith.constant 0 : i32
    %c0_i32_0 = arith.constant 0 : i32
    %c0_i32_1 = arith.constant 0 : i32
    return %arg0, %c0_i32, %c0_i32_0 : i32, i32, i32
  }
}

module attributes {stable_mosaic.version = 11 : i64} {
  func.func @_linear_kernel(%arg0: i32, %arg1: i32, %arg2: i32, %arg3: memref<16x32xbf16, #tpu.memory_space<vmem>>, %arg4: memref<32x16xbf16, #tpu.memory_space<vmem>>, %arg5: memref<1x16xf32, #tpu.memory_space<vmem>>, %arg6: memref<16x16xf32, #tpu.memory_space<vmem>>, %arg7: memref<16x16xf32, #tpu.memory_space<vmem>>) attributes {dimension_semantics = [#tpu.dimension_semantics<parallel>, #tpu.dimension_semantics<parallel>, #tpu.dimension_semantics<arbitrary>], iteration_bounds = array<i64: 1, 1, 1>, scalar_prefetch = 0 : i64, scratch_operands = 1 : i64, tpu.core_type = #tpu.core_type<tc>, window_params = [{transform_indices = @transform_0, window_bounds = array<i64: 16, 32>}, {transform_indices = @transform_1, window_bounds = array<i64: 32, 16>}, {transform_indices = @transform_2, window_bounds = array<i64: 1, 16>}, {transform_indices = @transform_3, window_bounds = array<i64: 16, 16>}]} {
    %c0_i32 = arith.constant 0 : i32
    %0 = arith.cmpi eq, %arg2, %c0_i32 : i32
    %1 = arith.extui %0 : i1 to i32
    %c0_i32_0 = arith.constant 0 : i32
    %2 = arith.cmpi ne, %1, %c0_i32_0 : i32
    scf.if %2 {
      %cst_10 = arith.constant 0.000000e+00 : f32
      %12 = vector.broadcast %cst_10 : f32 to vector<16x16xf32>
      %c0_11 = arith.constant 0 : index
      %c0_12 = arith.constant 0 : index
      %13 = vector.load %arg7[%c0_11, %c0_12] : memref<16x16xf32, #tpu.memory_space<vmem>>, vector<16x16xf32>
      tpu.vector_store %arg7[%c0_11, %c0_12], %12 {strides = array<i32>} : memref<16x16xf32, #tpu.memory_space<vmem>>, vector<16x16xf32>,
    } else {
    }
    %c0 = arith.constant 0 : index
    %c0_1 = arith.constant 0 : index
    %3 = vector.load %arg7[%c0, %c0_1] : memref<16x16xf32, #tpu.memory_space<vmem>>, vector<16x16xf32>
    %c0_2 = arith.constant 0 : index
    %c0_3 = arith.constant 0 : index
    %4 = vector.load %arg3[%c0_2, %c0_3] : memref<16x32xbf16, #tpu.memory_space<vmem>>, vector<16x32xbf16>
    %c0_4 = arith.constant 0 : index
    %c0_5 = arith.constant 0 : index
    %5 = vector.load %arg4[%c0_4, %c0_5] : memref<32x16xbf16, #tpu.memory_space<vmem>>, vector<32x16xbf16>
    %cst = arith.constant dense<0.000000e+00> : vector<16x16xf32>
    %6 = tpu.matmul %4, %5, %cst {dimension_numbers = #tpu.dot_dimension_numbers<[1], [0], [0], [1], [0, 0, 1, 1], [], []>} : vector<16x32xbf16>, vector<32x16xbf16>, vector<16x16xf32> -> vector<16x16xf32>
    %7 = arith.addf %3, %6 : vector<16x16xf32>
    %c0_6 = arith.constant 0 : index
    %c0_7 = arith.constant 0 : index
    %8 = vector.load %arg7[%c0_6, %c0_7] : memref<16x16xf32, #tpu.memory_space<vmem>>, vector<16x16xf32>
    tpu.vector_store %arg7[%c0_6, %c0_7], %7 {strides = array<i32>} : memref<16x16xf32, #tpu.memory_space<vmem>>, vector<16x16xf32>,
    %c0_i32_8 = arith.constant 0 : i32
    %9 = arith.cmpi eq, %arg2, %c0_i32_8 : i32
    %10 = arith.extui %9 : i1 to i32
    %c0_i32_9 = arith.constant 0 : i32
    %11 = arith.cmpi ne, %10, %c0_i32_9 : i32
    scf.if %11 {
      %c0_10 = arith.constant 0 : index
      %c0_11 = arith.constant 0 : index
      %12 = vector.load %arg7[%c0_10, %c0_11] : memref<16x16xf32, #tpu.memory_space<vmem>>, vector<16x16xf32>
      %c0_12 = arith.constant 0 : index
      %c0_13 = arith.constant 0 : index
      %13 = vector.load %arg5[%c0_12, %c0_13] : memref<1x16xf32, #tpu.memory_space<vmem>>, vector<1x16xf32>
      %14 = vector.broadcast %13 : vector<1x16xf32> to vector<16x16xf32>
      %15 = arith.addf %12, %14 : vector<16x16xf32>
      %c0_14 = arith.constant 0 : index
      %c0_15 = arith.constant 0 : index
      %16 = vector.load %arg6[%c0_14, %c0_15] : memref<16x16xf32, #tpu.memory_space<vmem>>, vector<16x16xf32>
      tpu.vector_store %arg6[%c0_14, %c0_15], %15 {strides = array<i32>} : memref<16x16xf32, #tpu.memory_space<vmem>>, vector<16x16xf32>,
    } else {
    }
    return
  }
  func.func @transform_0(%arg0: i32, %arg1: i32, %arg2: i32) -> (i32, i32) {
    %c0_i32 = arith.constant 0 : i32
    return %arg0, %arg2 : i32, i32
  }
  func.func @transform_1(%arg0: i32, %arg1: i32, %arg2: i32) -> (i32, i32) {
    %c0_i32 = arith.constant 0 : i32
    return %arg2, %arg1 : i32, i32
  }
  func.func @transform_2(%arg0: i32, %arg1: i32, %arg2: i32) -> (i32, i32) {
    %c0_i32 = arith.constant 0 : i32
    %c0_i32_0 = arith.constant 0 : i32
    return %c0_i32, %arg1 : i32, i32
  }
  func.func @transform_3(%arg0: i32, %arg1: i32, %arg2: i32) -> (i32, i32) {
    %c0_i32 = arith.constant 0 : i32
    return %arg0, %arg1 : i32, i32
  }
}

</mosaic_0001>

<llo_original>
// kernel: transformer_forward.22
$region0: #{transformer_forward.22}
  #allocation0 [shape = 'u32[]', space=smem, size = 0x4, offset = 0x4, fixed_abs, tag = 'smem constant byte address 0x4 - core index']
  #allocation1 [shape = 'u32[144,128]{1,0:T(1,128)}', space=vmem, size = 0x12000, scoped, tag = 'internal scratch']
  #allocation2 [shape = 'f32[16,32]{1,0:T(8,128)}', space=vmem, size = 0x2000, scoped, tag = 'scratch operand']
  %s0 = inlined_call_operand.vmem [shape: bf16[16,32], index: 0, kind: input, shape index: {}]
  %s1 = inlined_call_operand.vmem [shape: bf16[32,32], index: 1, kind: input, shape index: {}]
  %s2 = inlined_call_operand.vmem [shape: f32[1,32], index: 2, kind: input, shape index: {}]
  %s3 = inlined_call_operand.vmem [shape: bf16[16,32], index: 3, kind: input, shape index: {}]
  %s4 = inlined_call_operand.vmem [shape: f32[1,32], index: 4, kind: input, shape index: {}]
  %s5 = inlined_call_operand.vmem [shape: f32[1,32], index: 5, kind: input, shape index: {}]
  %s6 = inlined_call_operand.vmem [shape: bf16[16,32], index: 6, kind: output, shape index: {}]
  %s7 = sld [smem:[#allocation0]]
  $region42: #{transformer_forward.22} parent=0
    _
  %s9 = ssub.s32 1, %s7
  %s10 = scalar_select 0, %s9, %s7
  // Predicated region
  $region2: #{transformer_forward.22} parent=0 // pred_check
    _
  $region3: #{transformer_forward.22} parent=0 // pred_check_branch
    %12 = sbr.rel (0) target = $region5
  $region4: #{transformer_forward.22} parent=0 // pred_region
    _
  $region5: #{transformer_forward.22} parent=0 // pred_fallthru
    _
  // Predicated region
  $region6: #{transformer_forward.22} parent=0 // pred_check
    _
  $region7: #{transformer_forward.22} parent=0 // pred_check_branch
    %14 = sbr.rel (0) target = $region9
  $region8: #{transformer_forward.22} parent=0 // pred_region
    _
  $region9: #{transformer_forward.22} parent=0 // pred_fallthru
    _
  // Predicated region
  $region10: #{transformer_forward.22} parent=0 // pred_check
    _
  $region11: #{transformer_forward.22} parent=0 // pred_check_branch
    %16 = sbr.rel (0) target = $region13
  $region12: #{transformer_forward.22} parent=0 // pred_region
    _
  $region13: #{transformer_forward.22} parent=0 // pred_fallthru
    _
  // Predicated region
  $region14: #{transformer_forward.22} parent=0 // pred_check
    _
  $region15: #{transformer_forward.22} parent=0 // pred_check_branch
    %18 = sbr.rel (0) target = $region17
  $region16: #{transformer_forward.22} parent=0 // pred_region
    _
  $region17: #{transformer_forward.22} parent=0 // pred_fallthru
    _
  // Predicated region
  $region18: #{transformer_forward.22} parent=0 // pred_check
    _
  $region19: #{transformer_forward.22} parent=0 // pred_check_branch
    %20 = sbr.rel (0) target = $region21
  $region20: #{transformer_forward.22} parent=0 // pred_region
    _
  $region21: #{transformer_forward.22} parent=0 // pred_fallthru
    _
  // Predicated region
  $region22: #{transformer_forward.22} parent=0 // pred_check
    _
  $region23: #{transformer_forward.22} parent=0 // pred_check_branch
    %22 = sbr.rel (0) target = $region25
  $region24: #{transformer_forward.22} parent=0 // pred_region
    _
  $region25: #{transformer_forward.22} parent=0 // pred_fallthru
    _
  %p24 = scmp.eq.s32.totalorder 0, 0
  // Predicated region
  $region26: #{transformer_forward.22} parent=0 // pred_check
    %p25 = pneg %p24
  $region27: #{transformer_forward.22} parent=0 // pred_check_branch
    %27 = sbr.rel (%p25) target = $region29
  $region28: #{transformer_forward.22} parent=0 // pred_region
    %vm28 = vcmask 261120
    %29 = vst.msk [vmem:[#allocation2] sm:$0xff] %vm28, 0.0
    %30 = vst.msk [vmem:[#allocation2 + $0x8] sm:$0xff] %vm28, 0.0
  $region29: #{transformer_forward.22} parent=0 // pred_fallthru
    _
  %v31 = vld [vmem:[#allocation2] sm:$0xff]
  %v32 = vld [vmem:[#allocation2 + $0x8] sm:$0xff]
  %v33 = vld [vmem:[%s0] sm:$0xf]
  %v34 = vld [vmem:[%s0 + $0x4] sm:$0xf]
  %v35 = vld [vmem:[%s1] sm:$0xf]
  %v36 = vld [vmem:[%s1 + $0x4] sm:$0xf]
  %v37 = vld [vmem:[%s1 + $0x8] sm:$0xf]
  %v38 = vld [vmem:[%s1 + $0xc] sm:$0xf]
  %v41 = vunpack.c.l.b16 %v33
  %v42 = vunpack.c.l.b16 %v34
  %v43 = vpack.c.b16 %v42, %v41
  %v48 = vunpack.c.l.b16 %v35
  %v49 = vunpack.c.l.b16 %v36
  %v50 = vunpack.c.l.b16 %v37
  %v51 = vunpack.c.l.b16 %v38
  %v52 = vpack.c.b16 %v49, %v48
  %v53 = vpack.c.b16 %v51, %v50
  %vm56 = vcmask 261120
  %v58 = vsel %vm56, %v43, 0
  %60 = vmatprep.subr.bf16.mxu0 0
  %61 = vmatpush1.bf16.msra.mxu0 %v52
  %62 = vmatprep.subr.bf16.mxu0 0
  %63 = vmatpush1.bf16.msra.mxu0 %v53
  %64 = vmatprep.subr.bf16.mxu0 0
  %65 = vmatpush1.bf16.msra.mxu0 0
  %66 = vmatprep.subr.bf16.mxu0 0
  %67 = vmatpush1.bf16.msra.mxu0 0
  %68 = vmatprep.subr.bf16.mxu0 0
  %69 = vmatpush1.bf16.msra.mxu0 0
  %70 = vmatprep.subr.bf16.mxu0 0
  %71 = vmatpush1.bf16.msra.mxu0 0
  %72 = vmatprep.subr.bf16.mxu0 0
  %73 = vmatpush1.bf16.msra.mxu0 0
  %74 = vmatprep.subr.bf16.mxu0 0
  %75 = vmatpush1.bf16.msra.mxu0 0
  %76 = vmatprep.subr.bf16.mxu0 0
  %77 = vmatpush1.bf16.msra.mxu0 0
  %78 = vmatprep.subr.bf16.mxu0 0
  %79 = vmatpush1.bf16.msra.mxu0 0
  %80 = vmatprep.subr.bf16.mxu0 0
  %81 = vmatpush1.bf16.msra.mxu0 0
  %82 = vmatprep.subr.bf16.mxu0 0
  %83 = vmatpush1.bf16.msra.mxu0 0
  %84 = vmatprep.subr.bf16.mxu0 0
  %85 = vmatpush1.bf16.msra.mxu0 0
  %86 = vmatprep.subr.bf16.mxu0 0
  %87 = vmatpush1.bf16.msra.mxu0 0
  %88 = vmatprep.subr.bf16.mxu0 0
  %89 = vmatpush1.bf16.msra.mxu0 0
  %90 = vmatprep.subr.bf16.mxu0 0
  %91 = vmatpush1.bf16.msra.mxu0 0
  %92 = vmatprep.mubr.bf16.mxu0 0
  %93 = vmatmul.mubr.bf16.gmra.mrb[0].mxu0 %v58
  %v94 = vpop.f32.mrb[0].mxu0
  %v95 = vadd.f32 0.0, %v94
  %v96 = vpop.f32.mrb[0].mxu0
  %v97 = vpop.f32.mrb[0].mxu0
  %v98 = vadd.f32 0.0, %v97
  %v99 = vpop.f32.mrb[0].mxu0
  %100 = vdwg.mxu0
  %v101 = vadd.f32 %v31, %v95
  %v102 = vadd.f32 %v32, %v98
  %103 = vst.msk [vmem:[#allocation2] sm:$0xff] %vm56, %v101
  %104 = vst.msk [vmem:[#allocation2 + $0x8] sm:$0xff] %vm56, %v102
  // Predicated region
  $region30: #{transformer_forward.22} parent=0 // pred_check
    %p105 = pneg %p24
  $region31: #{transformer_forward.22} parent=0 // pred_check_branch
    %107 = sbr.rel (%p105) target = $region33
  $region32: #{transformer_forward.22} parent=0 // pred_region
    %v108 = vld [vmem:[#allocation2] sm:$0xff]
    %v109 = vld [vmem:[#allocation2 + $0x8] sm:$0xff]
    %v110 = vld [vmem:[%s2] sm:$0x1]
    %v112 = vlaneseq
    %v113 = vshrl.u32 %v112, 7
    %v114 = vsub.s32 0, %v113
    %v115 = vrot.slane %v110, %v114
    %v117 = vadd.f32 %v108, %v115
    %v118 = vadd.f32 %v109, %v115
    %v119 = vld [vmem:[%s3] sm:$0xf]
    %v120 = vld [vmem:[%s3 + $0x4] sm:$0xf]
    %v121 = vunpack.c.l.bf16 %v119
    %v122 = vunpack.c.l.bf16 %v120
    %v123 = vadd.f32 %v117, %v121
    %v124 = vadd.f32 %v118, %v122
    %v125 = vsel %vm56, %v123, 0.0
    %126 = vadd.xlane.f32.xlu0 %v125
    %v127 = vpop.xlane.xlu0 %126
    %v128 = vsel %vm56, %v124, 0.0
    %129 = vadd.xlane.f32.xlu0 %v128
    %v130 = vpop.xlane.xlu0 %129
    %v131 = vrcp.pop 32.0
    %v132 = vmul.f32 %v127, %v131
    %v133 = vmul.f32 %v130, %v131
    %v134 = vsub.f32 %v123, %v132
    %v135 = vsub.f32 %v124, %v133
    %v136 = vmul.f32 %v134, %v134
    %v137 = vmul.f32 %v135, %v135
    %v138 = vsel %vm56, %v136, 0.0
    %139 = vadd.xlane.f32.xlu0 %v138
    %v140 = vpop.xlane.xlu0 %139
    %v141 = vsel %vm56, %v137, 0.0
    %142 = vadd.xlane.f32.xlu0 %v141
    %v143 = vpop.xlane.xlu0 %142
    %v144 = vmul.f32 %v140, %v131
    %v145 = vmul.f32 %v143, %v131
    %v146 = vadd.f32 %v144, 1e-05
    %v147 = vadd.f32 %v145, 1e-05
    %v148 = vrsqrt.pop %v146
    %v149 = vrsqrt.pop %v147
    %v150 = vmul.f32 %v134, %v148
    %v151 = vmul.f32 %v135, %v149
    %v152 = vld [vmem:[%s4] sm:$0x1]
    %v154 = vlaneseq
    %v155 = vshrl.u32 %v154, 7
    %v156 = vsub.s32 0, %v155
    %v157 = vrot.slane %v152, %v156
    %v159 = vmul.f32 %v150, %v157
    %v160 = vmul.f32 %v151, %v157
    %v161 = vld [vmem:[%s5] sm:$0x1]
    %v163 = vlaneseq
    %v164 = vshrl.u32 %v163, 7
    %v165 = vsub.s32 0, %v164
    %v166 = vrot.slane %v161, %v165
    %v168 = vadd.f32 %v159, %v166
    %v169 = vadd.f32 %v160, %v166
    %v170 = vpack.c.bf16 %v169, %v168
    %v172 = vunpack.c.l.b16 %v170
    %v173 = vunpack.c.h.b16 %v170
    %v174 = vpack.c.b16 %v172, %v172
    %v175 = vpack.c.b16 %v173, %v173
    %vm178 = vcmask 257024
    %179 = vst.msk [vmem:[%s6] sm:$0xf] %vm178, %v174
    %180 = vst.msk [vmem:[%s6 + $0x4] sm:$0xf] %vm178, %v175
  $region33: #{transformer_forward.22} parent=0 // pred_fallthru
    _
  // Predicated region
  $region34: #{transformer_forward.22} parent=0 // pred_check
    _
  $region35: #{transformer_forward.22} parent=0 // pred_check_branch
    %182 = sbr.rel (0) target = $region37
  $region36: #{transformer_forward.22} parent=0 // pred_region
    _
  $region37: #{transformer_forward.22} parent=0 // pred_fallthru
    _
  // Predicated region
  $region38: #{transformer_forward.22} parent=0 // pred_check
    _
  $region39: #{transformer_forward.22} parent=0 // pred_check_branch
    %184 = sbr.rel (0) target = $region41
  $region40: #{transformer_forward.22} parent=0 // pred_region
    _
  $region41: #{transformer_forward.22} parent=0 // pred_fallthru
    _

// kernel: transformer_forward.23
$region0: #{transformer_forward.23}
  #allocation0 [shape = 'u32[]', space=smem, size = 0x4, offset = 0x4, fixed_abs, tag = 'smem constant byte address 0x4 - core index']
  #allocation1 [shape = 'u32[144,128]{1,0:T(1,128)}', space=vmem, size = 0x12000, scoped, tag = 'internal scratch']
  #allocation2 [shape = 'f32[16,64]{1,0:T(8,128)}', space=vmem, size = 0x2000, scoped, tag = 'scratch operand']
  %s0 = inlined_call_operand.vmem [shape: bf16[16,32], index: 0, kind: input, shape index: {}]
  %s1 = inlined_call_operand.vmem [shape: bf16[32,64], index: 1, kind: input, shape index: {}]
  %s2 = inlined_call_operand.vmem [shape: f32[1,64], index: 2, kind: input, shape index: {}]
  %s3 = inlined_call_operand.vmem [shape: bf16[16,64], index: 3, kind: output, shape index: {}]
  %s4 = sld [smem:[#allocation0]]
  $region30: #{transformer_forward.23} parent=0
    _
  %s6 = ssub.s32 1, %s4
  %s7 = scalar_select 0, %s6, %s4
  // Predicated region
  $region2: #{transformer_forward.23} parent=0 // pred_check
    _
  $region3: #{transformer_forward.23} parent=0 // pred_check_branch
    %9 = sbr.rel (0) target = $region5
  $region4: #{transformer_forward.23} parent=0 // pred_region
    _
  $region5: #{transformer_forward.23} parent=0 // pred_fallthru
    _
  // Predicated region
  $region6: #{transformer_forward.23} parent=0 // pred_check
    _
  $region7: #{transformer_forward.23} parent=0 // pred_check_branch
    %11 = sbr.rel (0) target = $region9
  $region8: #{transformer_forward.23} parent=0 // pred_region
    _
  $region9: #{transformer_forward.23} parent=0 // pred_fallthru
    _
  // Predicated region
  $region10: #{transformer_forward.23} parent=0 // pred_check
    _
  $region11: #{transformer_forward.23} parent=0 // pred_check_branch
    %13 = sbr.rel (0) target = $region13
  $region12: #{transformer_forward.23} parent=0 // pred_region
    _
  $region13: #{transformer_forward.23} parent=0 // pred_fallthru
    _
  %p15 = scmp.eq.s32.totalorder 0, 0
  // Predicated region
  $region14: #{transformer_forward.23} parent=0 // pred_check
    %p16 = pneg %p15
  $region15: #{transformer_forward.23} parent=0 // pred_check_branch
    %18 = sbr.rel (%p16) target = $region17
  $region16: #{transformer_forward.23} parent=0 // pred_region
    %vm19 = vcmask 523264
    %20 = vst.msk [vmem:[#allocation2] sm:$0xff] %vm19, 0.0
    %21 = vst.msk [vmem:[#allocation2 + $0x8] sm:$0xff] %vm19, 0.0
  $region17: #{transformer_forward.23} parent=0 // pred_fallthru
    _
  %v22 = vld [vmem:[#allocation2] sm:$0xff]
  %v23 = vld [vmem:[#allocation2 + $0x8] sm:$0xff]
  %v24 = vld [vmem:[%s0] sm:$0xf]
  %v25 = vld [vmem:[%s0 + $0x4] sm:$0xf]
  %v26 = vld [vmem:[%s1] sm:$0xf]
  %v27 = vld [vmem:[%s1 + $0x4] sm:$0xf]
  %v28 = vld [vmem:[%s1 + $0x8] sm:$0xf]
  %v29 = vld [vmem:[%s1 + $0xc] sm:$0xf]
  %v32 = vunpack.c.l.b16 %v24
  %v33 = vunpack.c.l.b16 %v25
  %v34 = vpack.c.b16 %v33, %v32
  %v39 = vunpack.c.l.b16 %v26
  %v40 = vunpack.c.l.b16 %v27
  %v41 = vunpack.c.l.b16 %v28
  %v42 = vunpack.c.l.b16 %v29
  %v43 = vpack.c.b16 %v40, %v39
  %v44 = vpack.c.b16 %v42, %v41
  %vm47 = vcmask 261120
  %v49 = vsel %vm47, %v34, 0
  %51 = vmatprep.subr.bf16.mxu0 0
  %52 = vmatpush1.bf16.msra.mxu0 %v43
  %53 = vmatprep.subr.bf16.mxu0 0
  %54 = vmatpush1.bf16.msra.mxu0 %v44
  %55 = vmatprep.subr.bf16.mxu0 0
  %56 = vmatpush1.bf16.msra.mxu0 0
  %57 = vmatprep.subr.bf16.mxu0 0
  %58 = vmatpush1.bf16.msra.mxu0 0
  %59 = vmatprep.subr.bf16.mxu0 0
  %60 = vmatpush1.bf16.msra.mxu0 0
  %61 = vmatprep.subr.bf16.mxu0 0
  %62 = vmatpush1.bf16.msra.mxu0 0
  %63 = vmatprep.subr.bf16.mxu0 0
  %64 = vmatpush1.bf16.msra.mxu0 0
  %65 = vmatprep.subr.bf16.mxu0 0
  %66 = vmatpush1.bf16.msra.mxu0 0
  %67 = vmatprep.subr.bf16.mxu0 0
  %68 = vmatpush1.bf16.msra.mxu0 0
  %69 = vmatprep.subr.bf16.mxu0 0
  %70 = vmatpush1.bf16.msra.mxu0 0
  %71 = vmatprep.subr.bf16.mxu0 0
  %72 = vmatpush1.bf16.msra.mxu0 0
  %73 = vmatprep.subr.bf16.mxu0 0
  %74 = vmatpush1.bf16.msra.mxu0 0
  %75 = vmatprep.subr.bf16.mxu0 0
  %76 = vmatpush1.bf16.msra.mxu0 0
  %77 = vmatprep.subr.bf16.mxu0 0
  %78 = vmatpush1.bf16.msra.mxu0 0
  %79 = vmatprep.subr.bf16.mxu0 0
  %80 = vmatpush1.bf16.msra.mxu0 0
  %81 = vmatprep.subr.bf16.mxu0 0
  %82 = vmatpush1.bf16.msra.mxu0 0
  %83 = vmatprep.mubr.bf16.mxu0 0
  %84 = vmatmul.mubr.bf16.gmra.mrb[0].mxu0 %v49
  %v85 = vpop.f32.mrb[0].mxu0
  %v86 = vadd.f32 0.0, %v85
  %v87 = vpop.f32.mrb[0].mxu0
  %v88 = vpop.f32.mrb[0].mxu0
  %v89 = vadd.f32 0.0, %v88
  %v90 = vpop.f32.mrb[0].mxu0
  %91 = vdwg.mxu0
  %v92 = vadd.f32 %v22, %v86
  %v93 = vadd.f32 %v23, %v89
  %vm94 = vcmask 523264
  %95 = vst.msk [vmem:[#allocation2] sm:$0xff] %vm94, %v92
  %96 = vst.msk [vmem:[#allocation2 + $0x8] sm:$0xff] %vm94, %v93
  // Predicated region
  $region18: #{transformer_forward.23} parent=0 // pred_check
    %p97 = pneg %p15
  $region19: #{transformer_forward.23} parent=0 // pred_check_branch
    %99 = sbr.rel (%p97) target = $region21
  $region20: #{transformer_forward.23} parent=0 // pred_region
    %v100 = vld [vmem:[#allocation2] sm:$0xff]
    %v101 = vld [vmem:[#allocation2 + $0x8] sm:$0xff]
    %v102 = vld [vmem:[%s2] sm:$0x1]
    %v104 = vlaneseq
    %v105 = vshrl.u32 %v104, 7
    %v106 = vsub.s32 0, %v105
    %v107 = vrot.slane %v102, %v106
    %v109 = vadd.f32 %v100, %v107
    %v110 = vadd.f32 %v101, %v107
    %v111 = vmul.f32 %v109, 0.5
    %v112 = vmul.f32 %v110, 0.5
    %v113 = vmul.f32 %v109, 0.044715
    %v114 = vmul.f32 %v110, 0.044715
    %v115 = vmul.f32 %v113, %v109
    %v116 = vmul.f32 %v114, %v110
    %v117 = vmul.f32 %v115, %v109
    %v118 = vmul.f32 %v116, %v110
    %v119 = vadd.f32 %v109, %v117
    %v120 = vadd.f32 %v110, %v118
    %v121 = vmul.f32 %v119, 0.7978846
    %v122 = vmul.f32 %v120, 0.7978846
    %v123 = vtanh.pop %v121
    %v124 = vtanh.pop %v122
    %v125 = vadd.f32 %v123, 1.0
    %v126 = vadd.f32 %v124, 1.0
    %v127 = vmul.f32 %v111, %v125
    %v128 = vmul.f32 %v112, %v126
    %v129 = vpack.c.bf16 %v128, %v127
    %v131 = vunpack.c.l.b16 %v129
    %v132 = vunpack.c.h.b16 %v129
    %v133 = vpack.c.b16 %v131, %v131
    %v134 = vpack.c.b16 %v132, %v132
    %vm137 = vcmask 519168
    %138 = vst.msk [vmem:[%s3] sm:$0xf] %vm137, %v133
    %139 = vst.msk [vmem:[%s3 + $0x4] sm:$0xf] %vm137, %v134
  $region21: #{transformer_forward.23} parent=0 // pred_fallthru
    _
  // Predicated region
  $region22: #{transformer_forward.23} parent=0 // pred_check
    _
  $region23: #{transformer_forward.23} parent=0 // pred_check_branch
    %141 = sbr.rel (0) target = $region25
  $region24: #{transformer_forward.23} parent=0 // pred_region
    _
  $region25: #{transformer_forward.23} parent=0 // pred_fallthru
    _
  // Predicated region
  $region26: #{transformer_forward.23} parent=0 // pred_check
    _
  $region27: #{transformer_forward.23} parent=0 // pred_check_branch
    %143 = sbr.rel (0) target = $region29
  $region28: #{transformer_forward.23} parent=0 // pred_region
    _
  $region29: #{transformer_forward.23} parent=0 // pred_fallthru
    _

// kernel: transformer_forward.21
$region0: #{transformer_forward.21}
  #allocation0 [shape = 'u32[]', space=smem, size = 0x4, offset = 0x4, fixed_abs, tag = 'smem constant byte address 0x4 - core index']
  #allocation1 [shape = 'u32[144,128]{1,0:T(1,128)}', space=vmem, size = 0x12000, scoped, tag = 'internal scratch']
  %s0 = inlined_call_operand.vmem [shape: bf16[2,8,32], index: 0, kind: input, shape index: {}]
  %s1 = inlined_call_operand.vmem [shape: bf16[32,96], index: 1, kind: input, shape index: {}]
  %s2 = inlined_call_operand.vmem [shape: bf16[2,8,32], index: 2, kind: output, shape index: {}]
  %s3 = sld [smem:[#allocation0]]
  $region41: #{transformer_forward.21} parent=0
    _
  %s5 = ssub.s32 1, %s3
  %s6 = scalar_select 0, %s5, %s3
  loop: start=0, step=1, limit=4
  $region2: #{transformer_forward.21} parent=0 // loop_pre_header
    _
  $region3: #{transformer_forward.21} parent=0 // loop_header
    %s8 = sphi 0, %s12
    %p9 = scmp.ge.s32.totalorder %s8, 4
    %s18 = sphi 0, %s20
    %s21 = sphi 0, %s18
    %s22 = sphi 0, %s21
    %s38 = sphi 0, %s22
    %s42 = sphi 0, %s42
    %s44 = sphi 0, %s42
    %s45 = sphi 0, %s44
    %s59 = sphi 0, %s45
    %s65 = sphi 0, %s67
    %s68 = sphi 0, %s65
    %s69 = sphi 0, %s68
    %s85 = sphi 0, %s69
  $region4: #{transformer_forward.21} parent=0 // loop_header_branch
    %11 = sbr.rel (%p9) target = $region8
  $region5: #{transformer_forward.21} parent=0 // loop_body
    %s13 = ssub.s32 %s8, 1
    %s14 = ssub.s32 %s8, 2
    %s15 = sadd.s32 %s8, 1
    %s16 = ssub.s32 %s8, %s15
    %p17 = scmp.eq.s32.totalorder %s16, 0
    %s19 = sadd.s32 %s18, 1
    %s20 = scalar_select %p17, %s18, %s19
    %p23 = pneg %p17
    %p24 = scmp.eq.s32.totalorder %s8, 1
    %p25 = por %p23, %p24
    %p26 = scmp.ne.s32.totalorder %s18, %s21
    %p27 = scmp.eq.s32.totalorder %s8, 0
    %p28 = por %p26, %p27
    %p29 = scmp.ne.s32.totalorder %s18, %s21
    %p30 = scmp.eq.s32.totalorder %s13, 1
    %p31 = por %p29, %p30
    %p32 = scmp.ne.s32.totalorder %s21, %s22
    %p33 = scmp.eq.s32.totalorder %s13, 0
    %p34 = por %p32, %p33
    %p35 = scmp.ne.s32.totalorder %s21, %s22
    %p36 = scmp.eq.s32.totalorder %s14, 1
    %p37 = por %p35, %p36
    %p39 = scmp.ne.s32.totalorder %s22, %s38
    %p40 = scmp.eq.s32.totalorder %s14, 0
    %p41 = por %p39, %p40
    %s43 = sadd.s32 %s42, 1
    %p46 = scmp.eq.s32.totalorder %s8, 1
    %p47 = scmp.ne.s32.totalorder %s42, %s44
    %p48 = scmp.eq.s32.totalorder %s8, 0
    %p49 = por %p47, %p48
    %p50 = scmp.ne.s32.totalorder %s42, %s44
    %p51 = scmp.eq.s32.totalorder %s13, 1
    %p52 = por %p50, %p51
    %p53 = scmp.ne.s32.totalorder %s44, %s45
    %p54 = scmp.eq.s32.totalorder %s13, 0
    %p55 = por %p53, %p54
    %p56 = scmp.ne.s32.totalorder %s44, %s45
    %p57 = scmp.eq.s32.totalorder %s14, 1
    %p58 = por %p56, %p57
    %p60 = scmp.ne.s32.totalorder %s45, %s59
    %p61 = scmp.eq.s32.totalorder %s14, 0
    %p62 = por %p60, %p61
    %s63 = ssub.s32 %s8, %s15
    %p64 = scmp.eq.s32.totalorder %s63, 0
    %s66 = sadd.s32 %s65, 1
    %s67 = scalar_select %p64, %s65, %s66
    %p70 = pneg %p64
    %p71 = scmp.eq.s32.totalorder %s8, 1
    %p72 = por %p70, %p71
    %p73 = scmp.ne.s32.totalorder %s65, %s68
    %p74 = scmp.eq.s32.totalorder %s8, 0
    %p75 = por %p73, %p74
    %p76 = scmp.ne.s32.totalorder %s65, %s68
    %p77 = scmp.eq.s32.totalorder %s13, 1
    %p78 = por %p76, %p77
    %p79 = scmp.ne.s32.totalorder %s68, %s69
    %p80 = scmp.eq.s32.totalorder %s13, 0
    %p81 = por %p79, %p80
    %p82 = scmp.ne.s32.totalorder %s68, %s69
    %p83 = scmp.eq.s32.totalorder %s14, 1
    %p84 = por %p82, %p83
    %p86 = scmp.ne.s32.totalorder %s69, %s85
    %p87 = scmp.eq.s32.totalorder %s14, 0
    %p88 = por %p86, %p87
    %p89 = scmp.le.s32.totalorder 1, %s8
    %p90 = scmp.lt.s32.totalorder %s8, 3
    %p91 = pnand %p89, %p90
    %p92 = pneg %p91
    // Predicated region
    $region9: #{transformer_forward.21} parent=5 // pred_check
      _
    $region10: #{transformer_forward.21} parent=5 // pred_check_branch
      %94 = sbr.rel (%p91) target = $region12
    $region11: #{transformer_forward.21} parent=5 // pred_region
      %s95 = ssub.s32 %s8, 1
      // Predicated region
      $region13: #{transformer_forward.21} parent=11 // pred_check
        %p96 = pneg %p55
      $region14: #{transformer_forward.21} parent=11 // pred_check_branch
        %98 = sbr.rel (%p96) target = $region16
      $region15: #{transformer_forward.21} parent=11 // pred_region
        _
      $region16: #{transformer_forward.21} parent=11 // pred_fallthru
        _
    $region12: #{transformer_forward.21} parent=5 // pred_fallthru
      _
    %p99 = scmp.lt.s32.totalorder %s8, 2
    // Predicated region
    $region17: #{transformer_forward.21} parent=5 // pred_check
      %p100 = pneg %p99
    $region18: #{transformer_forward.21} parent=5 // pred_check_branch
      %102 = sbr.rel (%p100) target = $region20
    $region19: #{transformer_forward.21} parent=5 // pred_region
      // Predicated region
      $region21: #{transformer_forward.21} parent=19 // pred_check
        %p103 = pneg %p28
      $region22: #{transformer_forward.21} parent=19 // pred_check_branch
        %105 = sbr.rel (%p103) target = $region24
      $region23: #{transformer_forward.21} parent=19 // pred_region
        %p106 = scmp.lt.s32.totalorder %s8, 1
        %s107 = scalar_select %p106, %s8, 1
        %s108 = smul.addr %s107, 4
        %s109 = scalar_lea.vmem %s0, %s108
      $region24: #{transformer_forward.21} parent=19 // pred_fallthru
        _
    $region20: #{transformer_forward.21} parent=5 // pred_fallthru
      _
    %p110 = scmp.le.s32.totalorder 1, %s8
    %p111 = scmp.lt.s32.totalorder %s8, 3
    %p112 = pnand %p110, %p111
    %p113 = pneg %p112
    // Predicated region
    $region25: #{transformer_forward.21} parent=5 // pred_check
      _
    $region26: #{transformer_forward.21} parent=5 // pred_check_branch
      %115 = sbr.rel (%p112) target = $region28
    $region27: #{transformer_forward.21} parent=5 // pred_region
      %s116 = ssub.s32 %s8, 1
      %p117 = scmp.lt.s32.totalorder %s13, 1
      %s118 = scalar_select %p117, %s13, 1
      %s119 = smul.addr %s118, 4
      %s120 = scalar_lea.vmem %s0, %s119
      %p121 = pneg %p34
      %p122 = pneg %p31
      %p123 = pneg %p55
      %p124 = pneg %p52
      %p125 = pneg %p81
      %p126 = pneg %p78
      %p127 = scmp.lt.s32.totalorder %s13, 1
      %s128 = scalar_select %p127, %s13, 1
      %s129 = smul.addr %s128, 4
      %s130 = scalar_lea.vmem %s2, %s129
      %p131 = scmp.lt.s32.totalorder %s13, 1
      %s132 = scalar_select %p131, %s13, 1
      %s133 = smul.addr %s132, 4
      %s134 = scalar_lea.vmem %s0, %s133
      %p135 = scmp.lt.s32.totalorder %s13, 1
      %s136 = scalar_select %p135, %s13, 1
      %s137 = smul.addr %s136, 4
      %s138 = scalar_lea.vmem %s2, %s137
      %v140 = vld [vmem:[%s134] sm:$0xf]
      %v141 = vld [vmem:[%s1] sm:$0xf]
      %v142 = vld [vmem:[%s1 + $0x4] sm:$0xf]
      %v143 = vld [vmem:[%s1 + $0x8] sm:$0xf]
      %v144 = vld [vmem:[%s1 + $0xc] sm:$0xf]
      %v149 = vunpack.c.l.b16 %v141
      %v150 = vunpack.c.l.b16 %v142
      %v151 = vunpack.c.l.b16 %v143
      %v152 = vunpack.c.l.b16 %v144
      %v153 = vpack.c.b16 %v150, %v149
      %v154 = vpack.c.b16 %v152, %v151
      %vm157 = vcmask 261120
      %v159 = vsel %vm157, %v140, 0
      %161 = vmatprep.subr.bf16.mxu0 0
      %162 = vmatpush1.bf16.msra.mxu0 %v153
      %163 = vmatprep.subr.bf16.mxu0 0
      %164 = vmatpush1.bf16.msra.mxu0 %v154
      %165 = vmatprep.subr.bf16.mxu0 0
      %166 = vmatpush1.bf16.msra.mxu0 0
      %167 = vmatprep.subr.bf16.mxu0 0
      %168 = vmatpush1.bf16.msra.mxu0 0
      %169 = vmatprep.subr.bf16.mxu0 0
      %170 = vmatpush1.bf16.msra.mxu0 0
      %171 = vmatprep.subr.bf16.mxu0 0
      %172 = vmatpush1.bf16.msra.mxu0 0
      %173 = vmatprep.subr.bf16.mxu0 0
      %174 = vmatpush1.bf16.msra.mxu0 0
      %175 = vmatprep.subr.bf16.mxu0 0
      %176 = vmatpush1.bf16.msra.mxu0 0
      %177 = vmatprep.subr.bf16.mxu0 0
      %178 = vmatpush1.bf16.msra.mxu0 0
      %179 = vmatprep.subr.bf16.mxu0 0
      %180 = vmatpush1.bf16.msra.mxu0 0
      %181 = vmatprep.subr.bf16.mxu0 0
      %182 = vmatpush1.bf16.msra.mxu0 0
      %183 = vmatprep.subr.bf16.mxu0 0
      %184 = vmatpush1.bf16.msra.mxu0 0
      %185 = vmatprep.subr.bf16.mxu0 0
      %186 = vmatpush1.bf16.msra.mxu0 0
      %187 = vmatprep.subr.bf16.mxu0 0
      %188 = vmatpush1.bf16.msra.mxu0 0
      %189 = vmatprep.subr.bf16.mxu0 0
      %190 = vmatpush1.bf16.msra.mxu0 0
      %191 = vmatprep.subr.bf16.mxu0 0
      %192 = vmatpush1.bf16.msra.mxu0 0
      %193 = vmatprep.mubr.bf16.mxu0 0
      %194 = vmatmul.mubr.bf16.gmra.mrb[0].mxu0 %v159
      %v195 = vpop.f32.mrb[0].mxu0
      %v196 = vadd.f32 0.0, %v195
      %v197 = vpop.f32.mrb[0].mxu0
      %v198 = vpop.f32.mrb[0].mxu0
      %v199 = vpop.f32.mrb[0].mxu0
      %200 = vdwg.mxu0
      %v201 = vpack.c.bf16 %v196, %v196
      %203 = vrot.lane.b32.xlu0 %v201, 96
      %v204 = vpop.permute.xlu0 %203
      %vm205 = vcmask 130048
      %v207 = vsel %vm205, %v201, 0
      %v210 = vsel %vm205, %v204, 0
      %212 = vmatprep.subr.bf16.mxu0 0
      %213 = vmatpush1.bf16.xpose.msra.mxu0 %v210
      %214 = vmatprep.subr.bf16.mxu0 0
      %215 = vmatpush1.bf16.xpose.msra.mxu0 0
      %216 = vmatprep.subr.bf16.mxu0 0
      %217 = vmatpush1.bf16.xpose.msra.mxu0 0
      %218 = vmatprep.subr.bf16.mxu0 0
      %219 = vmatpush1.bf16.xpose.msra.mxu0 0
      %220 = vmatprep.subr.bf16.mxu0 0
      %221 = vmatpush1.bf16.xpose.msra.mxu0 0
      %222 = vmatprep.subr.bf16.mxu0 0
      %223 = vmatpush1.bf16.xpose.msra.mxu0 0
      %224 = vmatprep.subr.bf16.mxu0 0
      %225 = vmatpush1.bf16.xpose.msra.mxu0 0
      %226 = vmatprep.subr.bf16.mxu0 0
      %227 = vmatpush1.bf16.xpose.msra.mxu0 0
      %228 = vmatprep.subr.bf16.mxu0 0
      %229 = vmatpush1.bf16.xpose.msra.mxu0 0
      %230 = vmatprep.subr.bf16.mxu0 0
      %231 = vmatpush1.bf16.xpose.msra.mxu0 0
      %232 = vmatprep.subr.bf16.mxu0 0
      %233 = vmatpush1.bf16.xpose.msra.mxu0 0
      %234 = vmatprep.subr.bf16.mxu0 0
      %235 = vmatpush1.bf16.xpose.msra.mxu0 0
      %236 = vmatprep.subr.bf16.mxu0 0
      %237 = vmatpush1.bf16.xpose.msra.mxu0 0
      %238 = vmatprep.subr.bf16.mxu0 0
      %239 = vmatpush1.bf16.xpose.msra.mxu0 0
      %240 = vmatprep.subr.bf16.mxu0 0
      %241 = vmatpush1.bf16.xpose.msra.mxu0 0
      %242 = vmatprep.subr.bf16.mxu0 0
      %243 = vmatpush1.bf16.xpose.msra.mxu0 0
      %244 = vmatprep.mubr.bf16.mxu0 0
      %245 = vmatmul.mubr.bf16.gmra.mrb[0].mxu0 %v207
      %v246 = vpop.f32.mrb[0].mxu0
      %v247 = vadd.f32 0.0, %v246
      %v248 = vpop.f32.mrb[0].mxu0
      %v249 = vpop.f32.mrb[0].mxu0
      %v250 = vpop.f32.mrb[0].mxu0
      %251 = vdwg.mxu0
      %v252 = vmul.f32 %v247, 0.25
      %vm253 = vcmask 64512
      %v254 = vsel %vm253, %v252, -inf
      %255 = vmax.xlane.f32.xlu0 %v254
      %v256 = vpop.xlane.xlu0 %255
      %v257 = vsub.f32 %v252, %v256
      %v258 = vmul.f32 %v257, 1.442695
      %v259 = vpow.pop %v258
      %v260 = vsel %vm253, %v259, 0.0
      %261 = vadd.xlane.f32.xlu0 %v260
      %v262 = vpop.xlane.xlu0 %261
      %v263 = vrcp.pop %v262
      %v264 = vmul.f32 %v259, %v263
      %v265 = vpack.c.bf16 %v264, %v264
      %266 = vrot.lane.b32.xlu0 %v201, 64
      %v267 = vpop.permute.xlu0 %266
      %v269 = vsel %vm253, %v265, 0
      %vm271 = vcmask 1043456
      %v273 = vsel %vm271, %v267, 0
      %275 = vmatprep.subr.bf16.mxu0 0
      %276 = vmatpush1.bf16.msra.mxu0 %v273
      %277 = vmatprep.subr.bf16.mxu0 0
      %278 = vmatpush1.bf16.msra.mxu0 0
      %279 = vmatprep.subr.bf16.mxu0 0
      %280 = vmatpush1.bf16.msra.mxu0 0
      %281 = vmatprep.subr.bf16.mxu0 0
      %282 = vmatpush1.bf16.msra.mxu0 0
      %283 = vmatprep.subr.bf16.mxu0 0
      %284 = vmatpush1.bf16.msra.mxu0 0
      %285 = vmatprep.subr.bf16.mxu0 0
      %286 = vmatpush1.bf16.msra.mxu0 0
      %287 = vmatprep.subr.bf16.mxu0 0
      %288 = vmatpush1.bf16.msra.mxu0 0
      %289 = vmatprep.subr.bf16.mxu0 0
      %290 = vmatpush1.bf16.msra.mxu0 0
      %291 = vmatprep.subr.bf16.mxu0 0
      %292 = vmatpush1.bf16.msra.mxu0 0
      %293 = vmatprep.subr.bf16.mxu0 0
      %294 = vmatpush1.bf16.msra.mxu0 0
      %295 = vmatprep.subr.bf16.mxu0 0
      %296 = vmatpush1.bf16.msra.mxu0 0
      %297 = vmatprep.subr.bf16.mxu0 0
      %298 = vmatpush1.bf16.msra.mxu0 0
      %299 = vmatprep.subr.bf16.mxu0 0
      %300 = vmatpush1.bf16.msra.mxu0 0
      %301 = vmatprep.subr.bf16.mxu0 0
      %302 = vmatpush1.bf16.msra.mxu0 0
      %303 = vmatprep.subr.bf16.mxu0 0
      %304 = vmatpush1.bf16.msra.mxu0 0
      %305 = vmatprep.subr.bf16.mxu0 0
      %306 = vmatpush1.bf16.msra.mxu0 0
      %307 = vmatprep.mubr.bf16.mxu0 0
      %308 = vmatmul.mubr.bf16.gmra.mrb[0].mxu0 %v269
      %v309 = vpop.f32.mrb[0].mxu0
      %v310 = vadd.f32 0.0, %v309
      %v311 = vpop.f32.mrb[0].mxu0
      %v312 = vpop.f32.mrb[0].mxu0
      %v313 = vpop.f32.mrb[0].mxu0
      %314 = vdwg.mxu0
      %v315 = vpack.c.bf16 %v310, %v310
      %vm316 = vcmask 125952
      %317 = vst.msk [vmem:[%s138] sm:$0xf] %vm316, %v315
      %318 = vrot.lane.b32.xlu0 %v201, 112
      %v319 = vpop.permute.xlu0 %318
      %320 = vrot.lane.b32.xlu0 %v201, 80
      %v321 = vpop.permute.xlu0 %320
      %v323 = vsel %vm205, %v319, 0
      %v326 = vsel %vm205, %v321, 0
      %328 = vmatprep.subr.bf16.mxu0 0
      %329 = vmatpush1.bf16.xpose.msra.mxu0 %v326
      %330 = vmatprep.subr.bf16.mxu0 0
      %331 = vmatpush1.bf16.xpose.msra.mxu0 0
      %332 = vmatprep.subr.bf16.mxu0 0
      %333 = vmatpush1.bf16.xpose.msra.mxu0 0
      %334 = vmatprep.subr.bf16.mxu0 0
      %335 = vmatpush1.bf16.xpose.msra.mxu0 0
      %336 = vmatprep.subr.bf16.mxu0 0
      %337 = vmatpush1.bf16.xpose.msra.mxu0 0
      %338 = vmatprep.subr.bf16.mxu0 0
      %339 = vmatpush1.bf16.xpose.msra.mxu0 0
      %340 = vmatprep.subr.bf16.mxu0 0
      %341 = vmatpush1.bf16.xpose.msra.mxu0 0
      %342 = vmatprep.subr.bf16.mxu0 0
      %343 = vmatpush1.bf16.xpose.msra.mxu0 0
      %344 = vmatprep.subr.bf16.mxu0 0
      %345 = vmatpush1.bf16.xpose.msra.mxu0 0
      %346 = vmatprep.subr.bf16.mxu0 0
      %347 = vmatpush1.bf16.xpose.msra.mxu0 0
      %348 = vmatprep.subr.bf16.mxu0 0
      %349 = vmatpush1.bf16.xpose.msra.mxu0 0
      %350 = vmatprep.subr.bf16.mxu0 0
      %351 = vmatpush1.bf16.xpose.msra.mxu0 0
      %352 = vmatprep.subr.bf16.mxu0 0
      %353 = vmatpush1.bf16.xpose.msra.mxu0 0
      %354 = vmatprep.subr.bf16.mxu0 0
      %355 = vmatpush1.bf16.xpose.msra.mxu0 0
      %356 = vmatprep.subr.bf16.mxu0 0
      %357 = vmatpush1.bf16.xpose.msra.mxu0 0
      %358 = vmatprep.subr.bf16.mxu0 0
      %359 = vmatpush1.bf16.xpose.msra.mxu0 0
      %360 = vmatprep.mubr.bf16.mxu0 0
      %361 = vmatmul.mubr.bf16.gmra.mrb[0].mxu0 %v323
      %v362 = vpop.f32.mrb[0].mxu0
      %v363 = vadd.f32 0.0, %v362
      %v364 = vpop.f32.mrb[0].mxu0
      %v365 = vpop.f32.mrb[0].mxu0
      %v366 = vpop.f32.mrb[0].mxu0
      %367 = vdwg.mxu0
      %v368 = vmul.f32 %v363, 0.25
      %v369 = vsel %vm253, %v368, -inf
      %370 = vmax.xlane.f32.xlu0 %v369
      %v371 = vpop.xlane.xlu0 %370
      %v372 = vsub.f32 %v368, %v371
      %v373 = vmul.f32 %v372, 1.442695
      %v374 = vpow.pop %v373
      %v375 = vsel %vm253, %v374, 0.0
      %376 = vadd.xlane.f32.xlu0 %v375
      %v377 = vpop.xlane.xlu0 %376
      %v378 = vrcp.pop %v377
      %v379 = vmul.f32 %v374, %v378
      %v380 = vpack.c.bf16 %v379, %v379
      %381 = vrot.lane.b32.xlu0 %v201, 48
      %v382 = vpop.permute.xlu0 %381
      %v384 = vsel %vm253, %v380, 0
      %v387 = vsel %vm271, %v382, 0
      %389 = vmatprep.subr.bf16.mxu0 0
      %390 = vmatpush1.bf16.msra.mxu0 %v387
      %391 = vmatprep.subr.bf16.mxu0 0
      %392 = vmatpush1.bf16.msra.mxu0 0
      %393 = vmatprep.subr.bf16.mxu0 0
      %394 = vmatpush1.bf16.msra.mxu0 0
      %395 = vmatprep.subr.bf16.mxu0 0
      %396 = vmatpush1.bf16.msra.mxu0 0
      %397 = vmatprep.subr.bf16.mxu0 0
      %398 = vmatpush1.bf16.msra.mxu0 0
      %399 = vmatprep.subr.bf16.mxu0 0
      %400 = vmatpush1.bf16.msra.mxu0 0
      %401 = vmatprep.subr.bf16.mxu0 0
      %402 = vmatpush1.bf16.msra.mxu0 0
      %403 = vmatprep.subr.bf16.mxu0 0
      %404 = vmatpush1.bf16.msra.mxu0 0
      %405 = vmatprep.subr.bf16.mxu0 0
      %406 = vmatpush1.bf16.msra.mxu0 0
      %407 = vmatprep.subr.bf16.mxu0 0
      %408 = vmatpush1.bf16.msra.mxu0 0
      %409 = vmatprep.subr.bf16.mxu0 0
      %410 = vmatpush1.bf16.msra.mxu0 0
      %411 = vmatprep.subr.bf16.mxu0 0
      %412 = vmatpush1.bf16.msra.mxu0 0
      %413 = vmatprep.subr.bf16.mxu0 0
      %414 = vmatpush1.bf16.msra.mxu0 0
      %415 = vmatprep.subr.bf16.mxu0 0
      %416 = vmatpush1.bf16.msra.mxu0 0
      %417 = vmatprep.subr.bf16.mxu0 0
      %418 = vmatpush1.bf16.msra.mxu0 0
      %419 = vmatprep.subr.bf16.mxu0 0
      %420 = vmatpush1.bf16.msra.mxu0 0
      %421 = vmatprep.mubr.bf16.mxu0 0
      %422 = vmatmul.mubr.bf16.gmra.mrb[0].mxu0 %v384
      %v423 = vpop.f32.mrb[0].mxu0
      %v424 = vadd.f32 0.0, %v423
      %v425 = vpop.f32.mrb[0].mxu0
      %v426 = vpop.f32.mrb[0].mxu0
      %v427 = vpop.f32.mrb[0].mxu0
      %428 = vdwg.mxu0
      %v429 = vpack.c.bf16 %v424, %v424
      %v431 = vunpack.c.l.b16 %v429
      %v432 = vpack.c.b16 %v431, %v431
      %433 = vrot.lane.b32.xlu0 %v432, 16
      %v434 = vpop.permute.xlu0 %433
      %vm436 = vcmask 257152
      %437 = vst.msk [vmem:[%s138] sm:$0xf] %vm436, %v434
      %p438 = scmp.lt.s32.totalorder %s13, 1
      %s439 = scalar_select %p438, %s13, 1
      %s440 = smul.addr %s439, 4
      %s441 = scalar_lea.vmem %s2, %s440
      // Predicated region
      $region29: #{transformer_forward.21} parent=27 // pred_check
        %p442 = pneg %p78
      $region30: #{transformer_forward.21} parent=27 // pred_check_branch
        %444 = sbr.rel (%p442) target = $region32
      $region31: #{transformer_forward.21} parent=27 // pred_region
        _
      $region32: #{transformer_forward.21} parent=27 // pred_fallthru
        _
    $region28: #{transformer_forward.21} parent=5 // pred_fallthru
      _
    %p445 = scmp.le.s32.totalorder 2, %s8
    // Predicated region
    $region33: #{transformer_forward.21} parent=5 // pred_check
      %p446 = pneg %p445
    $region34: #{transformer_forward.21} parent=5 // pred_check_branch
      %448 = sbr.rel (%p446) target = $region36
    $region35: #{transformer_forward.21} parent=5 // pred_region
      %s449 = ssub.s32 %s8, 2
      // Predicated region
      $region37: #{transformer_forward.21} parent=35 // pred_check
        %p450 = pneg %p84
      $region38: #{transformer_forward.21} parent=35 // pred_check_branch
        %452 = sbr.rel (%p450) target = $region40
      $region39: #{transformer_forward.21} parent=35 // pred_region
        %p453 = scmp.lt.s32.totalorder %s14, 1
        %s454 = scalar_select %p453, %s14, 1
        %s455 = smul.addr %s454, 4
        %s456 = scalar_lea.vmem %s2, %s455
      $region40: #{transformer_forward.21} parent=35 // pred_fallthru
        _
    $region36: #{transformer_forward.21} parent=5 // pred_fallthru
      _
  $region6: #{transformer_forward.21} parent=0 // loop_footer
    %s12 = sadd.s32 1, %s8
  $region7: #{transformer_forward.21} parent=0 // loop_footer_branch
    %7 = sbr.rel target = $region3
  $region8: #{transformer_forward.21} parent=0 // loop_exit
    _

// kernel: transformer_forward.24
$region0: #{transformer_forward.24}
  #allocation0 [shape = 'u32[]', space=smem, size = 0x4, offset = 0x4, fixed_abs, tag = 'smem constant byte address 0x4 - core index']
  #allocation1 [shape = 'u32[144,128]{1,0:T(1,128)}', space=vmem, size = 0x12000, scoped, tag = 'internal scratch']
  #allocation2 [shape = 'f32[16,32]{1,0:T(8,128)}', space=vmem, size = 0x2000, scoped, tag = 'scratch operand']
  %s0 = inlined_call_operand.vmem [shape: bf16[16,64], index: 0, kind: input, shape index: {}]
  %s1 = inlined_call_operand.vmem [shape: bf16[64,32], index: 1, kind: input, shape index: {}]
  %s2 = inlined_call_operand.vmem [shape: f32[1,32], index: 2, kind: input, shape index: {}]
  %s3 = inlined_call_operand.vmem [shape: bf16[16,32], index: 3, kind: input, shape index: {}]
  %s4 = inlined_call_operand.vmem [shape: f32[1,32], index: 4, kind: input, shape index: {}]
  %s5 = inlined_call_operand.vmem [shape: f32[1,32], index: 5, kind: input, shape index: {}]
  %s6 = inlined_call_operand.vmem [shape: bf16[16,32], index: 6, kind: output, shape index: {}]
  %s7 = sld [smem:[#allocation0]]
  $region42: #{transformer_forward.24} parent=0
    _
  %s9 = ssub.s32 1, %s7
  %s10 = scalar_select 0, %s9, %s7
  // Predicated region
  $region2: #{transformer_forward.24} parent=0 // pred_check
    _
  $region3: #{transformer_forward.24} parent=0 // pred_check_branch
    %12 = sbr.rel (0) target = $region5
  $region4: #{transformer_forward.24} parent=0 // pred_region
    _
  $region5: #{transformer_forward.24} parent=0 // pred_fallthru
    _
  // Predicated region
  $region6: #{transformer_forward.24} parent=0 // pred_check
    _
  $region7: #{transformer_forward.24} parent=0 // pred_check_branch
    %14 = sbr.rel (0) target = $region9
  $region8: #{transformer_forward.24} parent=0 // pred_region
    _
  $region9: #{transformer_forward.24} parent=0 // pred_fallthru
    _
  // Predicated region
  $region10: #{transformer_forward.24} parent=0 // pred_check
    _
  $region11: #{transformer_forward.24} parent=0 // pred_check_branch
    %16 = sbr.rel (0) target = $region13
  $region12: #{transformer_forward.24} parent=0 // pred_region
    _
  $region13: #{transformer_forward.24} parent=0 // pred_fallthru
    _
  // Predicated region
  $region14: #{transformer_forward.24} parent=0 // pred_check
    _
  $region15: #{transformer_forward.24} parent=0 // pred_check_branch
    %18 = sbr.rel (0) target = $region17
  $region16: #{transformer_forward.24} parent=0 // pred_region
    _
  $region17: #{transformer_forward.24} parent=0 // pred_fallthru
    _
  // Predicated region
  $region18: #{transformer_forward.24} parent=0 // pred_check
    _
  $region19: #{transformer_forward.24} parent=0 // pred_check_branch
    %20 = sbr.rel (0) target = $region21
  $region20: #{transformer_forward.24} parent=0 // pred_region
    _
  $region21: #{transformer_forward.24} parent=0 // pred_fallthru
    _
  // Predicated region
  $region22: #{transformer_forward.24} parent=0 // pred_check
    _
  $region23: #{transformer_forward.24} parent=0 // pred_check_branch
    %22 = sbr.rel (0) target = $region25
  $region24: #{transformer_forward.24} parent=0 // pred_region
    _
  $region25: #{transformer_forward.24} parent=0 // pred_fallthru
    _
  %p24 = scmp.eq.s32.totalorder 0, 0
  // Predicated region
  $region26: #{transformer_forward.24} parent=0 // pred_check
    %p25 = pneg %p24
  $region27: #{transformer_forward.24} parent=0 // pred_check_branch
    %27 = sbr.rel (%p25) target = $region29
  $region28: #{transformer_forward.24} parent=0 // pred_region
    %vm28 = vcmask 261120
    %29 = vst.msk [vmem:[#allocation2] sm:$0xff] %vm28, 0.0
    %30 = vst.msk [vmem:[#allocation2 + $0x8] sm:$0xff] %vm28, 0.0
  $region29: #{transformer_forward.24} parent=0 // pred_fallthru
    _
  %v31 = vld [vmem:[#allocation2] sm:$0xff]
  %v32 = vld [vmem:[#allocation2 + $0x8] sm:$0xff]
  %v33 = vld [vmem:[%s0] sm:$0xf]
  %v34 = vld [vmem:[%s0 + $0x4] sm:$0xf]
  %v35 = vld [vmem:[%s1] sm:$0xf]
  %v36 = vld [vmem:[%s1 + $0x4] sm:$0xf]
  %v37 = vld [vmem:[%s1 + $0x8] sm:$0xf]
  %v38 = vld [vmem:[%s1 + $0xc] sm:$0xf]
  %v39 = vld [vmem:[%s1 + $0x10] sm:$0xf]
  %v40 = vld [vmem:[%s1 + $0x14] sm:$0xf]
  %v41 = vld [vmem:[%s1 + $0x18] sm:$0xf]
  %v42 = vld [vmem:[%s1 + $0x1c] sm:$0xf]
  %v45 = vunpack.c.l.b16 %v33
  %v46 = vunpack.c.l.b16 %v34
  %v47 = vpack.c.b16 %v46, %v45
  %v56 = vunpack.c.l.b16 %v35
  %v57 = vunpack.c.l.b16 %v36
  %v58 = vunpack.c.l.b16 %v37
  %v59 = vunpack.c.l.b16 %v38
  %v60 = vunpack.c.l.b16 %v39
  %v61 = vunpack.c.l.b16 %v40
  %v62 = vunpack.c.l.b16 %v41
  %v63 = vunpack.c.l.b16 %v42
  %v64 = vpack.c.b16 %v57, %v56
  %v65 = vpack.c.b16 %v59, %v58
  %v66 = vpack.c.b16 %v61, %v60
  %v67 = vpack.c.b16 %v63, %v62
  %vm72 = vcmask 523264
  %v74 = vsel %vm72, %v47, 0
  %76 = vmatprep.subr.bf16.mxu0 0
  %77 = vmatpush1.bf16.msra.mxu0 %v64
  %78 = vmatprep.subr.bf16.mxu0 0
  %79 = vmatpush1.bf16.msra.mxu0 %v65
  %80 = vmatprep.subr.bf16.mxu0 0
  %81 = vmatpush1.bf16.msra.mxu0 %v66
  %82 = vmatprep.subr.bf16.mxu0 0
  %83 = vmatpush1.bf16.msra.mxu0 %v67
  %84 = vmatprep.subr.bf16.mxu0 0
  %85 = vmatpush1.bf16.msra.mxu0 0
  %86 = vmatprep.subr.bf16.mxu0 0
  %87 = vmatpush1.bf16.msra.mxu0 0
  %88 = vmatprep.subr.bf16.mxu0 0
  %89 = vmatpush1.bf16.msra.mxu0 0
  %90 = vmatprep.subr.bf16.mxu0 0
  %91 = vmatpush1.bf16.msra.mxu0 0
  %92 = vmatprep.subr.bf16.mxu0 0
  %93 = vmatpush1.bf16.msra.mxu0 0
  %94 = vmatprep.subr.bf16.mxu0 0
  %95 = vmatpush1.bf16.msra.mxu0 0
  %96 = vmatprep.subr.bf16.mxu0 0
  %97 = vmatpush1.bf16.msra.mxu0 0
  %98 = vmatprep.subr.bf16.mxu0 0
  %99 = vmatpush1.bf16.msra.mxu0 0
  %100 = vmatprep.subr.bf16.mxu0 0
  %101 = vmatpush1.bf16.msra.mxu0 0
  %102 = vmatprep.subr.bf16.mxu0 0
  %103 = vmatpush1.bf16.msra.mxu0 0
  %104 = vmatprep.subr.bf16.mxu0 0
  %105 = vmatpush1.bf16.msra.mxu0 0
  %106 = vmatprep.subr.bf16.mxu0 0
  %107 = vmatpush1.bf16.msra.mxu0 0
  %108 = vmatprep.mubr.bf16.mxu0 0
  %109 = vmatmul.mubr.bf16.gmra.mrb[0].mxu0 %v74
  %v110 = vpop.f32.mrb[0].mxu0
  %v111 = vadd.f32 0.0, %v110
  %v112 = vpop.f32.mrb[0].mxu0
  %v113 = vpop.f32.mrb[0].mxu0
  %v114 = vadd.f32 0.0, %v113
  %v115 = vpop.f32.mrb[0].mxu0
  %116 = vdwg.mxu0
  %v117 = vadd.f32 %v31, %v111
  %v118 = vadd.f32 %v32, %v114
  %vm119 = vcmask 261120
  %120 = vst.msk [vmem:[#allocation2] sm:$0xff] %vm119, %v117
  %121 = vst.msk [vmem:[#allocation2 + $0x8] sm:$0xff] %vm119, %v118
  // Predicated region
  $region30: #{transformer_forward.24} parent=0 // pred_check
    %p122 = pneg %p24
  $region31: #{transformer_forward.24} parent=0 // pred_check_branch
    %124 = sbr.rel (%p122) target = $region33
  $region32: #{transformer_forward.24} parent=0 // pred_region
    %v125 = vld [vmem:[#allocation2] sm:$0xff]
    %v126 = vld [vmem:[#allocation2 + $0x8] sm:$0xff]
    %v127 = vld [vmem:[%s2] sm:$0x1]
    %v129 = vlaneseq
    %v130 = vshrl.u32 %v129, 7
    %v131 = vsub.s32 0, %v130
    %v132 = vrot.slane %v127, %v131
    %v134 = vadd.f32 %v125, %v132
    %v135 = vadd.f32 %v126, %v132
    %v136 = vld [vmem:[%s3] sm:$0xf]
    %v137 = vld [vmem:[%s3 + $0x4] sm:$0xf]
    %v138 = vunpack.c.l.bf16 %v136
    %v139 = vunpack.c.l.bf16 %v137
    %v140 = vadd.f32 %v134, %v138
    %v141 = vadd.f32 %v135, %v139
    %v142 = vsel %vm119, %v140, 0.0
    %143 = vadd.xlane.f32.xlu0 %v142
    %v144 = vpop.xlane.xlu0 %143
    %v145 = vsel %vm119, %v141, 0.0
    %146 = vadd.xlane.f32.xlu0 %v145
    %v147 = vpop.xlane.xlu0 %146
    %v148 = vrcp.pop 32.0
    %v149 = vmul.f32 %v144, %v148
    %v150 = vmul.f32 %v147, %v148
    %v151 = vsub.f32 %v140, %v149
    %v152 = vsub.f32 %v141, %v150
    %v153 = vmul.f32 %v151, %v151
    %v154 = vmul.f32 %v152, %v152
    %v155 = vsel %vm119, %v153, 0.0
    %156 = vadd.xlane.f32.xlu0 %v155
    %v157 = vpop.xlane.xlu0 %156
    %v158 = vsel %vm119, %v154, 0.0
    %159 = vadd.xlane.f32.xlu0 %v158
    %v160 = vpop.xlane.xlu0 %159
    %v161 = vmul.f32 %v157, %v148
    %v162 = vmul.f32 %v160, %v148
    %v163 = vadd.f32 %v161, 1e-05
    %v164 = vadd.f32 %v162, 1e-05
    %v165 = vrsqrt.pop %v163
    %v166 = vrsqrt.pop %v164
    %v167 = vmul.f32 %v151, %v165
    %v168 = vmul.f32 %v152, %v166
    %v169 = vld [vmem:[%s4] sm:$0x1]
    %v171 = vlaneseq
    %v172 = vshrl.u32 %v171, 7
    %v173 = vsub.s32 0, %v172
    %v174 = vrot.slane %v169, %v173
    %v176 = vmul.f32 %v167, %v174
    %v177 = vmul.f32 %v168, %v174
    %v178 = vld [vmem:[%s5] sm:$0x1]
    %v180 = vlaneseq
    %v181 = vshrl.u32 %v180, 7
    %v182 = vsub.s32 0, %v181
    %v183 = vrot.slane %v178, %v182
    %v185 = vadd.f32 %v176, %v183
    %v186 = vadd.f32 %v177, %v183
    %v187 = vpack.c.bf16 %v186, %v185
    %v189 = vunpack.c.l.b16 %v187
    %v190 = vunpack.c.h.b16 %v187
    %v191 = vpack.c.b16 %v189, %v189
    %v192 = vpack.c.b16 %v190, %v190
    %vm195 = vcmask 257024
    %196 = vst.msk [vmem:[%s6] sm:$0xf] %vm195, %v191
    %197 = vst.msk [vmem:[%s6 + $0x4] sm:$0xf] %vm195, %v192
  $region33: #{transformer_forward.24} parent=0 // pred_fallthru
    _
  // Predicated region
  $region34: #{transformer_forward.24} parent=0 // pred_check
    _
  $region35: #{transformer_forward.24} parent=0 // pred_check_branch
    %199 = sbr.rel (0) target = $region37
  $region36: #{transformer_forward.24} parent=0 // pred_region
    _
  $region37: #{transformer_forward.24} parent=0 // pred_fallthru
    _
  // Predicated region
  $region38: #{transformer_forward.24} parent=0 // pred_check
    _
  $region39: #{transformer_forward.24} parent=0 // pred_check_branch
    %201 = sbr.rel (0) target = $region41
  $region40: #{transformer_forward.24} parent=0 // pred_region
    _
  $region41: #{transformer_forward.24} parent=0 // pred_fallthru
    _

// kernel: transformer_forward.29
$region0: #{transformer_forward.29}
  #allocation0 [shape = 'u32[]', space=smem, size = 0x4, offset = 0x4, fixed_abs, tag = 'smem constant byte address 0x4 - core index']
  #allocation1 [shape = 'u32[144,128]{1,0:T(1,128)}', space=vmem, size = 0x12000, scoped, tag = 'internal scratch']
  %s0 = inlined_call_operand.vmem [shape: bf16[2,8,32], index: 0, kind: input, shape index: {}]
  %s1 = inlined_call_operand.vmem [shape: bf16[32,96], index: 1, kind: input, shape index: {}]
  %s2 = inlined_call_operand.vmem [shape: bf16[2,8,32], index: 2, kind: output, shape index: {}]
  %s3 = sld [smem:[#allocation0]]
  $region41: #{transformer_forward.29} parent=0
    _
  %s5 = ssub.s32 1, %s3
  %s6 = scalar_select 0, %s5, %s3
  loop: start=0, step=1, limit=4
  $region2: #{transformer_forward.29} parent=0 // loop_pre_header
    _
  $region3: #{transformer_forward.29} parent=0 // loop_header
    %s8 = sphi 0, %s12
    %p9 = scmp.ge.s32.totalorder %s8, 4
    %s18 = sphi 0, %s20
    %s21 = sphi 0, %s18
    %s22 = sphi 0, %s21
    %s38 = sphi 0, %s22
    %s42 = sphi 0, %s42
    %s44 = sphi 0, %s42
    %s45 = sphi 0, %s44
    %s59 = sphi 0, %s45
    %s65 = sphi 0, %s67
    %s68 = sphi 0, %s65
    %s69 = sphi 0, %s68
    %s85 = sphi 0, %s69
  $region4: #{transformer_forward.29} parent=0 // loop_header_branch
    %11 = sbr.rel (%p9) target = $region8
  $region5: #{transformer_forward.29} parent=0 // loop_body
    %s13 = ssub.s32 %s8, 1
    %s14 = ssub.s32 %s8, 2
    %s15 = sadd.s32 %s8, 1
    %s16 = ssub.s32 %s8, %s15
    %p17 = scmp.eq.s32.totalorder %s16, 0
    %s19 = sadd.s32 %s18, 1
    %s20 = scalar_select %p17, %s18, %s19
    %p23 = pneg %p17
    %p24 = scmp.eq.s32.totalorder %s8, 1
    %p25 = por %p23, %p24
    %p26 = scmp.ne.s32.totalorder %s18, %s21
    %p27 = scmp.eq.s32.totalorder %s8, 0
    %p28 = por %p26, %p27
    %p29 = scmp.ne.s32.totalorder %s18, %s21
    %p30 = scmp.eq.s32.totalorder %s13, 1
    %p31 = por %p29, %p30
    %p32 = scmp.ne.s32.totalorder %s21, %s22
    %p33 = scmp.eq.s32.totalorder %s13, 0
    %p34 = por %p32, %p33
    %p35 = scmp.ne.s32.totalorder %s21, %s22
    %p36 = scmp.eq.s32.totalorder %s14, 1
    %p37 = por %p35, %p36
    %p39 = scmp.ne.s32.totalorder %s22, %s38
    %p40 = scmp.eq.s32.totalorder %s14, 0
    %p41 = por %p39, %p40
    %s43 = sadd.s32 %s42, 1
    %p46 = scmp.eq.s32.totalorder %s8, 1
    %p47 = scmp.ne.s32.totalorder %s42, %s44
    %p48 = scmp.eq.s32.totalorder %s8, 0
    %p49 = por %p47, %p48
    %p50 = scmp.ne.s32.totalorder %s42, %s44
    %p51 = scmp.eq.s32.totalorder %s13, 1
    %p52 = por %p50, %p51
    %p53 = scmp.ne.s32.totalorder %s44, %s45
    %p54 = scmp.eq.s32.totalorder %s13, 0
    %p55 = por %p53, %p54
    %p56 = scmp.ne.s32.totalorder %s44, %s45
    %p57 = scmp.eq.s32.totalorder %s14, 1
    %p58 = por %p56, %p57
    %p60 = scmp.ne.s32.totalorder %s45, %s59
    %p61 = scmp.eq.s32.totalorder %s14, 0
    %p62 = por %p60, %p61
    %s63 = ssub.s32 %s8, %s15
    %p64 = scmp.eq.s32.totalorder %s63, 0
    %s66 = sadd.s32 %s65, 1
    %s67 = scalar_select %p64, %s65, %s66
    %p70 = pneg %p64
    %p71 = scmp.eq.s32.totalorder %s8, 1
    %p72 = por %p70, %p71
    %p73 = scmp.ne.s32.totalorder %s65, %s68
    %p74 = scmp.eq.s32.totalorder %s8, 0
    %p75 = por %p73, %p74
    %p76 = scmp.ne.s32.totalorder %s65, %s68
    %p77 = scmp.eq.s32.totalorder %s13, 1
    %p78 = por %p76, %p77
    %p79 = scmp.ne.s32.totalorder %s68, %s69
    %p80 = scmp.eq.s32.totalorder %s13, 0
    %p81 = por %p79, %p80
    %p82 = scmp.ne.s32.totalorder %s68, %s69
    %p83 = scmp.eq.s32.totalorder %s14, 1
    %p84 = por %p82, %p83
    %p86 = scmp.ne.s32.totalorder %s69, %s85
    %p87 = scmp.eq.s32.totalorder %s14, 0
    %p88 = por %p86, %p87
    %p89 = scmp.le.s32.totalorder 1, %s8
    %p90 = scmp.lt.s32.totalorder %s8, 3
    %p91 = pnand %p89, %p90
    %p92 = pneg %p91
    // Predicated region
    $region9: #{transformer_forward.29} parent=5 // pred_check
      _
    $region10: #{transformer_forward.29} parent=5 // pred_check_branch
      %94 = sbr.rel (%p91) target = $region12
    $region11: #{transformer_forward.29} parent=5 // pred_region
      %s95 = ssub.s32 %s8, 1
      // Predicated region
      $region13: #{transformer_forward.29} parent=11 // pred_check
        %p96 = pneg %p55
      $region14: #{transformer_forward.29} parent=11 // pred_check_branch
        %98 = sbr.rel (%p96) target = $region16
      $region15: #{transformer_forward.29} parent=11 // pred_region
        _
      $region16: #{transformer_forward.29} parent=11 // pred_fallthru
        _
    $region12: #{transformer_forward.29} parent=5 // pred_fallthru
      _
    %p99 = scmp.lt.s32.totalorder %s8, 2
    // Predicated region
    $region17: #{transformer_forward.29} parent=5 // pred_check
      %p100 = pneg %p99
    $region18: #{transformer_forward.29} parent=5 // pred_check_branch
      %102 = sbr.rel (%p100) target = $region20
    $region19: #{transformer_forward.29} parent=5 // pred_region
      // Predicated region
      $region21: #{transformer_forward.29} parent=19 // pred_check
        %p103 = pneg %p28
      $region22: #{transformer_forward.29} parent=19 // pred_check_branch
        %105 = sbr.rel (%p103) target = $region24
      $region23: #{transformer_forward.29} parent=19 // pred_region
        %p106 = scmp.lt.s32.totalorder %s8, 1
        %s107 = scalar_select %p106, %s8, 1
        %s108 = smul.addr %s107, 4
        %s109 = scalar_lea.vmem %s0, %s108
      $region24: #{transformer_forward.29} parent=19 // pred_fallthru
        _
    $region20: #{transformer_forward.29} parent=5 // pred_fallthru
      _
    %p110 = scmp.le.s32.totalorder 1, %s8
    %p111 = scmp.lt.s32.totalorder %s8, 3
    %p112 = pnand %p110, %p111
    %p113 = pneg %p112
    // Predicated region
    $region25: #{transformer_forward.29} parent=5 // pred_check
      _
    $region26: #{transformer_forward.29} parent=5 // pred_check_branch
      %115 = sbr.rel (%p112) target = $region28
    $region27: #{transformer_forward.29} parent=5 // pred_region
      %s116 = ssub.s32 %s8, 1
      %p117 = scmp.lt.s32.totalorder %s13, 1
      %s118 = scalar_select %p117, %s13, 1
      %s119 = smul.addr %s118, 4
      %s120 = scalar_lea.vmem %s0, %s119
      %p121 = pneg %p34
      %p122 = pneg %p31
      %p123 = pneg %p55
      %p124 = pneg %p52
      %p125 = pneg %p81
      %p126 = pneg %p78
      %p127 = scmp.lt.s32.totalorder %s13, 1
      %s128 = scalar_select %p127, %s13, 1
      %s129 = smul.addr %s128, 4
      %s130 = scalar_lea.vmem %s2, %s129
      %p131 = scmp.lt.s32.totalorder %s13, 1
      %s132 = scalar_select %p131, %s13, 1
      %s133 = smul.addr %s132, 4
      %s134 = scalar_lea.vmem %s0, %s133
      %p135 = scmp.lt.s32.totalorder %s13, 1
      %s136 = scalar_select %p135, %s13, 1
      %s137 = smul.addr %s136, 4
      %s138 = scalar_lea.vmem %s2, %s137
      %v140 = vld [vmem:[%s134] sm:$0xf]
      %v141 = vld [vmem:[%s1] sm:$0xf]
      %v142 = vld [vmem:[%s1 + $0x4] sm:$0xf]
      %v143 = vld [vmem:[%s1 + $0x8] sm:$0xf]
      %v144 = vld [vmem:[%s1 + $0xc] sm:$0xf]
      %v149 = vunpack.c.l.b16 %v141
      %v150 = vunpack.c.l.b16 %v142
      %v151 = vunpack.c.l.b16 %v143
      %v152 = vunpack.c.l.b16 %v144
      %v153 = vpack.c.b16 %v150, %v149
      %v154 = vpack.c.b16 %v152, %v151
      %vm157 = vcmask 261120
      %v159 = vsel %vm157, %v140, 0
      %161 = vmatprep.subr.bf16.mxu0 0
      %162 = vmatpush1.bf16.msra.mxu0 %v153
      %163 = vmatprep.subr.bf16.mxu0 0
      %164 = vmatpush1.bf16.msra.mxu0 %v154
      %165 = vmatprep.subr.bf16.mxu0 0
      %166 = vmatpush1.bf16.msra.mxu0 0
      %167 = vmatprep.subr.bf16.mxu0 0
      %168 = vmatpush1.bf16.msra.mxu0 0
      %169 = vmatprep.subr.bf16.mxu0 0
      %170 = vmatpush1.bf16.msra.mxu0 0
      %171 = vmatprep.subr.bf16.mxu0 0
      %172 = vmatpush1.bf16.msra.mxu0 0
      %173 = vmatprep.subr.bf16.mxu0 0
      %174 = vmatpush1.bf16.msra.mxu0 0
      %175 = vmatprep.subr.bf16.mxu0 0
      %176 = vmatpush1.bf16.msra.mxu0 0
      %177 = vmatprep.subr.bf16.mxu0 0
      %178 = vmatpush1.bf16.msra.mxu0 0
      %179 = vmatprep.subr.bf16.mxu0 0
      %180 = vmatpush1.bf16.msra.mxu0 0
      %181 = vmatprep.subr.bf16.mxu0 0
      %182 = vmatpush1.bf16.msra.mxu0 0
      %183 = vmatprep.subr.bf16.mxu0 0
      %184 = vmatpush1.bf16.msra.mxu0 0
      %185 = vmatprep.subr.bf16.mxu0 0
      %186 = vmatpush1.bf16.msra.mxu0 0
      %187 = vmatprep.subr.bf16.mxu0 0
      %188 = vmatpush1.bf16.msra.mxu0 0
      %189 = vmatprep.subr.bf16.mxu0 0
      %190 = vmatpush1.bf16.msra.mxu0 0
      %191 = vmatprep.subr.bf16.mxu0 0
      %192 = vmatpush1.bf16.msra.mxu0 0
      %193 = vmatprep.mubr.bf16.mxu0 0
      %194 = vmatmul.mubr.bf16.gmra.mrb[0].mxu0 %v159
      %v195 = vpop.f32.mrb[0].mxu0
      %v196 = vadd.f32 0.0, %v195
      %v197 = vpop.f32.mrb[0].mxu0
      %v198 = vpop.f32.mrb[0].mxu0
      %v199 = vpop.f32.mrb[0].mxu0
      %200 = vdwg.mxu0
      %v201 = vpack.c.bf16 %v196, %v196
      %203 = vrot.lane.b32.xlu0 %v201, 96
      %v204 = vpop.permute.xlu0 %203
      %vm205 = vcmask 130048
      %v207 = vsel %vm205, %v201, 0
      %v210 = vsel %vm205, %v204, 0
      %212 = vmatprep.subr.bf16.mxu0 0
      %213 = vmatpush1.bf16.xpose.msra.mxu0 %v210
      %214 = vmatprep.subr.bf16.mxu0 0
      %215 = vmatpush1.bf16.xpose.msra.mxu0 0
      %216 = vmatprep.subr.bf16.mxu0 0
      %217 = vmatpush1.bf16.xpose.msra.mxu0 0
      %218 = vmatprep.subr.bf16.mxu0 0
      %219 = vmatpush1.bf16.xpose.msra.mxu0 0
      %220 = vmatprep.subr.bf16.mxu0 0
      %221 = vmatpush1.bf16.xpose.msra.mxu0 0
      %222 = vmatprep.subr.bf16.mxu0 0
      %223 = vmatpush1.bf16.xpose.msra.mxu0 0
      %224 = vmatprep.subr.bf16.mxu0 0
      %225 = vmatpush1.bf16.xpose.msra.mxu0 0
      %226 = vmatprep.subr.bf16.mxu0 0
      %227 = vmatpush1.bf16.xpose.msra.mxu0 0
      %228 = vmatprep.subr.bf16.mxu0 0
      %229 = vmatpush1.bf16.xpose.msra.mxu0 0
      %230 = vmatprep.subr.bf16.mxu0 0
      %231 = vmatpush1.bf16.xpose.msra.mxu0 0
      %232 = vmatprep.subr.bf16.mxu0 0
      %233 = vmatpush1.bf16.xpose.msra.mxu0 0
      %234 = vmatprep.subr.bf16.mxu0 0
      %235 = vmatpush1.bf16.xpose.msra.mxu0 0
      %236 = vmatprep.subr.bf16.mxu0 0
      %237 = vmatpush1.bf16.xpose.msra.mxu0 0
      %238 = vmatprep.subr.bf16.mxu0 0
      %239 = vmatpush1.bf16.xpose.msra.mxu0 0
      %240 = vmatprep.subr.bf16.mxu0 0
      %241 = vmatpush1.bf16.xpose.msra.mxu0 0
      %242 = vmatprep.subr.bf16.mxu0 0
      %243 = vmatpush1.bf16.xpose.msra.mxu0 0
      %244 = vmatprep.mubr.bf16.mxu0 0
      %245 = vmatmul.mubr.bf16.gmra.mrb[0].mxu0 %v207
      %v246 = vpop.f32.mrb[0].mxu0
      %v247 = vadd.f32 0.0, %v246
      %v248 = vpop.f32.mrb[0].mxu0
      %v249 = vpop.f32.mrb[0].mxu0
      %v250 = vpop.f32.mrb[0].mxu0
      %251 = vdwg.mxu0
      %v252 = vmul.f32 %v247, 0.25
      %v253 = vlaneseq
      %v254 = vshrl.u32 %v253, 7
      %v255 = vlaneseq
      %v256 = vand.u32 %v255, 127
      %vm257 = vcmp.gt.s32.totalorder %v256, %v254
      %v258 = vsel %vm257, -inf, %v252
      %vm259 = vcmask 64512
      %v260 = vsel %vm259, %v258, -inf
      %261 = vmax.xlane.f32.xlu0 %v260
      %v262 = vpop.xlane.xlu0 %261
      %v263 = vsub.f32 %v258, %v262
      %v264 = vmul.f32 %v263, 1.442695
      %v265 = vpow.pop %v264
      %v266 = vsel %vm259, %v265, 0.0
      %267 = vadd.xlane.f32.xlu0 %v266
      %v268 = vpop.xlane.xlu0 %267
      %v269 = vrcp.pop %v268
      %v270 = vmul.f32 %v265, %v269
      %v271 = vpack.c.bf16 %v270, %v270
      %272 = vrot.lane.b32.xlu0 %v201, 64
      %v273 = vpop.permute.xlu0 %272
      %v275 = vsel %vm259, %v271, 0
      %vm277 = vcmask 1043456
      %v279 = vsel %vm277, %v273, 0
      %281 = vmatprep.subr.bf16.mxu0 0
      %282 = vmatpush1.bf16.msra.mxu0 %v279
      %283 = vmatprep.subr.bf16.mxu0 0
      %284 = vmatpush1.bf16.msra.mxu0 0
      %285 = vmatprep.subr.bf16.mxu0 0
      %286 = vmatpush1.bf16.msra.mxu0 0
      %287 = vmatprep.subr.bf16.mxu0 0
      %288 = vmatpush1.bf16.msra.mxu0 0
      %289 = vmatprep.subr.bf16.mxu0 0
      %290 = vmatpush1.bf16.msra.mxu0 0
      %291 = vmatprep.subr.bf16.mxu0 0
      %292 = vmatpush1.bf16.msra.mxu0 0
      %293 = vmatprep.subr.bf16.mxu0 0
      %294 = vmatpush1.bf16.msra.mxu0 0
      %295 = vmatprep.subr.bf16.mxu0 0
      %296 = vmatpush1.bf16.msra.mxu0 0
      %297 = vmatprep.subr.bf16.mxu0 0
      %298 = vmatpush1.bf16.msra.mxu0 0
      %299 = vmatprep.subr.bf16.mxu0 0
      %300 = vmatpush1.bf16.msra.mxu0 0
      %301 = vmatprep.subr.bf16.mxu0 0
      %302 = vmatpush1.bf16.msra.mxu0 0
      %303 = vmatprep.subr.bf16.mxu0 0
      %304 = vmatpush1.bf16.msra.mxu0 0
      %305 = vmatprep.subr.bf16.mxu0 0
      %306 = vmatpush1.bf16.msra.mxu0 0
      %307 = vmatprep.subr.bf16.mxu0 0
      %308 = vmatpush1.bf16.msra.mxu0 0
      %309 = vmatprep.subr.bf16.mxu0 0
      %310 = vmatpush1.bf16.msra.mxu0 0
      %311 = vmatprep.subr.bf16.mxu0 0
      %312 = vmatpush1.bf16.msra.mxu0 0
      %313 = vmatprep.mubr.bf16.mxu0 0
      %314 = vmatmul.mubr.bf16.gmra.mrb[0].mxu0 %v275
      %v315 = vpop.f32.mrb[0].mxu0
      %v316 = vadd.f32 0.0, %v315
      %v317 = vpop.f32.mrb[0].mxu0
      %v318 = vpop.f32.mrb[0].mxu0
      %v319 = vpop.f32.mrb[0].mxu0
      %320 = vdwg.mxu0
      %v321 = vpack.c.bf16 %v316, %v316
      %vm322 = vcmask 125952
      %323 = vst.msk [vmem:[%s138] sm:$0xf] %vm322, %v321
      %324 = vrot.lane.b32.xlu0 %v201, 112
      %v325 = vpop.permute.xlu0 %324
      %326 = vrot.lane.b32.xlu0 %v201, 80
      %v327 = vpop.permute.xlu0 %326
      %v329 = vsel %vm205, %v325, 0
      %v332 = vsel %vm205, %v327, 0
      %334 = vmatprep.subr.bf16.mxu0 0
      %335 = vmatpush1.bf16.xpose.msra.mxu0 %v332
      %336 = vmatprep.subr.bf16.mxu0 0
      %337 = vmatpush1.bf16.xpose.msra.mxu0 0
      %338 = vmatprep.subr.bf16.mxu0 0
      %339 = vmatpush1.bf16.xpose.msra.mxu0 0
      %340 = vmatprep.subr.bf16.mxu0 0
      %341 = vmatpush1.bf16.xpose.msra.mxu0 0
      %342 = vmatprep.subr.bf16.mxu0 0
      %343 = vmatpush1.bf16.xpose.msra.mxu0 0
      %344 = vmatprep.subr.bf16.mxu0 0
      %345 = vmatpush1.bf16.xpose.msra.mxu0 0
      %346 = vmatprep.subr.bf16.mxu0 0
      %347 = vmatpush1.bf16.xpose.msra.mxu0 0
      %348 = vmatprep.subr.bf16.mxu0 0
      %349 = vmatpush1.bf16.xpose.msra.mxu0 0
      %350 = vmatprep.subr.bf16.mxu0 0
      %351 = vmatpush1.bf16.xpose.msra.mxu0 0
      %352 = vmatprep.subr.bf16.mxu0 0
      %353 = vmatpush1.bf16.xpose.msra.mxu0 0
      %354 = vmatprep.subr.bf16.mxu0 0
      %355 = vmatpush1.bf16.xpose.msra.mxu0 0
      %356 = vmatprep.subr.bf16.mxu0 0
      %357 = vmatpush1.bf16.xpose.msra.mxu0 0
      %358 = vmatprep.subr.bf16.mxu0 0
      %359 = vmatpush1.bf16.xpose.msra.mxu0 0
      %360 = vmatprep.subr.bf16.mxu0 0
      %361 = vmatpush1.bf16.xpose.msra.mxu0 0
      %362 = vmatprep.subr.bf16.mxu0 0
      %363 = vmatpush1.bf16.xpose.msra.mxu0 0
      %364 = vmatprep.subr.bf16.mxu0 0
      %365 = vmatpush1.bf16.xpose.msra.mxu0 0
      %366 = vmatprep.mubr.bf16.mxu0 0
      %367 = vmatmul.mubr.bf16.gmra.mrb[0].mxu0 %v329
      %v368 = vpop.f32.mrb[0].mxu0
      %v369 = vadd.f32 0.0, %v368
      %v370 = vpop.f32.mrb[0].mxu0
      %v371 = vpop.f32.mrb[0].mxu0
      %v372 = vpop.f32.mrb[0].mxu0
      %373 = vdwg.mxu0
      %v374 = vmul.f32 %v369, 0.25
      %v375 = vsel %vm257, -inf, %v374
      %v376 = vsel %vm259, %v375, -inf
      %377 = vmax.xlane.f32.xlu0 %v376
      %v378 = vpop.xlane.xlu0 %377
      %v379 = vsub.f32 %v375, %v378
      %v380 = vmul.f32 %v379, 1.442695
      %v381 = vpow.pop %v380
      %v382 = vsel %vm259, %v381, 0.0
      %383 = vadd.xlane.f32.xlu0 %v382
      %v384 = vpop.xlane.xlu0 %383
      %v385 = vrcp.pop %v384
      %v386 = vmul.f32 %v381, %v385
      %v387 = vpack.c.bf16 %v386, %v386
      %388 = vrot.lane.b32.xlu0 %v201, 48
      %v389 = vpop.permute.xlu0 %388
      %v391 = vsel %vm259, %v387, 0
      %v394 = vsel %vm277, %v389, 0
      %396 = vmatprep.subr.bf16.mxu0 0
      %397 = vmatpush1.bf16.msra.mxu0 %v394
      %398 = vmatprep.subr.bf16.mxu0 0
      %399 = vmatpush1.bf16.msra.mxu0 0
      %400 = vmatprep.subr.bf16.mxu0 0
      %401 = vmatpush1.bf16.msra.mxu0 0
      %402 = vmatprep.subr.bf16.mxu0 0
      %403 = vmatpush1.bf16.msra.mxu0 0
      %404 = vmatprep.subr.bf16.mxu0 0
      %405 = vmatpush1.bf16.msra.mxu0 0
      %406 = vmatprep.subr.bf16.mxu0 0
      %407 = vmatpush1.bf16.msra.mxu0 0
      %408 = vmatprep.subr.bf16.mxu0 0
      %409 = vmatpush1.bf16.msra.mxu0 0
      %410 = vmatprep.subr.bf16.mxu0 0
      %411 = vmatpush1.bf16.msra.mxu0 0
      %412 = vmatprep.subr.bf16.mxu0 0
      %413 = vmatpush1.bf16.msra.mxu0 0
      %414 = vmatprep.subr.bf16.mxu0 0
      %415 = vmatpush1.bf16.msra.mxu0 0
      %416 = vmatprep.subr.bf16.mxu0 0
      %417 = vmatpush1.bf16.msra.mxu0 0
      %418 = vmatprep.subr.bf16.mxu0 0
      %419 = vmatpush1.bf16.msra.mxu0 0
      %420 = vmatprep.subr.bf16.mxu0 0
      %421 = vmatpush1.bf16.msra.mxu0 0
      %422 = vmatprep.subr.bf16.mxu0 0
      %423 = vmatpush1.bf16.msra.mxu0 0
      %424 = vmatprep.subr.bf16.mxu0 0
      %425 = vmatpush1.bf16.msra.mxu0 0
      %426 = vmatprep.subr.bf16.mxu0 0
      %427 = vmatpush1.bf16.msra.mxu0 0
      %428 = vmatprep.mubr.bf16.mxu0 0
      %429 = vmatmul.mubr.bf16.gmra.mrb[0].mxu0 %v391
      %v430 = vpop.f32.mrb[0].mxu0
      %v431 = vadd.f32 0.0, %v430
      %v432 = vpop.f32.mrb[0].mxu0
      %v433 = vpop.f32.mrb[0].mxu0
      %v434 = vpop.f32.mrb[0].mxu0
      %435 = vdwg.mxu0
      %v436 = vpack.c.bf16 %v431, %v431
      %v438 = vunpack.c.l.b16 %v436
      %v439 = vpack.c.b16 %v438, %v438
      %440 = vrot.lane.b32.xlu0 %v439, 16
      %v441 = vpop.permute.xlu0 %440
      %vm443 = vcmask 257152
      %444 = vst.msk [vmem:[%s138] sm:$0xf] %vm443, %v441
      %p445 = scmp.lt.s32.totalorder %s13, 1
      %s446 = scalar_select %p445, %s13, 1
      %s447 = smul.addr %s446, 4
      %s448 = scalar_lea.vmem %s2, %s447
      // Predicated region
      $region29: #{transformer_forward.29} parent=27 // pred_check
        %p449 = pneg %p78
      $region30: #{transformer_forward.29} parent=27 // pred_check_branch
        %451 = sbr.rel (%p449) target = $region32
      $region31: #{transformer_forward.29} parent=27 // pred_region
        _
      $region32: #{transformer_forward.29} parent=27 // pred_fallthru
        _
    $region28: #{transformer_forward.29} parent=5 // pred_fallthru
      _
    %p452 = scmp.le.s32.totalorder 2, %s8
    // Predicated region
    $region33: #{transformer_forward.29} parent=5 // pred_check
      %p453 = pneg %p452
    $region34: #{transformer_forward.29} parent=5 // pred_check_branch
      %455 = sbr.rel (%p453) target = $region36
    $region35: #{transformer_forward.29} parent=5 // pred_region
      %s456 = ssub.s32 %s8, 2
      // Predicated region
      $region37: #{transformer_forward.29} parent=35 // pred_check
        %p457 = pneg %p84
      $region38: #{transformer_forward.29} parent=35 // pred_check_branch
        %459 = sbr.rel (%p457) target = $region40
      $region39: #{transformer_forward.29} parent=35 // pred_region
        %p460 = scmp.lt.s32.totalorder %s14, 1
        %s461 = scalar_select %p460, %s14, 1
        %s462 = smul.addr %s461, 4
        %s463 = scalar_lea.vmem %s2, %s462
      $region40: #{transformer_forward.29} parent=35 // pred_fallthru
        _
    $region36: #{transformer_forward.29} parent=5 // pred_fallthru
      _
  $region6: #{transformer_forward.29} parent=0 // loop_footer
    %s12 = sadd.s32 1, %s8
  $region7: #{transformer_forward.29} parent=0 // loop_footer_branch
    %7 = sbr.rel target = $region3
  $region8: #{transformer_forward.29} parent=0 // loop_exit
    _

// kernel: transformer_forward.31
$region0: #{transformer_forward.31}
  #allocation0 [shape = 'u32[]', space=smem, size = 0x4, offset = 0x4, fixed_abs, tag = 'smem constant byte address 0x4 - core index']
  #allocation1 [shape = 'u32[144,128]{1,0:T(1,128)}', space=vmem, size = 0x12000, scoped, tag = 'internal scratch']
  %s0 = inlined_call_operand.vmem [shape: bf16[2,8,32], index: 0, kind: input, shape index: {}]
  %s1 = inlined_call_operand.vmem [shape: bf16[2,8,32], index: 1, kind: input, shape index: {}]
  %s2 = inlined_call_operand.vmem [shape: bf16[32,96], index: 2, kind: input, shape index: {}]
  %s3 = inlined_call_operand.vmem [shape: bf16[2,8,32], index: 3, kind: output, shape index: {}]
  %s4 = sld [smem:[#allocation0]]
  $region45: #{transformer_forward.31} parent=0
    _
  %s6 = ssub.s32 1, %s4
  %s7 = scalar_select 0, %s6, %s4
  loop: start=0, step=1, limit=4
  $region2: #{transformer_forward.31} parent=0 // loop_pre_header
    _
  $region3: #{transformer_forward.31} parent=0 // loop_header
    %s9 = sphi 0, %s13
    %p10 = scmp.ge.s32.totalorder %s9, 4
    %s19 = sphi 0, %s21
    %s22 = sphi 0, %s19
    %s23 = sphi 0, %s22
    %s39 = sphi 0, %s23
    %s45 = sphi 0, %s47
    %s48 = sphi 0, %s45
    %s49 = sphi 0, %s48
    %s65 = sphi 0, %s49
    %s69 = sphi 0, %s69
    %s71 = sphi 0, %s69
    %s72 = sphi 0, %s71
    %s86 = sphi 0, %s72
    %s92 = sphi 0, %s94
    %s95 = sphi 0, %s92
    %s96 = sphi 0, %s95
    %s112 = sphi 0, %s96
  $region4: #{transformer_forward.31} parent=0 // loop_header_branch
    %12 = sbr.rel (%p10) target = $region8
  $region5: #{transformer_forward.31} parent=0 // loop_body
    %s14 = ssub.s32 %s9, 1
    %s15 = ssub.s32 %s9, 2
    %s16 = sadd.s32 %s9, 1
    %s17 = ssub.s32 %s9, %s16
    %p18 = scmp.eq.s32.totalorder %s17, 0
    %s20 = sadd.s32 %s19, 1
    %s21 = scalar_select %p18, %s19, %s20
    %p24 = pneg %p18
    %p25 = scmp.eq.s32.totalorder %s9, 1
    %p26 = por %p24, %p25
    %p27 = scmp.ne.s32.totalorder %s19, %s22
    %p28 = scmp.eq.s32.totalorder %s9, 0
    %p29 = por %p27, %p28
    %p30 = scmp.ne.s32.totalorder %s19, %s22
    %p31 = scmp.eq.s32.totalorder %s14, 1
    %p32 = por %p30, %p31
    %p33 = scmp.ne.s32.totalorder %s22, %s23
    %p34 = scmp.eq.s32.totalorder %s14, 0
    %p35 = por %p33, %p34
    %p36 = scmp.ne.s32.totalorder %s22, %s23
    %p37 = scmp.eq.s32.totalorder %s15, 1
    %p38 = por %p36, %p37
    %p40 = scmp.ne.s32.totalorder %s23, %s39
    %p41 = scmp.eq.s32.totalorder %s15, 0
    %p42 = por %p40, %p41
    %s43 = ssub.s32 %s9, %s16
    %p44 = scmp.eq.s32.totalorder %s43, 0
    %s46 = sadd.s32 %s45, 1
    %s47 = scalar_select %p44, %s45, %s46
    %p50 = pneg %p44
    %p51 = scmp.eq.s32.totalorder %s9, 1
    %p52 = por %p50, %p51
    %p53 = scmp.ne.s32.totalorder %s45, %s48
    %p54 = scmp.eq.s32.totalorder %s9, 0
    %p55 = por %p53, %p54
    %p56 = scmp.ne.s32.totalorder %s45, %s48
    %p57 = scmp.eq.s32.totalorder %s14, 1
    %p58 = por %p56, %p57
    %p59 = scmp.ne.s32.totalorder %s48, %s49
    %p60 = scmp.eq.s32.totalorder %s14, 0
    %p61 = por %p59, %p60
    %p62 = scmp.ne.s32.totalorder %s48, %s49
    %p63 = scmp.eq.s32.totalorder %s15, 1
    %p64 = por %p62, %p63
    %p66 = scmp.ne.s32.totalorder %s49, %s65
    %p67 = scmp.eq.s32.totalorder %s15, 0
    %p68 = por %p66, %p67
    %s70 = sadd.s32 %s69, 1
    %p73 = scmp.eq.s32.totalorder %s9, 1
    %p74 = scmp.ne.s32.totalorder %s69, %s71
    %p75 = scmp.eq.s32.totalorder %s9, 0
    %p76 = por %p74, %p75
    %p77 = scmp.ne.s32.totalorder %s69, %s71
    %p78 = scmp.eq.s32.totalorder %s14, 1
    %p79 = por %p77, %p78
    %p80 = scmp.ne.s32.totalorder %s71, %s72
    %p81 = scmp.eq.s32.totalorder %s14, 0
    %p82 = por %p80, %p81
    %p83 = scmp.ne.s32.totalorder %s71, %s72
    %p84 = scmp.eq.s32.totalorder %s15, 1
    %p85 = por %p83, %p84
    %p87 = scmp.ne.s32.totalorder %s72, %s86
    %p88 = scmp.eq.s32.totalorder %s15, 0
    %p89 = por %p87, %p88
    %s90 = ssub.s32 %s9, %s16
    %p91 = scmp.eq.s32.totalorder %s90, 0
    %s93 = sadd.s32 %s92, 1
    %s94 = scalar_select %p91, %s92, %s93
    %p97 = pneg %p91
    %p98 = scmp.eq.s32.totalorder %s9, 1
    %p99 = por %p97, %p98
    %p100 = scmp.ne.s32.totalorder %s92, %s95
    %p101 = scmp.eq.s32.totalorder %s9, 0
    %p102 = por %p100, %p101
    %p103 = scmp.ne.s32.totalorder %s92, %s95
    %p104 = scmp.eq.s32.totalorder %s14, 1
    %p105 = por %p103, %p104
    %p106 = scmp.ne.s32.totalorder %s95, %s96
    %p107 = scmp.eq.s32.totalorder %s14, 0
    %p108 = por %p106, %p107
    %p109 = scmp.ne.s32.totalorder %s95, %s96
    %p110 = scmp.eq.s32.totalorder %s15, 1
    %p111 = por %p109, %p110
    %p113 = scmp.ne.s32.totalorder %s96, %s112
    %p114 = scmp.eq.s32.totalorder %s15, 0
    %p115 = por %p113, %p114
    %p116 = scmp.le.s32.totalorder 1, %s9
    %p117 = scmp.lt.s32.totalorder %s9, 3
    %p118 = pnand %p116, %p117
    %p119 = pneg %p118
    // Predicated region
    $region9: #{transformer_forward.31} parent=5 // pred_check
      _
    $region10: #{transformer_forward.31} parent=5 // pred_check_branch
      %121 = sbr.rel (%p118) target = $region12
    $region11: #{transformer_forward.31} parent=5 // pred_region
      %s122 = ssub.s32 %s9, 1
      // Predicated region
      $region13: #{transformer_forward.31} parent=11 // pred_check
        %p123 = pneg %p82
      $region14: #{transformer_forward.31} parent=11 // pred_check_branch
        %125 = sbr.rel (%p123) target = $region16
      $region15: #{transformer_forward.31} parent=11 // pred_region
        _
      $region16: #{transformer_forward.31} parent=11 // pred_fallthru
        _
    $region12: #{transformer_forward.31} parent=5 // pred_fallthru
      _
    %p126 = scmp.lt.s32.totalorder %s9, 2
    // Predicated region
    $region17: #{transformer_forward.31} parent=5 // pred_check
      %p127 = pneg %p126
    $region18: #{transformer_forward.31} parent=5 // pred_check_branch
      %129 = sbr.rel (%p127) target = $region20
    $region19: #{transformer_forward.31} parent=5 // pred_region
      // Predicated region
      $region21: #{transformer_forward.31} parent=19 // pred_check
        %p130 = pneg %p29
      $region22: #{transformer_forward.31} parent=19 // pred_check_branch
        %132 = sbr.rel (%p130) target = $region24
      $region23: #{transformer_forward.31} parent=19 // pred_region
        %p133 = scmp.lt.s32.totalorder %s9, 1
        %s134 = scalar_select %p133, %s9, 1
        %s135 = smul.addr %s134, 4
        %s136 = scalar_lea.vmem %s0, %s135
      $region24: #{transformer_forward.31} parent=19 // pred_fallthru
        _
      // Predicated region
      $region25: #{transformer_forward.31} parent=19 // pred_check
        %p137 = pneg %p55
      $region26: #{transformer_forward.31} parent=19 // pred_check_branch
        %139 = sbr.rel (%p137) target = $region28
      $region27: #{transformer_forward.31} parent=19 // pred_region
        %p140 = scmp.lt.s32.totalorder %s9, 1
        %s141 = scalar_select %p140, %s9, 1
        %s142 = smul.addr %s141, 4
        %s143 = scalar_lea.vmem %s1, %s142
      $region28: #{transformer_forward.31} parent=19 // pred_fallthru
        _
    $region20: #{transformer_forward.31} parent=5 // pred_fallthru
      _
    %p144 = scmp.le.s32.totalorder 1, %s9
    %p145 = scmp.lt.s32.totalorder %s9, 3
    %p146 = pnand %p144, %p145
    %p147 = pneg %p146
    // Predicated region
    $region29: #{transformer_forward.31} parent=5 // pred_check
      _
    $region30: #{transformer_forward.31} parent=5 // pred_check_branch
      %149 = sbr.rel (%p146) target = $region32
    $region31: #{transformer_forward.31} parent=5 // pred_region
      %s150 = ssub.s32 %s9, 1
      %p151 = scmp.lt.s32.totalorder %s14, 1
      %s152 = scalar_select %p151, %s14, 1
      %s153 = smul.addr %s152, 4
      %s154 = scalar_lea.vmem %s0, %s153
      %p155 = pneg %p35
      %p156 = pneg %p32
      %p157 = scmp.lt.s32.totalorder %s14, 1
      %s158 = scalar_select %p157, %s14, 1
      %s159 = smul.addr %s158, 4
      %s160 = scalar_lea.vmem %s1, %s159
      %p161 = pneg %p61
      %p162 = pneg %p58
      %p163 = pneg %p82
      %p164 = pneg %p79
      %p165 = pneg %p108
      %p166 = pneg %p105
      %p167 = scmp.lt.s32.totalorder %s14, 1
      %s168 = scalar_select %p167, %s14, 1
      %s169 = smul.addr %s168, 4
      %s170 = scalar_lea.vmem %s3, %s169
      %p171 = scmp.lt.s32.totalorder %s14, 1
      %s172 = scalar_select %p171, %s14, 1
      %s173 = smul.addr %s172, 4
      %s174 = scalar_lea.vmem %s0, %s173
      %p175 = scmp.lt.s32.totalorder %s14, 1
      %s176 = scalar_select %p175, %s14, 1
      %s177 = smul.addr %s176, 4
      %s178 = scalar_lea.vmem %s1, %s177
      %p179 = scmp.lt.s32.totalorder %s14, 1
      %s180 = scalar_select %p179, %s14, 1
      %s181 = smul.addr %s180, 4
      %s182 = scalar_lea.vmem %s3, %s181
      %v184 = vld [vmem:[%s174] sm:$0xf]
      %v185 = vld [vmem:[%s2] sm:$0xf]
      %v186 = vld [vmem:[%s2 + $0x4] sm:$0xf]
      %v187 = vld [vmem:[%s2 + $0x8] sm:$0xf]
      %v188 = vld [vmem:[%s2 + $0xc] sm:$0xf]
      %v193 = vunpack.c.l.b16 %v185
      %v194 = vunpack.c.l.b16 %v186
      %v195 = vunpack.c.l.b16 %v187
      %v196 = vunpack.c.l.b16 %v188
      %v197 = vpack.c.b16 %v194, %v193
      %v198 = vpack.c.b16 %v196, %v195
      %vm201 = vcmask 261120
      %v203 = vsel %vm201, %v184, 0
      %205 = vmatprep.subr.bf16.mxu0 0
      %206 = vmatpush1.bf16.msra.mxu0 %v197
      %207 = vmatprep.subr.bf16.mxu0 0
      %208 = vmatpush1.bf16.msra.mxu0 %v198
      %209 = vmatprep.subr.bf16.mxu0 0
      %210 = vmatpush1.bf16.msra.mxu0 0
      %211 = vmatprep.subr.bf16.mxu0 0
      %212 = vmatpush1.bf16.msra.mxu0 0
      %213 = vmatprep.subr.bf16.mxu0 0
      %214 = vmatpush1.bf16.msra.mxu0 0
      %215 = vmatprep.subr.bf16.mxu0 0
      %216 = vmatpush1.bf16.msra.mxu0 0
      %217 = vmatprep.subr.bf16.mxu0 0
      %218 = vmatpush1.bf16.msra.mxu0 0
      %219 = vmatprep.subr.bf16.mxu0 0
      %220 = vmatpush1.bf16.msra.mxu0 0
      %221 = vmatprep.subr.bf16.mxu0 0
      %222 = vmatpush1.bf16.msra.mxu0 0
      %223 = vmatprep.subr.bf16.mxu0 0
      %224 = vmatpush1.bf16.msra.mxu0 0
      %225 = vmatprep.subr.bf16.mxu0 0
      %226 = vmatpush1.bf16.msra.mxu0 0
      %227 = vmatprep.subr.bf16.mxu0 0
      %228 = vmatpush1.bf16.msra.mxu0 0
      %229 = vmatprep.subr.bf16.mxu0 0
      %230 = vmatpush1.bf16.msra.mxu0 0
      %231 = vmatprep.subr.bf16.mxu0 0
      %232 = vmatpush1.bf16.msra.mxu0 0
      %233 = vmatprep.subr.bf16.mxu0 0
      %234 = vmatpush1.bf16.msra.mxu0 0
      %235 = vmatprep.subr.bf16.mxu0 0
      %236 = vmatpush1.bf16.msra.mxu0 0
      %237 = vmatprep.mubr.bf16.mxu0 0
      %238 = vmatmul.mubr.bf16.gmra.mrb[0].mxu0 %v203
      %v239 = vpop.f32.mrb[0].mxu0
      %v240 = vadd.f32 0.0, %v239
      %v241 = vpop.f32.mrb[0].mxu0
      %v242 = vpop.f32.mrb[0].mxu0
      %v243 = vpop.f32.mrb[0].mxu0
      %244 = vdwg.mxu0
      %v245 = vpack.c.bf16 %v240, %v240
      %v246 = vld [vmem:[%s178] sm:$0xf]
      %247 = vrot.lane.b32.xlu0 %v197, 96
      %v248 = vpop.permute.xlu0 %247
      %249 = vrot.lane.b32.xlu0 %v198, 96
      %v250 = vpop.permute.xlu0 %249
      %v254 = vsel %vm201, %v246, 0
      %256 = vmatprep.subr.bf16.mxu0 0
      %257 = vmatpush1.bf16.msra.mxu0 %v248
      %258 = vmatprep.subr.bf16.mxu0 0
      %259 = vmatpush1.bf16.msra.mxu0 %v250
      %260 = vmatprep.subr.bf16.mxu0 0
      %261 = vmatpush1.bf16.msra.mxu0 0
      %262 = vmatprep.subr.bf16.mxu0 0
      %263 = vmatpush1.bf16.msra.mxu0 0
      %264 = vmatprep.subr.bf16.mxu0 0
      %265 = vmatpush1.bf16.msra.mxu0 0
      %266 = vmatprep.subr.bf16.mxu0 0
      %267 = vmatpush1.bf16.msra.mxu0 0
      %268 = vmatprep.subr.bf16.mxu0 0
      %269 = vmatpush1.bf16.msra.mxu0 0
      %270 = vmatprep.subr.bf16.mxu0 0
      %271 = vmatpush1.bf16.msra.mxu0 0
      %272 = vmatprep.subr.bf16.mxu0 0
      %273 = vmatpush1.bf16.msra.mxu0 0
      %274 = vmatprep.subr.bf16.mxu0 0
      %275 = vmatpush1.bf16.msra.mxu0 0
      %276 = vmatprep.subr.bf16.mxu0 0
      %277 = vmatpush1.bf16.msra.mxu0 0
      %278 = vmatprep.subr.bf16.mxu0 0
      %279 = vmatpush1.bf16.msra.mxu0 0
      %280 = vmatprep.subr.bf16.mxu0 0
      %281 = vmatpush1.bf16.msra.mxu0 0
      %282 = vmatprep.subr.bf16.mxu0 0
      %283 = vmatpush1.bf16.msra.mxu0 0
      %284 = vmatprep.subr.bf16.mxu0 0
      %285 = vmatpush1.bf16.msra.mxu0 0
      %286 = vmatprep.subr.bf16.mxu0 0
      %287 = vmatpush1.bf16.msra.mxu0 0
      %288 = vmatprep.mubr.bf16.mxu0 0
      %289 = vmatmul.mubr.bf16.gmra.mrb[0].mxu0 %v254
      %v290 = vpop.f32.mrb[0].mxu0
      %v291 = vadd.f32 0.0, %v290
      %v292 = vpop.f32.mrb[0].mxu0
      %v293 = vpop.f32.mrb[0].mxu0
      %v294 = vpop.f32.mrb[0].mxu0
      %295 = vdwg.mxu0
      %v296 = vpack.c.bf16 %v291, %v291
      %vm297 = vcmask 130048
      %v299 = vsel %vm297, %v245, 0
      %v302 = vsel %vm297, %v296, 0
      %304 = vmatprep.subr.bf16.mxu0 0
      %305 = vmatpush1.bf16.xpose.msra.mxu0 %v302
      %306 = vmatprep.subr.bf16.mxu0 0
      %307 = vmatpush1.bf16.xpose.msra.mxu0 0
      %308 = vmatprep.subr.bf16.mxu0 0
      %309 = vmatpush1.bf16.xpose.msra.mxu0 0
      %310 = vmatprep.subr.bf16.mxu0 0
      %311 = vmatpush1.bf16.xpose.msra.mxu0 0
      %312 = vmatprep.subr.bf16.mxu0 0
      %313 = vmatpush1.bf16.xpose.msra.mxu0 0
      %314 = vmatprep.subr.bf16.mxu0 0
      %315 = vmatpush1.bf16.xpose.msra.mxu0 0
      %316 = vmatprep.subr.bf16.mxu0 0
      %317 = vmatpush1.bf16.xpose.msra.mxu0 0
      %318 = vmatprep.subr.bf16.mxu0 0
      %319 = vmatpush1.bf16.xpose.msra.mxu0 0
      %320 = vmatprep.subr.bf16.mxu0 0
      %321 = vmatpush1.bf16.xpose.msra.mxu0 0
      %322 = vmatprep.subr.bf16.mxu0 0
      %323 = vmatpush1.bf16.xpose.msra.mxu0 0
      %324 = vmatprep.subr.bf16.mxu0 0
      %325 = vmatpush1.bf16.xpose.msra.mxu0 0
      %326 = vmatprep.subr.bf16.mxu0 0
      %327 = vmatpush1.bf16.xpose.msra.mxu0 0
      %328 = vmatprep.subr.bf16.mxu0 0
      %329 = vmatpush1.bf16.xpose.msra.mxu0 0
      %330 = vmatprep.subr.bf16.mxu0 0
      %331 = vmatpush1.bf16.xpose.msra.mxu0 0
      %332 = vmatprep.subr.bf16.mxu0 0
      %333 = vmatpush1.bf16.xpose.msra.mxu0 0
      %334 = vmatprep.subr.bf16.mxu0 0
      %335 = vmatpush1.bf16.xpose.msra.mxu0 0
      %336 = vmatprep.mubr.bf16.mxu0 0
      %337 = vmatmul.mubr.bf16.gmra.mrb[0].mxu0 %v299
      %v338 = vpop.f32.mrb[0].mxu0
      %v339 = vadd.f32 0.0, %v338
      %v340 = vpop.f32.mrb[0].mxu0
      %v341 = vpop.f32.mrb[0].mxu0
      %v342 = vpop.f32.mrb[0].mxu0
      %343 = vdwg.mxu0
      %v344 = vmul.f32 %v339, 0.25
      %vm345 = vcmask 64512
      %v346 = vsel %vm345, %v344, -inf
      %347 = vmax.xlane.f32.xlu0 %v346
      %v348 = vpop.xlane.xlu0 %347
      %v349 = vsub.f32 %v344, %v348
      %v350 = vmul.f32 %v349, 1.442695
      %v351 = vpow.pop %v350
      %v352 = vsel %vm345, %v351, 0.0
      %353 = vadd.xlane.f32.xlu0 %v352
      %v354 = vpop.xlane.xlu0 %353
      %v355 = vrcp.pop %v354
      %v356 = vmul.f32 %v351, %v355
      %v357 = vpack.c.bf16 %v356, %v356
      %359 = vrot.lane.b32.xlu0 %v296, 96
      %v360 = vpop.permute.xlu0 %359
      %v362 = vsel %vm345, %v357, 0
      %vm364 = vcmask 1043456
      %v366 = vsel %vm364, %v360, 0
      %368 = vmatprep.subr.bf16.mxu0 0
      %369 = vmatpush1.bf16.msra.mxu0 %v366
      %370 = vmatprep.subr.bf16.mxu0 0
      %371 = vmatpush1.bf16.msra.mxu0 0
      %372 = vmatprep.subr.bf16.mxu0 0
      %373 = vmatpush1.bf16.msra.mxu0 0
      %374 = vmatprep.subr.bf16.mxu0 0
      %375 = vmatpush1.bf16.msra.mxu0 0
      %376 = vmatprep.subr.bf16.mxu0 0
      %377 = vmatpush1.bf16.msra.mxu0 0
      %378 = vmatprep.subr.bf16.mxu0 0
      %379 = vmatpush1.bf16.msra.mxu0 0
      %380 = vmatprep.subr.bf16.mxu0 0
      %381 = vmatpush1.bf16.msra.mxu0 0
      %382 = vmatprep.subr.bf16.mxu0 0
      %383 = vmatpush1.bf16.msra.mxu0 0
      %384 = vmatprep.subr.bf16.mxu0 0
      %385 = vmatpush1.bf16.msra.mxu0 0
      %386 = vmatprep.subr.bf16.mxu0 0
      %387 = vmatpush1.bf16.msra.mxu0 0
      %388 = vmatprep.subr.bf16.mxu0 0
      %389 = vmatpush1.bf16.msra.mxu0 0
      %390 = vmatprep.subr.bf16.mxu0 0
      %391 = vmatpush1.bf16.msra.mxu0 0
      %392 = vmatprep.subr.bf16.mxu0 0
      %393 = vmatpush1.bf16.msra.mxu0 0
      %394 = vmatprep.subr.bf16.mxu0 0
      %395 = vmatpush1.bf16.msra.mxu0 0
      %396 = vmatprep.subr.bf16.mxu0 0
      %397 = vmatpush1.bf16.msra.mxu0 0
      %398 = vmatprep.subr.bf16.mxu0 0
      %399 = vmatpush1.bf16.msra.mxu0 0
      %400 = vmatprep.mubr.bf16.mxu0 0
      %401 = vmatmul.mubr.bf16.gmra.mrb[0].mxu0 %v362
      %v402 = vpop.f32.mrb[0].mxu0
      %v403 = vadd.f32 0.0, %v402
      %v404 = vpop.f32.mrb[0].mxu0
      %v405 = vpop.f32.mrb[0].mxu0
      %v406 = vpop.f32.mrb[0].mxu0
      %407 = vdwg.mxu0
      %v408 = vpack.c.bf16 %v403, %v403
      %vm409 = vcmask 125952
      %410 = vst.msk [vmem:[%s182] sm:$0xf] %vm409, %v408
      %412 = vrot.lane.b32.xlu0 %v245, 112
      %v413 = vpop.permute.xlu0 %412
      %414 = vrot.lane.b32.xlu0 %v296, 112
      %v415 = vpop.permute.xlu0 %414
      %v417 = vsel %vm297, %v413, 0
      %v420 = vsel %vm297, %v415, 0
      %422 = vmatprep.subr.bf16.mxu0 0
      %423 = vmatpush1.bf16.xpose.msra.mxu0 %v420
      %424 = vmatprep.subr.bf16.mxu0 0
      %425 = vmatpush1.bf16.xpose.msra.mxu0 0
      %426 = vmatprep.subr.bf16.mxu0 0
      %427 = vmatpush1.bf16.xpose.msra.mxu0 0
      %428 = vmatprep.subr.bf16.mxu0 0
      %429 = vmatpush1.bf16.xpose.msra.mxu0 0
      %430 = vmatprep.subr.bf16.mxu0 0
      %431 = vmatpush1.bf16.xpose.msra.mxu0 0
      %432 = vmatprep.subr.bf16.mxu0 0
      %433 = vmatpush1.bf16.xpose.msra.mxu0 0
      %434 = vmatprep.subr.bf16.mxu0 0
      %435 = vmatpush1.bf16.xpose.msra.mxu0 0
      %436 = vmatprep.subr.bf16.mxu0 0
      %437 = vmatpush1.bf16.xpose.msra.mxu0 0
      %438 = vmatprep.subr.bf16.mxu0 0
      %439 = vmatpush1.bf16.xpose.msra.mxu0 0
      %440 = vmatprep.subr.bf16.mxu0 0
      %441 = vmatpush1.bf16.xpose.msra.mxu0 0
      %442 = vmatprep.subr.bf16.mxu0 0
      %443 = vmatpush1.bf16.xpose.msra.mxu0 0
      %444 = vmatprep.subr.bf16.mxu0 0
      %445 = vmatpush1.bf16.xpose.msra.mxu0 0
      %446 = vmatprep.subr.bf16.mxu0 0
      %447 = vmatpush1.bf16.xpose.msra.mxu0 0
      %448 = vmatprep.subr.bf16.mxu0 0
      %449 = vmatpush1.bf16.xpose.msra.mxu0 0
      %450 = vmatprep.subr.bf16.mxu0 0
      %451 = vmatpush1.bf16.xpose.msra.mxu0 0
      %452 = vmatprep.subr.bf16.mxu0 0
      %453 = vmatpush1.bf16.xpose.msra.mxu0 0
      %454 = vmatprep.mubr.bf16.mxu0 0
      %455 = vmatmul.mubr.bf16.gmra.mrb[0].mxu0 %v417
      %v456 = vpop.f32.mrb[0].mxu0
      %v457 = vadd.f32 0.0, %v456
      %v458 = vpop.f32.mrb[0].mxu0
      %v459 = vpop.f32.mrb[0].mxu0
      %v460 = vpop.f32.mrb[0].mxu0
      %461 = vdwg.mxu0
      %v462 = vmul.f32 %v457, 0.25
      %v463 = vsel %vm345, %v462, -inf
      %464 = vmax.xlane.f32.xlu0 %v463
      %v465 = vpop.xlane.xlu0 %464
      %v466 = vsub.f32 %v462, %v465
      %v467 = vmul.f32 %v466, 1.442695
      %v468 = vpow.pop %v467
      %v469 = vsel %vm345, %v468, 0.0
      %470 = vadd.xlane.f32.xlu0 %v469
      %v471 = vpop.xlane.xlu0 %470
      %v472 = vrcp.pop %v471
      %v473 = vmul.f32 %v468, %v472
      %v474 = vpack.c.bf16 %v473, %v473
      %475 = vrot.lane.b32.xlu0 %v296, 80
      %v476 = vpop.permute.xlu0 %475
      %v478 = vsel %vm345, %v474, 0
      %v481 = vsel %vm364, %v476, 0
      %483 = vmatprep.subr.bf16.mxu0 0
      %484 = vmatpush1.bf16.msra.mxu0 %v481
      %485 = vmatprep.subr.bf16.mxu0 0
      %486 = vmatpush1.bf16.msra.mxu0 0
      %487 = vmatprep.subr.bf16.mxu0 0
      %488 = vmatpush1.bf16.msra.mxu0 0
      %489 = vmatprep.subr.bf16.mxu0 0
      %490 = vmatpush1.bf16.msra.mxu0 0
      %491 = vmatprep.subr.bf16.mxu0 0
      %492 = vmatpush1.bf16.msra.mxu0 0
      %493 = vmatprep.subr.bf16.mxu0 0
      %494 = vmatpush1.bf16.msra.mxu0 0
      %495 = vmatprep.subr.bf16.mxu0 0
      %496 = vmatpush1.bf16.msra.mxu0 0
      %497 = vmatprep.subr.bf16.mxu0 0
      %498 = vmatpush1.bf16.msra.mxu0 0
      %499 = vmatprep.subr.bf16.mxu0 0
      %500 = vmatpush1.bf16.msra.mxu0 0
      %501 = vmatprep.subr.bf16.mxu0 0
      %502 = vmatpush1.bf16.msra.mxu0 0
      %503 = vmatprep.subr.bf16.mxu0 0
      %504 = vmatpush1.bf16.msra.mxu0 0
      %505 = vmatprep.subr.bf16.mxu0 0
      %506 = vmatpush1.bf16.msra.mxu0 0
      %507 = vmatprep.subr.bf16.mxu0 0
      %508 = vmatpush1.bf16.msra.mxu0 0
      %509 = vmatprep.subr.bf16.mxu0 0
      %510 = vmatpush1.bf16.msra.mxu0 0
      %511 = vmatprep.subr.bf16.mxu0 0
      %512 = vmatpush1.bf16.msra.mxu0 0
      %513 = vmatprep.subr.bf16.mxu0 0
      %514 = vmatpush1.bf16.msra.mxu0 0
      %515 = vmatprep.mubr.bf16.mxu0 0
      %516 = vmatmul.mubr.bf16.gmra.mrb[0].mxu0 %v478
      %v517 = vpop.f32.mrb[0].mxu0
      %v518 = vadd.f32 0.0, %v517
      %v519 = vpop.f32.mrb[0].mxu0
      %v520 = vpop.f32.mrb[0].mxu0
      %v521 = vpop.f32.mrb[0].mxu0
      %522 = vdwg.mxu0
      %v523 = vpack.c.bf16 %v518, %v518
      %v525 = vunpack.c.l.b16 %v523
      %v526 = vpack.c.b16 %v525, %v525
      %527 = vrot.lane.b32.xlu0 %v526, 16
      %v528 = vpop.permute.xlu0 %527
      %vm530 = vcmask 257152
      %531 = vst.msk [vmem:[%s182] sm:$0xf] %vm530, %v528
      %p532 = scmp.lt.s32.totalorder %s14, 1
      %s533 = scalar_select %p532, %s14, 1
      %s534 = smul.addr %s533, 4
      %s535 = scalar_lea.vmem %s3, %s534
      // Predicated region
      $region33: #{transformer_forward.31} parent=31 // pred_check
        %p536 = pneg %p105
      $region34: #{transformer_forward.31} parent=31 // pred_check_branch
        %538 = sbr.rel (%p536) target = $region36
      $region35: #{transformer_forward.31} parent=31 // pred_region
        _
      $region36: #{transformer_forward.31} parent=31 // pred_fallthru
        _
    $region32: #{transformer_forward.31} parent=5 // pred_fallthru
      _
    %p539 = scmp.le.s32.totalorder 2, %s9
    // Predicated region
    $region37: #{transformer_forward.31} parent=5 // pred_check
      %p540 = pneg %p539
    $region38: #{transformer_forward.31} parent=5 // pred_check_branch
      %542 = sbr.rel (%p540) target = $region40
    $region39: #{transformer_forward.31} parent=5 // pred_region
      %s543 = ssub.s32 %s9, 2
      // Predicated region
      $region41: #{transformer_forward.31} parent=39 // pred_check
        %p544 = pneg %p111
      $region42: #{transformer_forward.31} parent=39 // pred_check_branch
        %546 = sbr.rel (%p544) target = $region44
      $region43: #{transformer_forward.31} parent=39 // pred_region
        %p547 = scmp.lt.s32.totalorder %s15, 1
        %s548 = scalar_select %p547, %s15, 1
        %s549 = smul.addr %s548, 4
        %s550 = scalar_lea.vmem %s3, %s549
      $region44: #{transformer_forward.31} parent=39 // pred_fallthru
        _
    $region40: #{transformer_forward.31} parent=5 // pred_fallthru
      _
  $region6: #{transformer_forward.31} parent=0 // loop_footer
    %s13 = sadd.s32 1, %s9
  $region7: #{transformer_forward.31} parent=0 // loop_footer_branch
    %8 = sbr.rel target = $region3
  $region8: #{transformer_forward.31} parent=0 // loop_exit
    _

// kernel: transformer_forward.41
$region0: #{transformer_forward.41}
  #allocation0 [shape = 'u32[]', space=smem, size = 0x4, offset = 0x4, fixed_abs, tag = 'smem constant byte address 0x4 - core index']
  #allocation1 [shape = 'u32[144,128]{1,0:T(1,128)}', space=vmem, size = 0x12000, scoped, tag = 'internal scratch']
  #allocation2 [shape = 'f32[16,16]{1,0:T(8,128)}', space=vmem, size = 0x2000, scoped, tag = 'scratch operand']
  %s0 = inlined_call_operand.vmem [shape: bf16[16,32], index: 0, kind: input, shape index: {}]
  %s1 = inlined_call_operand.vmem [shape: bf16[32,16], index: 1, kind: input, shape index: {}]
  %s2 = inlined_call_operand.vmem [shape: f32[1,16], index: 2, kind: input, shape index: {}]
  %s3 = inlined_call_operand.hbm [shape: f32[16,16], index: 3, kind: output, shape index: {}]
  %s4 = sld [smem:[#allocation0]]
  $region30: #{transformer_forward.41} parent=0
    _
  %s6 = ssub.s32 1, %s4
  %s7 = scalar_select 0, %s6, %s4
  $region1: #{transformer_forward.41} parent=0
    #allocation3 [shape = 'u8[8192]{0}', space=vmem, size = 0x2000, scoped, tag = 'output window, operand 0, single buffered']
    #allocation4 [shape = 's32[1]{0}', space=sflag, size = 0x4, scoped, tag = 'scoped memory for transformer_forward.41']
    %8 = vsyncpa [#allocation4], 0
    // Predicated region
    $region2: #{transformer_forward.41} parent=1 // pred_check
      _
    $region3: #{transformer_forward.41} parent=1 // pred_check_branch
      %10 = sbr.rel (0) target = $region5
    $region4: #{transformer_forward.41} parent=1 // pred_region
      _
    $region5: #{transformer_forward.41} parent=1 // pred_fallthru
      _
    // Predicated region
    $region6: #{transformer_forward.41} parent=1 // pred_check
      _
    $region7: #{transformer_forward.41} parent=1 // pred_check_branch
      %12 = sbr.rel (0) target = $region9
    $region8: #{transformer_forward.41} parent=1 // pred_region
      _
    $region9: #{transformer_forward.41} parent=1 // pred_fallthru
      _
    // Predicated region
    $region10: #{transformer_forward.41} parent=1 // pred_check
      _
    $region11: #{transformer_forward.41} parent=1 // pred_check_branch
      %14 = sbr.rel (0) target = $region13
    $region12: #{transformer_forward.41} parent=1 // pred_region
      _
    $region13: #{transformer_forward.41} parent=1 // pred_fallthru
      _
    %p16 = scmp.eq.s32.totalorder 0, 0
    // Predicated region
    $region14: #{transformer_forward.41} parent=1 // pred_check
      %p17 = pneg %p16
    $region15: #{transformer_forward.41} parent=1 // pred_check_branch
      %19 = sbr.rel (%p17) target = $region17
    $region16: #{transformer_forward.41} parent=1 // pred_region
      %vm20 = vcmask 130048
      %21 = vst.msk [vmem:[#allocation2] sm:$0xff] %vm20, 0.0
      %22 = vst.msk [vmem:[#allocation2 + $0x8] sm:$0xff] %vm20, 0.0
    $region17: #{transformer_forward.41} parent=1 // pred_fallthru
      _
    %v23 = vld [vmem:[#allocation2] sm:$0xff]
    %v24 = vld [vmem:[#allocation2 + $0x8] sm:$0xff]
    %v25 = vld [vmem:[%s0] sm:$0xf]
    %v26 = vld [vmem:[%s0 + $0x4] sm:$0xf]
    %v27 = vld [vmem:[%s1] sm:$0xf]
    %v28 = vld [vmem:[%s1 + $0x4] sm:$0xf]
    %v29 = vld [vmem:[%s1 + $0x8] sm:$0xf]
    %v30 = vld [vmem:[%s1 + $0xc] sm:$0xf]
    %v33 = vunpack.c.l.b16 %v25
    %v34 = vunpack.c.l.b16 %v26
    %v35 = vpack.c.b16 %v34, %v33
    %v40 = vunpack.c.l.b16 %v27
    %v41 = vunpack.c.l.b16 %v28
    %v42 = vunpack.c.l.b16 %v29
    %v43 = vunpack.c.l.b16 %v30
    %v44 = vpack.c.b16 %v41, %v40
    %v45 = vpack.c.b16 %v43, %v42
    %vm48 = vcmask 261120
    %v50 = vsel %vm48, %v35, 0
    %52 = vmatprep.subr.bf16.mxu0 0
    %53 = vmatpush1.bf16.msra.mxu0 %v44
    %54 = vmatprep.subr.bf16.mxu0 0
    %55 = vmatpush1.bf16.msra.mxu0 %v45
    %56 = vmatprep.subr.bf16.mxu0 0
    %57 = vmatpush1.bf16.msra.mxu0 0
    %58 = vmatprep.subr.bf16.mxu0 0
    %59 = vmatpush1.bf16.msra.mxu0 0
    %60 = vmatprep.subr.bf16.mxu0 0
    %61 = vmatpush1.bf16.msra.mxu0 0
    %62 = vmatprep.subr.bf16.mxu0 0
    %63 = vmatpush1.bf16.msra.mxu0 0
    %64 = vmatprep.subr.bf16.mxu0 0
    %65 = vmatpush1.bf16.msra.mxu0 0
    %66 = vmatprep.subr.bf16.mxu0 0
    %67 = vmatpush1.bf16.msra.mxu0 0
    %68 = vmatprep.subr.bf16.mxu0 0
    %69 = vmatpush1.bf16.msra.mxu0 0
    %70 = vmatprep.subr.bf16.mxu0 0
    %71 = vmatpush1.bf16.msra.mxu0 0
    %72 = vmatprep.subr.bf16.mxu0 0
    %73 = vmatpush1.bf16.msra.mxu0 0
    %74 = vmatprep.subr.bf16.mxu0 0
    %75 = vmatpush1.bf16.msra.mxu0 0
    %76 = vmatprep.subr.bf16.mxu0 0
    %77 = vmatpush1.bf16.msra.mxu0 0
    %78 = vmatprep.subr.bf16.mxu0 0
    %79 = vmatpush1.bf16.msra.mxu0 0
    %80 = vmatprep.subr.bf16.mxu0 0
    %81 = vmatpush1.bf16.msra.mxu0 0
    %82 = vmatprep.subr.bf16.mxu0 0
    %83 = vmatpush1.bf16.msra.mxu0 0
    %84 = vmatprep.mubr.bf16.mxu0 0
    %85 = vmatmul.mubr.bf16.gmra.mrb[0].mxu0 %v50
    %v86 = vpop.f32.mrb[0].mxu0
    %v87 = vadd.f32 0.0, %v86
    %v88 = vpop.f32.mrb[0].mxu0
    %v89 = vpop.f32.mrb[0].mxu0
    %v90 = vadd.f32 0.0, %v89
    %v91 = vpop.f32.mrb[0].mxu0
    %92 = vdwg.mxu0
    %v93 = vadd.f32 %v23, %v87
    %v94 = vadd.f32 %v24, %v90
    %vm95 = vcmask 130048
    %96 = vst.msk [vmem:[#allocation2] sm:$0xff] %vm95, %v93
    %97 = vst.msk [vmem:[#allocation2 + $0x8] sm:$0xff] %vm95, %v94
    // Predicated region
    $region18: #{transformer_forward.41} parent=1 // pred_check
      %p98 = pneg %p16
    $region19: #{transformer_forward.41} parent=1 // pred_check_branch
      %100 = sbr.rel (%p98) target = $region21
    $region20: #{transformer_forward.41} parent=1 // pred_region
      %v101 = vld [vmem:[#allocation2] sm:$0xff]
      %v102 = vld [vmem:[#allocation2 + $0x8] sm:$0xff]
      %v103 = vld [vmem:[%s2] sm:$0x1]
      %v105 = vlaneseq
      %v106 = vshrl.u32 %v105, 7
      %v107 = vsub.s32 0, %v106
      %v108 = vrot.slane %v103, %v107
      %v110 = vadd.f32 %v101, %v108
      %v111 = vadd.f32 %v102, %v108
      %112 = vst.msk [vmem:[#allocation3] sm:$0xff] %vm95, %v110
      %113 = vst.msk [vmem:[#allocation3 + $0x8] sm:$0xff] %vm95, %v111
    $region21: #{transformer_forward.41} parent=1 // pred_fallthru
      _
    // Predicated region
    $region22: #{transformer_forward.41} parent=1 // pred_check
      _
    $region23: #{transformer_forward.41} parent=1 // pred_check_branch
      %115 = sbr.rel (0) target = $region25
    $region24: #{transformer_forward.41} parent=1 // pred_region
      %s117 = ssub.s32 256, 256
      %118 = vsyncadd [#allocation4], %s117
      %s119 = sshll.u32 [#allocation3], 4
      %s120 = int_to_ptr.vmem [resolvable:$true] %s119
      %125 = dma.vmem_to_hbm [thread:$0]  %s120, 256, %s3, [#allocation4], 128, 128, 8
    $region25: #{transformer_forward.41} parent=1 // pred_fallthru
      _
    // Predicated region
    $region26: #{transformer_forward.41} parent=1 // pred_check
      _
    $region27: #{transformer_forward.41} parent=1 // pred_check_branch
      %127 = sbr.rel (0) target = $region29
    $region28: #{transformer_forward.41} parent=1 // pred_region
      %128 = dma.done [#allocation4], 256
    $region29: #{transformer_forward.41} parent=1 // pred_fallthru
      _
    %129 = vsyncpa [#allocation4], 1

</llo_original>
